<compile_context>
chip_gen: v7x
topology: tpu7x:2x2x1
jax: 0.10.0
libtpu: 0.0.40
codegen_flags: <defaults>
</compile_context>

<pallas_src>
import jax
import jax.numpy as jnp
from jax import lax
from jax.experimental import pallas as pl
from jax.experimental.pallas import tpu as pltpu

# ---------------- model hyper-parameters (small, consistent with the module) ----------
BATCH = 2            # args.batch_size
SAMPLE_NUM = 2       # args.sample_num
CLICKED_NUM = 4      # args.user_clicked_new_num
TITLE_WORDS = 8      # args.title_word_size
WORD_DIM = 16        # args.word_embedding_dim
ENTITY_DIM = 16      # args.entity_embedding_dim
CATE_SIZE = 10       # args.entity_cate_size
CATE_EMB_DIM = 16

TITLE_DIM = 160      # nn.LayerNorm(160)
HIDDEN = 100         # user_encoder.hidden_size
KWIN = 3             # conv window
FW = 64              # word-conv filters
FE = 64              # entity-conv filters
FC = 32              # category projection   (FW + FE + FC == TITLE_DIM)
LN_EPS = 1e-5

TW = TITLE_WORDS - KWIN + 1                                   # 6 conv output positions
IM2COL_DIM = KWIN * (WORD_DIM + ENTITY_DIM) + CATE_EMB_DIM    # 112 contraction lanes


# ====================== fused DAN forward kernel ======================================
def dan_kernel(xc_ref, xu_ref,
               wpc_ref, bpc_ref, lngc_ref, lnbc_ref,
               wpu_ref, bpu_ref, lngu_ref, lnbu_ref,
               un1g_ref, un1b_ref,
               w1c_ref, w1n_ref, b1_ref, v_ref,
               wx_ref, wh_ref, barnn_ref,
               un2g_ref, un2b_ref,
               out_ref):
    f32 = jnp.float32

    def layernorm(x, g, b):
        mu = jnp.mean(x, axis=-1, keepdims=True)
        var = jnp.mean((x - mu) ** 2, axis=-1, keepdims=True)
        return (x - mu) * lax.rsqrt(var + LN_EPS) * g + b

    def softmax_lastdim(scores):
        m = jnp.max(scores, axis=-1, keepdims=True)
        e = jnp.exp(scores - m)
        return e * pl.reciprocal(jnp.sum(e, axis=-1, keepdims=True), approx=True)

    def pcnn(x_ref, w_ref, b_ref, g_ref, beta_ref, n):
        # one im2col matmul produces word-conv | entity-conv | category-proj columns
        # directly as a lane-dense [n*TW, 160] tile; then relu, window max-pool, LN.
        h = jnp.dot(x_ref[...], w_ref[...], preferred_element_type=f32) + b_ref[...]
        h = jnp.maximum(h, 0.0)
        pooled = jnp.max(h.reshape(n, TW, TITLE_DIM), axis=1)          # [n, 160]
        return layernorm(pooled, g_ref[...], beta_ref[...])

    # ---- news encoders: all news of the whole batch in one matmul each ----
    new_rep = pcnn(xc_ref, wpc_ref, bpc_ref, lngc_ref, lnbc_ref,
                   BATCH * SAMPLE_NUM)                                  # [B*S, 160]
    clicked = pcnn(xu_ref, wpu_ref, bpu_ref, lngu_ref, lnbu_ref,
                   BATCH * CLICKED_NUM)                                 # [B*N, 160]
    clicked = layernorm(clicked, un1g_ref[...], un1b_ref[...])          # user_encoder.norm1

    clk3 = clicked.reshape(BATCH, CLICKED_NUM, TITLE_DIM)

    # ---- ANN (interest attention) projections: batched over the whole batch ----
    hc = jnp.dot(new_rep, w1c_ref[...],
                 preferred_element_type=f32).reshape(BATCH, SAMPLE_NUM, HIDDEN)
    hn = jnp.dot(clicked, w1n_ref[...],
                 preferred_element_type=f32).reshape(BATCH, CLICKED_NUM, HIDDEN)
    b1 = b1_ref[...]
    v = v_ref[...]

    # ---- ARNN: input projection hoisted; recurrence batched over B, unrolled ----
    xw = (jnp.dot(clicked, wx_ref[...], preferred_element_type=f32)
          + barnn_ref[...]).reshape(BATCH, CLICKED_NUM, TITLE_DIM)
    wh = wh_ref[...]
    h = jnp.zeros((BATCH, TITLE_DIM), f32)
    hs = []                                                   # hidden states stay in vregs
    for t in range(CLICKED_NUM):                              # static unroll, N=4
        h = jnp.tanh(xw[:, t, :] + jnp.dot(h, wh, preferred_element_type=f32))
        hs.append(h)                                          # [B, 160] each

    # ---- per-batch ANN attention + ARNN attention + norm2 (single unrolled loop) ----
    un2g = un2g_ref[...]
    un2b = un2b_ref[...]
    user_rows = []
    for b in range(BATCH):                                    # static unroll, B=2
        # ANN interest attention
        hmat = jnp.tanh(hc[b][:, None, :] + hn[b][None, :, :] + b1)     # [S, N, H]
        att_i = softmax_lastdim(jnp.sum(hmat * v, axis=-1))             # [S, N]
        interest_b = jnp.dot(att_i, clk3[b], preferred_element_type=f32)  # [S, 160]

        # ARNN history attention over the RNN hidden states of this batch element
        hb = jnp.concatenate([hs[t][b:b + 1, :] for t in range(CLICKED_NUM)],
                             axis=0)                                    # [N, 160]
        scores = lax.dot_general(interest_b, hb, (((1,), (1,)), ((), ())),
                                 preferred_element_type=f32)            # [S, N]
        att_h = softmax_lastdim(scores)
        hist = jnp.dot(att_h, hb, preferred_element_type=f32)           # [S, 160]
        user_rows.append(layernorm(hist, un2g, un2b))

    user_rep = jnp.concatenate(user_rows, axis=0)                       # [B*S, 160]

    # ---- cosine similarity (exact divide kept for score precision) ----
    dotp = jnp.sum(new_rep * user_rep, axis=-1, keepdims=True)
    na = jnp.sqrt(jnp.sum(new_rep * new_rep, axis=-1, keepdims=True))
    nb = jnp.sqrt(jnp.sum(user_rep * user_rep, axis=-1, keepdims=True))
    out_ref[...] = dotp / jnp.maximum(na * nb, 1e-8)                    # [B*S, 1]


# ====================== host-side layout plumbing =====================================
def _im2col(word, ent, cate_emb):
    """[n,T,Dw],[n,T,De],[n,16] -> [n*TW, 112] rows = [w_k0,w_k1,w_k2,e_k0,e_k1,e_k2,c]."""
    n = word.shape[0]
    parts = ([word[:, k:k + TW, :] for k in range(KWIN)]
             + [ent[:, k:k + TW, :] for k in range(KWIN)]
             + [jnp.broadcast_to(cate_emb[:, None, :], (n, TW, CATE_EMB_DIM))])
    x = jnp.concatenate(parts, axis=-1)                     # [n, TW, 112]
    return x.reshape(n * TW, IM2COL_DIM)


def _fuse_pcnn_weight(p):
    """Block-diagonal [112,160] weight + [1,160] bias for the fused PCNN matmul."""
    W = jnp.zeros((IM2COL_DIM, TITLE_DIM), jnp.float32)
    kw = KWIN * WORD_DIM
    ke = KWIN * ENTITY_DIM
    W = W.at[0:kw, 0:FW].set(p["Ww"].reshape(kw, FW))
    W = W.at[kw:kw + ke, FW:FW + FE].set(p["We"].reshape(ke, FE))
    W = W.at[kw + ke:, FW + FE:].set(p["Wc"])
    b = jnp.concatenate([p["bw"], p["be"], p["bc"]], axis=-1)           # [1, 160]
    return W, b


# ====================== parameter init ================================================
def init_params(key):
    ks = iter(jax.random.split(key, 40))

    def nrm(shape, s=0.1):
        return (s * jax.random.normal(next(ks), shape)).astype(jnp.float32)

    def pcnn_params():
        return dict(
            cate_table=nrm((CATE_SIZE, CATE_EMB_DIM)),
            Ww=nrm((KWIN, WORD_DIM, FW)), bw=jnp.zeros((1, FW), jnp.float32),
            We=nrm((KWIN, ENTITY_DIM, FE)), be=jnp.zeros((1, FE), jnp.float32),
            Wc=nrm((CATE_EMB_DIM, FC)), bc=jnp.zeros((1, FC), jnp.float32),
            ln_g=jnp.ones((1, TITLE_DIM), jnp.float32),
            ln_b=jnp.zeros((1, TITLE_DIM), jnp.float32),
        )

    return dict(
        cand_pcnn=pcnn_params(),                       # DAN.new_encoder
        user_pcnn=pcnn_params(),                       # user_encoder.new_encoder
        user_norm1_g=jnp.ones((1, TITLE_DIM), jnp.float32),
        user_norm1_b=jnp.zeros((1, TITLE_DIM), jnp.float32),
        ann=dict(W1c=nrm((TITLE_DIM, HIDDEN)), W1n=nrm((TITLE_DIM, HIDDEN)),
                 b1=jnp.zeros((1, HIDDEN), jnp.float32), v=nrm((1, HIDDEN))),
        arnn=dict(Wx=nrm((TITLE_DIM, TITLE_DIM)), Wh=nrm((TITLE_DIM, TITLE_DIM)),
                  b=jnp.zeros((1, TITLE_DIM), jnp.float32)),
        user_norm2_g=jnp.ones((1, TITLE_DIM), jnp.float32),
        user_norm2_b=jnp.zeros((1, TITLE_DIM), jnp.float32),
    )


# ====================== full DAN forward (single pallas_call) =========================
@jax.jit
def dan_forward(params,
                cand_word, user_word, cand_ent, user_ent, cand_cate, user_cate):
    B, S = cand_word.shape[0], cand_word.shape[1]
    N = user_word.shape[1]

    # gather + im2col layout prep (pure layout plumbing, fused by XLA in the wrapper)
    cand_cemb = jnp.take(params["cand_pcnn"]["cate_table"],
                         cand_cate.reshape(B * S), axis=0)
    user_cemb = jnp.take(params["user_pcnn"]["cate_table"],
                         user_cate.reshape(B * N), axis=0)
    xc = _im2col(cand_word.reshape(B * S, TITLE_WORDS, WORD_DIM),
                 cand_ent.reshape(B * S, TITLE_WORDS, ENTITY_DIM), cand_cemb)
    xu = _im2col(user_word.reshape(B * N, TITLE_WORDS, WORD_DIM),
                 user_ent.reshape(B * N, TITLE_WORDS, ENTITY_DIM), user_cemb)

    wpc, bpc = _fuse_pcnn_weight(params["cand_pcnn"])
    wpu, bpu = _fuse_pcnn_weight(params["user_pcnn"])

    vmem = pl.BlockSpec(memory_space=pltpu.MemorySpace.VMEM)
    score = pl.pallas_call(
        dan_kernel,
        out_shape=jax.ShapeDtypeStruct((B * S, 1), jnp.float32),
        in_specs=[vmem] * 21,
        out_specs=vmem,
    )(xc, xu,
      wpc, bpc, params["cand_pcnn"]["ln_g"], params["cand_pcnn"]["ln_b"],
      wpu, bpu, params["user_pcnn"]["ln_g"], params["user_pcnn"]["ln_b"],
      params["user_norm1_g"], params["user_norm1_b"],
      params["ann"]["W1c"], params["ann"]["W1n"], params["ann"]["b1"], params["ann"]["v"],
      params["arnn"]["Wx"], params["arnn"]["Wh"], params["arnn"]["b"],
      params["user_norm2_g"], params["user_norm2_b"])

    return score.reshape(B, S)


# ====================== main ==========================================================
if __name__ == "__main__":
    key = jax.random.PRNGKey(0)
    kp, k1, k2, k3, k4, k5, k6 = jax.random.split(key, 7)

    params = init_params(kp)

    cand_word = jax.random.normal(k1, (BATCH, SAMPLE_NUM, TITLE_WORDS, WORD_DIM),
                                  dtype=jnp.float32)
    user_word = jax.random.normal(k2, (BATCH, CLICKED_NUM, TITLE_WORDS, WORD_DIM),
                                  dtype=jnp.float32)
    cand_ent = jax.random.normal(k3, (BATCH, SAMPLE_NUM, TITLE_WORDS, ENTITY_DIM),
                                 dtype=jnp.float32)
    user_ent = jax.random.normal(k4, (BATCH, CLICKED_NUM, TITLE_WORDS, ENTITY_DIM),
                                 dtype=jnp.float32)
    cand_cate = jax.random.randint(k5, (BATCH, SAMPLE_NUM), 0, CATE_SIZE, dtype=jnp.int32)
    user_cate = jax.random.randint(k6, (BATCH, CLICKED_NUM), 0, CATE_SIZE, dtype=jnp.int32)

    score = dan_forward(params, cand_word, user_word, cand_ent, user_ent,
                        cand_cate, user_cate)
    score = jax.block_until_ready(score)
    assert score.shape == (BATCH, SAMPLE_NUM)
    assert bool(jnp.all(jnp.isfinite(score)))
    print("KERNEL_OK")
</pallas_src>

<mosaic_0001>
module attributes {stable_mosaic.version = 11 : i64} {
  func.func @dan_kernel(%arg0: memref<24x112xf32, #tpu.memory_space<vmem>>, %arg1: memref<48x112xf32, #tpu.memory_space<vmem>>, %arg2: memref<112x160xf32, #tpu.memory_space<vmem>>, %arg3: memref<1x160xf32, #tpu.memory_space<vmem>>, %arg4: memref<1x160xf32, #tpu.memory_space<vmem>>, %arg5: memref<1x160xf32, #tpu.memory_space<vmem>>, %arg6: memref<112x160xf32, #tpu.memory_space<vmem>>, %arg7: memref<1x160xf32, #tpu.memory_space<vmem>>, %arg8: memref<1x160xf32, #tpu.memory_space<vmem>>, %arg9: memref<1x160xf32, #tpu.memory_space<vmem>>, %arg10: memref<1x160xf32, #tpu.memory_space<vmem>>, %arg11: memref<1x160xf32, #tpu.memory_space<vmem>>, %arg12: memref<160x100xf32, #tpu.memory_space<vmem>>, %arg13: memref<160x100xf32, #tpu.memory_space<vmem>>, %arg14: memref<1x100xf32, #tpu.memory_space<vmem>>, %arg15: memref<1x100xf32, #tpu.memory_space<vmem>>, %arg16: memref<160x160xf32, #tpu.memory_space<vmem>>, %arg17: memref<160x160xf32, #tpu.memory_space<vmem>>, %arg18: memref<1x160xf32, #tpu.memory_space<vmem>>, %arg19: memref<1x160xf32, #tpu.memory_space<vmem>>, %arg20: memref<1x160xf32, #tpu.memory_space<vmem>>, %arg21: memref<4x1xf32, #tpu.memory_space<vmem>>) attributes {dimension_semantics = [], scalar_prefetch = 0 : i64, scratch_operands = 0 : i64, tpu.core_type = #tpu.core_type<tc>} {
    %c0 = arith.constant 0 : index
    %c0_0 = arith.constant 0 : index
    %0 = vector.load %arg0[%c0, %c0_0] : memref<24x112xf32, #tpu.memory_space<vmem>>, vector<24x112xf32>
    %c0_1 = arith.constant 0 : index
    %c0_2 = arith.constant 0 : index
    %1 = vector.load %arg2[%c0_1, %c0_2] : memref<112x160xf32, #tpu.memory_space<vmem>>, vector<112x160xf32>
    %cst = arith.constant dense<0.000000e+00> : vector<24x160xf32>
    %2 = tpu.matmul %0, %1, %cst {dimension_numbers = #tpu.dot_dimension_numbers<[1], [0], [0], [1], [0, 0, 1, 1], [], []>} : vector<24x112xf32>, vector<112x160xf32>, vector<24x160xf32> -> vector<24x160xf32>
    %c0_3 = arith.constant 0 : index
    %c0_4 = arith.constant 0 : index
    %3 = vector.load %arg3[%c0_3, %c0_4] : memref<1x160xf32, #tpu.memory_space<vmem>>, vector<1x160xf32>
    %4 = vector.broadcast %3 : vector<1x160xf32> to vector<24x160xf32>
    %5 = arith.addf %2, %4 : vector<24x160xf32>
    %cst_5 = arith.constant 0.000000e+00 : f32
    %6 = vector.broadcast %cst_5 : f32 to vector<24x160xf32>
    %7 = arith.maximumf %5, %6 : vector<24x160xf32>
    %8 = vector.shape_cast %7 : vector<24x160xf32> to vector<4x6x160xf32>
    %cst_6 = arith.constant dense<0xFF800000> : vector<4x160xf32>
    %9 = vector.multi_reduction <maximumf>, %8, %cst_6 [1] : vector<4x6x160xf32> to vector<4x160xf32>
    %c0_7 = arith.constant 0 : index
    %c0_8 = arith.constant 0 : index
    %10 = vector.load %arg4[%c0_7, %c0_8] : memref<1x160xf32, #tpu.memory_space<vmem>>, vector<1x160xf32>
    %c0_9 = arith.constant 0 : index
    %c0_10 = arith.constant 0 : index
    %11 = vector.load %arg5[%c0_9, %c0_10] : memref<1x160xf32, #tpu.memory_space<vmem>>, vector<1x160xf32>
    %cst_11 = arith.constant dense<0.000000e+00> : vector<4xf32>
    %12 = vector.multi_reduction <add>, %9, %cst_11 [1] : vector<4x160xf32> to vector<4xf32>
    %13 = vector.shape_cast %12 : vector<4xf32> to vector<4x1xf32>
    %cst_12 = arith.constant 1.600000e+02 : f32
    %14 = vector.broadcast %cst_12 : f32 to vector<4x1xf32>
    %15 = arith.divf %13, %14 : vector<4x1xf32>
    %16 = vector.broadcast %15 : vector<4x1xf32> to vector<4x160xf32>
    %17 = arith.subf %9, %16 : vector<4x160xf32>
    %18 = arith.mulf %17, %17 : vector<4x160xf32>
    %cst_13 = arith.constant dense<0.000000e+00> : vector<4xf32>
    %19 = vector.multi_reduction <add>, %18, %cst_13 [1] : vector<4x160xf32> to vector<4xf32>
    %20 = vector.shape_cast %19 : vector<4xf32> to vector<4x1xf32>
    %cst_14 = arith.constant 1.600000e+02 : f32
    %21 = vector.broadcast %cst_14 : f32 to vector<4x1xf32>
    %22 = arith.divf %20, %21 : vector<4x1xf32>
    %23 = vector.broadcast %15 : vector<4x1xf32> to vector<4x160xf32>
    %24 = arith.subf %9, %23 : vector<4x160xf32>
    %cst_15 = arith.constant 9.99999974E-6 : f32
    %25 = vector.broadcast %cst_15 : f32 to vector<4x1xf32>
    %26 = arith.addf %22, %25 : vector<4x1xf32>
    %27 = math.rsqrt %26 : vector<4x1xf32>
    %28 = vector.broadcast %27 : vector<4x1xf32> to vector<4x160xf32>
    %29 = arith.mulf %24, %28 : vector<4x160xf32>
    %30 = vector.broadcast %10 : vector<1x160xf32> to vector<4x160xf32>
    %31 = arith.mulf %29, %30 : vector<4x160xf32>
    %32 = vector.broadcast %11 : vector<1x160xf32> to vector<4x160xf32>
    %33 = arith.addf %31, %32 : vector<4x160xf32>
    %c0_16 = arith.constant 0 : index
    %c0_17 = arith.constant 0 : index
    %34 = vector.load %arg1[%c0_16, %c0_17] : memref<48x112xf32, #tpu.memory_space<vmem>>, vector<48x112xf32>
    %c0_18 = arith.constant 0 : index
    %c0_19 = arith.constant 0 : index
    %35 = vector.load %arg6[%c0_18, %c0_19] : memref<112x160xf32, #tpu.memory_space<vmem>>, vector<112x160xf32>
    %cst_20 = arith.constant dense<0.000000e+00> : vector<48x160xf32>
    %36 = tpu.matmul %34, %35, %cst_20 {dimension_numbers = #tpu.dot_dimension_numbers<[1], [0], [0], [1], [0, 0, 1, 1], [], []>} : vector<48x112xf32>, vector<112x160xf32>, vector<48x160xf32> -> vector<48x160xf32>
    %c0_21 = arith.constant 0 : index
    %c0_22 = arith.constant 0 : index
    %37 = vector.load %arg7[%c0_21, %c0_22] : memref<1x160xf32, #tpu.memory_space<vmem>>, vector<1x160xf32>
    %38 = vector.broadcast %37 : vector<1x160xf32> to vector<48x160xf32>
    %39 = arith.addf %36, %38 : vector<48x160xf32>
    %cst_23 = arith.constant 0.000000e+00 : f32
    %40 = vector.broadcast %cst_23 : f32 to vector<48x160xf32>
    %41 = arith.maximumf %39, %40 : vector<48x160xf32>
    %42 = vector.shape_cast %41 : vector<48x160xf32> to vector<8x6x160xf32>
    %cst_24 = arith.constant dense<0xFF800000> : vector<8x160xf32>
    %43 = vector.multi_reduction <maximumf>, %42, %cst_24 [1] : vector<8x6x160xf32> to vector<8x160xf32>
    %c0_25 = arith.constant 0 : index
    %c0_26 = arith.constant 0 : index
    %44 = vector.load %arg8[%c0_25, %c0_26] : memref<1x160xf32, #tpu.memory_space<vmem>>, vector<1x160xf32>
    %c0_27 = arith.constant 0 : index
    %c0_28 = arith.constant 0 : index
    %45 = vector.load %arg9[%c0_27, %c0_28] : memref<1x160xf32, #tpu.memory_space<vmem>>, vector<1x160xf32>
    %cst_29 = arith.constant dense<0.000000e+00> : vector<8xf32>
    %46 = vector.multi_reduction <add>, %43, %cst_29 [1] : vector<8x160xf32> to vector<8xf32>
    %47 = vector.shape_cast %46 : vector<8xf32> to vector<8x1xf32>
    %cst_30 = arith.constant 1.600000e+02 : f32
    %48 = vector.broadcast %cst_30 : f32 to vector<8x1xf32>
    %49 = arith.divf %47, %48 : vector<8x1xf32>
    %50 = vector.broadcast %49 : vector<8x1xf32> to vector<8x160xf32>
    %51 = arith.subf %43, %50 : vector<8x160xf32>
    %52 = arith.mulf %51, %51 : vector<8x160xf32>
    %cst_31 = arith.constant dense<0.000000e+00> : vector<8xf32>
    %53 = vector.multi_reduction <add>, %52, %cst_31 [1] : vector<8x160xf32> to vector<8xf32>
    %54 = vector.shape_cast %53 : vector<8xf32> to vector<8x1xf32>
    %cst_32 = arith.constant 1.600000e+02 : f32
    %55 = vector.broadcast %cst_32 : f32 to vector<8x1xf32>
    %56 = arith.divf %54, %55 : vector<8x1xf32>
    %57 = vector.broadcast %49 : vector<8x1xf32> to vector<8x160xf32>
    %58 = arith.subf %43, %57 : vector<8x160xf32>
    %cst_33 = arith.constant 9.99999974E-6 : f32
    %59 = vector.broadcast %cst_33 : f32 to vector<8x1xf32>
    %60 = arith.addf %56, %59 : vector<8x1xf32>
    %61 = math.rsqrt %60 : vector<8x1xf32>
    %62 = vector.broadcast %61 : vector<8x1xf32> to vector<8x160xf32>
    %63 = arith.mulf %58, %62 : vector<8x160xf32>
    %64 = vector.broadcast %44 : vector<1x160xf32> to vector<8x160xf32>
    %65 = arith.mulf %63, %64 : vector<8x160xf32>
    %66 = vector.broadcast %45 : vector<1x160xf32> to vector<8x160xf32>
    %67 = arith.addf %65, %66 : vector<8x160xf32>
    %c0_34 = arith.constant 0 : index
    %c0_35 = arith.constant 0 : index
    %68 = vector.load %arg10[%c0_34, %c0_35] : memref<1x160xf32, #tpu.memory_space<vmem>>, vector<1x160xf32>
    %c0_36 = arith.constant 0 : index
    %c0_37 = arith.constant 0 : index
    %69 = vector.load %arg11[%c0_36, %c0_37] : memref<1x160xf32, #tpu.memory_space<vmem>>, vector<1x160xf32>
    %cst_38 = arith.constant dense<0.000000e+00> : vector<8xf32>
    %70 = vector.multi_reduction <add>, %67, %cst_38 [1] : vector<8x160xf32> to vector<8xf32>
    %71 = vector.shape_cast %70 : vector<8xf32> to vector<8x1xf32>
    %cst_39 = arith.constant 1.600000e+02 : f32
    %72 = vector.broadcast %cst_39 : f32 to vector<8x1xf32>
    %73 = arith.divf %71, %72 : vector<8x1xf32>
    %74 = vector.broadcast %73 : vector<8x1xf32> to vector<8x160xf32>
    %75 = arith.subf %67, %74 : vector<8x160xf32>
    %76 = arith.mulf %75, %75 : vector<8x160xf32>
    %cst_40 = arith.constant dense<0.000000e+00> : vector<8xf32>
    %77 = vector.multi_reduction <add>, %76, %cst_40 [1] : vector<8x160xf32> to vector<8xf32>
    %78 = vector.shape_cast %77 : vector<8xf32> to vector<8x1xf32>
    %cst_41 = arith.constant 1.600000e+02 : f32
    %79 = vector.broadcast %cst_41 : f32 to vector<8x1xf32>
    %80 = arith.divf %78, %79 : vector<8x1xf32>
    %81 = vector.broadcast %73 : vector<8x1xf32> to vector<8x160xf32>
    %82 = arith.subf %67, %81 : vector<8x160xf32>
    %cst_42 = arith.constant 9.99999974E-6 : f32
    %83 = vector.broadcast %cst_42 : f32 to vector<8x1xf32>
    %84 = arith.addf %80, %83 : vector<8x1xf32>
    %85 = math.rsqrt %84 : vector<8x1xf32>
    %86 = vector.broadcast %85 : vector<8x1xf32> to vector<8x160xf32>
    %87 = arith.mulf %82, %86 : vector<8x160xf32>
    %88 = vector.broadcast %68 : vector<1x160xf32> to vector<8x160xf32>
    %89 = arith.mulf %87, %88 : vector<8x160xf32>
    %90 = vector.broadcast %69 : vector<1x160xf32> to vector<8x160xf32>
    %91 = arith.addf %89, %90 : vector<8x160xf32>
    %92 = vector.shape_cast %91 : vector<8x160xf32> to vector<2x4x160xf32>
    %c0_43 = arith.constant 0 : index
    %c0_44 = arith.constant 0 : index
    %93 = vector.load %arg12[%c0_43, %c0_44] : memref<160x100xf32, #tpu.memory_space<vmem>>, vector<160x100xf32>
    %cst_45 = arith.constant dense<0.000000e+00> : vector<4x100xf32>
    %94 = tpu.matmul %33, %93, %cst_45 {dimension_numbers = #tpu.dot_dimension_numbers<[1], [0], [0], [1], [0, 0, 1, 1], [], []>} : vector<4x160xf32>, vector<160x100xf32>, vector<4x100xf32> -> vector<4x100xf32>
    %95 = vector.shape_cast %94 : vector<4x100xf32> to vector<2x2x100xf32>
    %c0_46 = arith.constant 0 : index
    %c0_47 = arith.constant 0 : index
    %96 = vector.load %arg13[%c0_46, %c0_47] : memref<160x100xf32, #tpu.memory_space<vmem>>, vector<160x100xf32>
    %cst_48 = arith.constant dense<0.000000e+00> : vector<8x100xf32>
    %97 = tpu.matmul %91, %96, %cst_48 {dimension_numbers = #tpu.dot_dimension_numbers<[1], [0], [0], [1], [0, 0, 1, 1], [], []>} : vector<8x160xf32>, vector<160x100xf32>, vector<8x100xf32> -> vector<8x100xf32>
    %98 = vector.shape_cast %97 : vector<8x100xf32> to vector<2x4x100xf32>
    %c0_49 = arith.constant 0 : index
    %c0_50 = arith.constant 0 : index
    %99 = vector.load %arg14[%c0_49, %c0_50] : memref<1x100xf32, #tpu.memory_space<vmem>>, vector<1x100xf32>
    %c0_51 = arith.constant 0 : index
    %c0_52 = arith.constant 0 : index
    %100 = vector.load %arg15[%c0_51, %c0_52] : memref<1x100xf32, #tpu.memory_space<vmem>>, vector<1x100xf32>
    %c0_53 = arith.constant 0 : index
    %c0_54 = arith.constant 0 : index
    %101 = vector.load %arg16[%c0_53, %c0_54] : memref<160x160xf32, #tpu.memory_space<vmem>>, vector<160x160xf32>
    %cst_55 = arith.constant dense<0.000000e+00> : vector<8x160xf32>
    %102 = tpu.matmul %91, %101, %cst_55 {dimension_numbers = #tpu.dot_dimension_numbers<[1], [0], [0], [1], [0, 0, 1, 1], [], []>} : vector<8x160xf32>, vector<160x160xf32>, vector<8x160xf32> -> vector<8x160xf32>
    %c0_56 = arith.constant 0 : index
    %c0_57 = arith.constant 0 : index
    %103 = vector.load %arg18[%c0_56, %c0_57] : memref<1x160xf32, #tpu.memory_space<vmem>>, vector<1x160xf32>
    %104 = vector.broadcast %103 : vector<1x160xf32> to vector<8x160xf32>
    %105 = arith.addf %102, %104 : vector<8x160xf32>
    %106 = vector.shape_cast %105 : vector<8x160xf32> to vector<2x4x160xf32>
    %c0_58 = arith.constant 0 : index
    %c0_59 = arith.constant 0 : index
    %107 = vector.load %arg17[%c0_58, %c0_59] : memref<160x160xf32, #tpu.memory_space<vmem>>, vector<160x160xf32>
    %cst_60 = arith.constant 0.000000e+00 : f32
    %108 = vector.broadcast %cst_60 : f32 to vector<2x160xf32>
    %109 = vector.extract_strided_slice %106 {offsets = [0, 0, 0], sizes = [2, 1, 160], strides = [1, 1, 1]} : vector<2x4x160xf32> to vector<2x1x160xf32>
    %110 = vector.shape_cast %109 : vector<2x1x160xf32> to vector<2x160xf32>
    %cst_61 = arith.constant dense<0.000000e+00> : vector<2x160xf32>
    %111 = tpu.matmul %108, %107, %cst_61 {dimension_numbers = #tpu.dot_dimension_numbers<[1], [0], [0], [1], [0, 0, 1, 1], [], []>} : vector<2x160xf32>, vector<160x160xf32>, vector<2x160xf32> -> vector<2x160xf32>
    %112 = arith.addf %110, %111 : vector<2x160xf32>
    %113 = math.tanh %112 : vector<2x160xf32>
    %114 = vector.extract_strided_slice %106 {offsets = [0, 1, 0], sizes = [2, 1, 160], strides = [1, 1, 1]} : vector<2x4x160xf32> to vector<2x1x160xf32>
    %115 = vector.shape_cast %114 : vector<2x1x160xf32> to vector<2x160xf32>
    %cst_62 = arith.constant dense<0.000000e+00> : vector<2x160xf32>
    %116 = tpu.matmul %113, %107, %cst_62 {dimension_numbers = #tpu.dot_dimension_numbers<[1], [0], [0], [1], [0, 0, 1, 1], [], []>} : vector<2x160xf32>, vector<160x160xf32>, vector<2x160xf32> -> vector<2x160xf32>
    %117 = arith.addf %115, %116 : vector<2x160xf32>
    %118 = math.tanh %117 : vector<2x160xf32>
    %119 = vector.extract_strided_slice %106 {offsets = [0, 2, 0], sizes = [2, 1, 160], strides = [1, 1, 1]} : vector<2x4x160xf32> to vector<2x1x160xf32>
    %120 = vector.shape_cast %119 : vector<2x1x160xf32> to vector<2x160xf32>
    %cst_63 = arith.constant dense<0.000000e+00> : vector<2x160xf32>
    %121 = tpu.matmul %118, %107, %cst_63 {dimension_numbers = #tpu.dot_dimension_numbers<[1], [0], [0], [1], [0, 0, 1, 1], [], []>} : vector<2x160xf32>, vector<160x160xf32>, vector<2x160xf32> -> vector<2x160xf32>
    %122 = arith.addf %120, %121 : vector<2x160xf32>
    %123 = math.tanh %122 : vector<2x160xf32>
    %124 = vector.extract_strided_slice %106 {offsets = [0, 3, 0], sizes = [2, 1, 160], strides = [1, 1, 1]} : vector<2x4x160xf32> to vector<2x1x160xf32>
    %125 = vector.shape_cast %124 : vector<2x1x160xf32> to vector<2x160xf32>
    %cst_64 = arith.constant dense<0.000000e+00> : vector<2x160xf32>
    %126 = tpu.matmul %123, %107, %cst_64 {dimension_numbers = #tpu.dot_dimension_numbers<[1], [0], [0], [1], [0, 0, 1, 1], [], []>} : vector<2x160xf32>, vector<160x160xf32>, vector<2x160xf32> -> vector<2x160xf32>
    %127 = arith.addf %125, %126 : vector<2x160xf32>
    %128 = math.tanh %127 : vector<2x160xf32>
    %c0_65 = arith.constant 0 : index
    %c0_66 = arith.constant 0 : index
    %129 = vector.load %arg19[%c0_65, %c0_66] : memref<1x160xf32, #tpu.memory_space<vmem>>, vector<1x160xf32>
    %c0_67 = arith.constant 0 : index
    %c0_68 = arith.constant 0 : index
    %130 = vector.load %arg20[%c0_67, %c0_68] : memref<1x160xf32, #tpu.memory_space<vmem>>, vector<1x160xf32>
    %131 = vector.extract_strided_slice %95 {offsets = [0, 0, 0], sizes = [1, 2, 100], strides = [1, 1, 1]} : vector<2x2x100xf32> to vector<1x2x100xf32>
    %132 = vector.shape_cast %131 : vector<1x2x100xf32> to vector<2x100xf32>
    %133 = vector.shape_cast %132 : vector<2x100xf32> to vector<2x1x100xf32>
    %134 = vector.extract_strided_slice %98 {offsets = [0, 0, 0], sizes = [1, 4, 100], strides = [1, 1, 1]} : vector<2x4x100xf32> to vector<1x4x100xf32>
    %135 = vector.shape_cast %134 : vector<1x4x100xf32> to vector<4x100xf32>
    %136 = vector.shape_cast %135 : vector<4x100xf32> to vector<1x4x100xf32>
    %137 = vector.broadcast %133 : vector<2x1x100xf32> to vector<2x4x100xf32>
    %138 = vector.broadcast %136 : vector<1x4x100xf32> to vector<2x4x100xf32>
    %139 = arith.addf %137, %138 : vector<2x4x100xf32>
    %140 = vector.shape_cast %99 : vector<1x100xf32> to vector<1x1x100xf32>
    %141 = vector.broadcast %140 : vector<1x1x100xf32> to vector<2x4x100xf32>
    %142 = arith.addf %139, %141 : vector<2x4x100xf32>
    %143 = math.tanh %142 : vector<2x4x100xf32>
    %144 = vector.shape_cast %100 : vector<1x100xf32> to vector<1x1x100xf32>
    %145 = vector.broadcast %144 : vector<1x1x100xf32> to vector<2x4x100xf32>
    %146 = arith.mulf %143, %145 : vector<2x4x100xf32>
    %cst_69 = arith.constant dense<0.000000e+00> : vector<2x4xf32>
    %147 = vector.multi_reduction <add>, %146, %cst_69 [2] : vector<2x4x100xf32> to vector<2x4xf32>
    %cst_70 = arith.constant dense<0xFF800000> : vector<2xf32>
    %148 = vector.multi_reduction <maximumf>, %147, %cst_70 [1] : vector<2x4xf32> to vector<2xf32>
    %149 = vector.shape_cast %148 : vector<2xf32> to vector<2x1xf32>
    %150 = vector.broadcast %149 : vector<2x1xf32> to vector<2x4xf32>
    %151 = arith.subf %147, %150 : vector<2x4xf32>
    %152 = math.exp %151 : vector<2x4xf32>
    %cst_71 = arith.constant dense<0.000000e+00> : vector<2xf32>
    %153 = vector.multi_reduction <add>, %152, %cst_71 [1] : vector<2x4xf32> to vector<2xf32>
    %154 = vector.shape_cast %153 : vector<2xf32> to vector<2x1xf32>
    %155 = tpu.reciprocal %154 {approx = true} : vector<2x1xf32> -> vector<2x1xf32>
    %156 = vector.broadcast %155 : vector<2x1xf32> to vector<2x4xf32>
    %157 = arith.mulf %152, %156 : vector<2x4xf32>
    %158 = vector.extract_strided_slice %92 {offsets = [0, 0, 0], sizes = [1, 4, 160], strides = [1, 1, 1]} : vector<2x4x160xf32> to vector<1x4x160xf32>
    %159 = vector.shape_cast %158 : vector<1x4x160xf32> to vector<4x160xf32>
    %cst_72 = arith.constant dense<0.000000e+00> : vector<2x160xf32>
    %160 = tpu.matmul %157, %159, %cst_72 {dimension_numbers = #tpu.dot_dimension_numbers<[1], [0], [0], [1], [0, 0, 1, 1], [], []>} : vector<2x4xf32>, vector<4x160xf32>, vector<2x160xf32> -> vector<2x160xf32>
    %161 = vector.extract_strided_slice %113 {offsets = [0, 0], sizes = [1, 160], strides = [1, 1]} : vector<2x160xf32> to vector<1x160xf32>
    %162 = vector.extract_strided_slice %118 {offsets = [0, 0], sizes = [1, 160], strides = [1, 1]} : vector<2x160xf32> to vector<1x160xf32>
    %163 = vector.extract_strided_slice %123 {offsets = [0, 0], sizes = [1, 160], strides = [1, 1]} : vector<2x160xf32> to vector<1x160xf32>
    %164 = vector.extract_strided_slice %128 {offsets = [0, 0], sizes = [1, 160], strides = [1, 1]} : vector<2x160xf32> to vector<1x160xf32>
    %165 = tpu.concatenate %161, %162, %163, %164 in 0 : vector<1x160xf32>, vector<1x160xf32>, vector<1x160xf32>, vector<1x160xf32> -> vector<4x160xf32>
    %cst_73 = arith.constant dense<0.000000e+00> : vector<2x4xf32>
    %166 = tpu.matmul %160, %165, %cst_73 {dimension_numbers = #tpu.dot_dimension_numbers<[1], [1], [0], [0], [0, 0, 1, 0], [], []>} : vector<2x160xf32>, vector<4x160xf32>, vector<2x4xf32> -> vector<2x4xf32>
    %cst_74 = arith.constant dense<0xFF800000> : vector<2xf32>
    %167 = vector.multi_reduction <maximumf>, %166, %cst_74 [1] : vector<2x4xf32> to vector<2xf32>
    %168 = vector.shape_cast %167 : vector<2xf32> to vector<2x1xf32>
    %169 = vector.broadcast %168 : vector<2x1xf32> to vector<2x4xf32>
    %170 = arith.subf %166, %169 : vector<2x4xf32>
    %171 = math.exp %170 : vector<2x4xf32>
    %cst_75 = arith.constant dense<0.000000e+00> : vector<2xf32>
    %172 = vector.multi_reduction <add>, %171, %cst_75 [1] : vector<2x4xf32> to vector<2xf32>
    %173 = vector.shape_cast %172 : vector<2xf32> to vector<2x1xf32>
    %174 = tpu.reciprocal %173 {approx = true} : vector<2x1xf32> -> vector<2x1xf32>
    %175 = vector.broadcast %174 : vector<2x1xf32> to vector<2x4xf32>
    %176 = arith.mulf %171, %175 : vector<2x4xf32>
    %cst_76 = arith.constant dense<0.000000e+00> : vector<2x160xf32>
    %177 = tpu.matmul %176, %165, %cst_76 {dimension_numbers = #tpu.dot_dimension_numbers<[1], [0], [0], [1], [0, 0, 1, 1], [], []>} : vector<2x4xf32>, vector<4x160xf32>, vector<2x160xf32> -> vector<2x160xf32>
    %cst_77 = arith.constant dense<0.000000e+00> : vector<2xf32>
    %178 = vector.multi_reduction <add>, %177, %cst_77 [1] : vector<2x160xf32> to vector<2xf32>
    %179 = vector.shape_cast %178 : vector<2xf32> to vector<2x1xf32>
    %cst_78 = arith.constant 1.600000e+02 : f32
    %180 = vector.broadcast %cst_78 : f32 to vector<2x1xf32>
    %181 = arith.divf %179, %180 : vector<2x1xf32>
    %182 = vector.broadcast %181 : vector<2x1xf32> to vector<2x160xf32>
    %183 = arith.subf %177, %182 : vector<2x160xf32>
    %184 = arith.mulf %183, %183 : vector<2x160xf32>
    %cst_79 = arith.constant dense<0.000000e+00> : vector<2xf32>
    %185 = vector.multi_reduction <add>, %184, %cst_79 [1] : vector<2x160xf32> to vector<2xf32>
    %186 = vector.shape_cast %185 : vector<2xf32> to vector<2x1xf32>
    %cst_80 = arith.constant 1.600000e+02 : f32
    %187 = vector.broadcast %cst_80 : f32 to vector<2x1xf32>
    %188 = arith.divf %186, %187 : vector<2x1xf32>
    %189 = vector.broadcast %181 : vector<2x1xf32> to vector<2x160xf32>
    %190 = arith.subf %177, %189 : vector<2x160xf32>
    %cst_81 = arith.constant 9.99999974E-6 : f32
    %191 = vector.broadcast %cst_81 : f32 to vector<2x1xf32>
    %192 = arith.addf %188, %191 : vector<2x1xf32>
    %193 = math.rsqrt %192 : vector<2x1xf32>
    %194 = vector.broadcast %193 : vector<2x1xf32> to vector<2x160xf32>
    %195 = arith.mulf %190, %194 : vector<2x160xf32>
    %196 = vector.broadcast %129 : vector<1x160xf32> to vector<2x160xf32>
    %197 = arith.mulf %195, %196 : vector<2x160xf32>
    %198 = vector.broadcast %130 : vector<1x160xf32> to vector<2x160xf32>
    %199 = arith.addf %197, %198 : vector<2x160xf32>
    %200 = vector.extract_strided_slice %95 {offsets = [1, 0, 0], sizes = [1, 2, 100], strides = [1, 1, 1]} : vector<2x2x100xf32> to vector<1x2x100xf32>
    %201 = vector.shape_cast %200 : vector<1x2x100xf32> to vector<2x100xf32>
    %202 = vector.shape_cast %201 : vector<2x100xf32> to vector<2x1x100xf32>
    %203 = vector.extract_strided_slice %98 {offsets = [1, 0, 0], sizes = [1, 4, 100], strides = [1, 1, 1]} : vector<2x4x100xf32> to vector<1x4x100xf32>
    %204 = vector.shape_cast %203 : vector<1x4x100xf32> to vector<4x100xf32>
    %205 = vector.shape_cast %204 : vector<4x100xf32> to vector<1x4x100xf32>
    %206 = vector.broadcast %202 : vector<2x1x100xf32> to vector<2x4x100xf32>
    %207 = vector.broadcast %205 : vector<1x4x100xf32> to vector<2x4x100xf32>
    %208 = arith.addf %206, %207 : vector<2x4x100xf32>
    %209 = vector.shape_cast %99 : vector<1x100xf32> to vector<1x1x100xf32>
    %210 = vector.broadcast %209 : vector<1x1x100xf32> to vector<2x4x100xf32>
    %211 = arith.addf %208, %210 : vector<2x4x100xf32>
    %212 = math.tanh %211 : vector<2x4x100xf32>
    %213 = vector.shape_cast %100 : vector<1x100xf32> to vector<1x1x100xf32>
    %214 = vector.broadcast %213 : vector<1x1x100xf32> to vector<2x4x100xf32>
    %215 = arith.mulf %212, %214 : vector<2x4x100xf32>
    %cst_82 = arith.constant dense<0.000000e+00> : vector<2x4xf32>
    %216 = vector.multi_reduction <add>, %215, %cst_82 [2] : vector<2x4x100xf32> to vector<2x4xf32>
    %cst_83 = arith.constant dense<0xFF800000> : vector<2xf32>
    %217 = vector.multi_reduction <maximumf>, %216, %cst_83 [1] : vector<2x4xf32> to vector<2xf32>
    %218 = vector.shape_cast %217 : vector<2xf32> to vector<2x1xf32>
    %219 = vector.broadcast %218 : vector<2x1xf32> to vector<2x4xf32>
    %220 = arith.subf %216, %219 : vector<2x4xf32>
    %221 = math.exp %220 : vector<2x4xf32>
    %cst_84 = arith.constant dense<0.000000e+00> : vector<2xf32>
    %222 = vector.multi_reduction <add>, %221, %cst_84 [1] : vector<2x4xf32> to vector<2xf32>
    %223 = vector.shape_cast %222 : vector<2xf32> to vector<2x1xf32>
    %224 = tpu.reciprocal %223 {approx = true} : vector<2x1xf32> -> vector<2x1xf32>
    %225 = vector.broadcast %224 : vector<2x1xf32> to vector<2x4xf32>
    %226 = arith.mulf %221, %225 : vector<2x4xf32>
    %227 = vector.extract_strided_slice %92 {offsets = [1, 0, 0], sizes = [1, 4, 160], strides = [1, 1, 1]} : vector<2x4x160xf32> to vector<1x4x160xf32>
    %228 = vector.shape_cast %227 : vector<1x4x160xf32> to vector<4x160xf32>
    %cst_85 = arith.constant dense<0.000000e+00> : vector<2x160xf32>
    %229 = tpu.matmul %226, %228, %cst_85 {dimension_numbers = #tpu.dot_dimension_numbers<[1], [0], [0], [1], [0, 0, 1, 1], [], []>} : vector<2x4xf32>, vector<4x160xf32>, vector<2x160xf32> -> vector<2x160xf32>
    %230 = vector.extract_strided_slice %113 {offsets = [1, 0], sizes = [1, 160], strides = [1, 1]} : vector<2x160xf32> to vector<1x160xf32>
    %231 = vector.extract_strided_slice %118 {offsets = [1, 0], sizes = [1, 160], strides = [1, 1]} : vector<2x160xf32> to vector<1x160xf32>
    %232 = vector.extract_strided_slice %123 {offsets = [1, 0], sizes = [1, 160], strides = [1, 1]} : vector<2x160xf32> to vector<1x160xf32>
    %233 = vector.extract_strided_slice %128 {offsets = [1, 0], sizes = [1, 160], strides = [1, 1]} : vector<2x160xf32> to vector<1x160xf32>
    %234 = tpu.concatenate %230, %231, %232, %233 in 0 : vector<1x160xf32>, vector<1x160xf32>, vector<1x160xf32>, vector<1x160xf32> -> vector<4x160xf32>
    %cst_86 = arith.constant dense<0.000000e+00> : vector<2x4xf32>
    %235 = tpu.matmul %229, %234, %cst_86 {dimension_numbers = #tpu.dot_dimension_numbers<[1], [1], [0], [0], [0, 0, 1, 0], [], []>} : vector<2x160xf32>, vector<4x160xf32>, vector<2x4xf32> -> vector<2x4xf32>
    %cst_87 = arith.constant dense<0xFF800000> : vector<2xf32>
    %236 = vector.multi_reduction <maximumf>, %235, %cst_87 [1] : vector<2x4xf32> to vector<2xf32>
    %237 = vector.shape_cast %236 : vector<2xf32> to vector<2x1xf32>
    %238 = vector.broadcast %237 : vector<2x1xf32> to vector<2x4xf32>
    %239 = arith.subf %235, %238 : vector<2x4xf32>
    %240 = math.exp %239 : vector<2x4xf32>
    %cst_88 = arith.constant dense<0.000000e+00> : vector<2xf32>
    %241 = vector.multi_reduction <add>, %240, %cst_88 [1] : vector<2x4xf32> to vector<2xf32>
    %242 = vector.shape_cast %241 : vector<2xf32> to vector<2x1xf32>
    %243 = tpu.reciprocal %242 {approx = true} : vector<2x1xf32> -> vector<2x1xf32>
    %244 = vector.broadcast %243 : vector<2x1xf32> to vector<2x4xf32>
    %245 = arith.mulf %240, %244 : vector<2x4xf32>
    %cst_89 = arith.constant dense<0.000000e+00> : vector<2x160xf32>
    %246 = tpu.matmul %245, %234, %cst_89 {dimension_numbers = #tpu.dot_dimension_numbers<[1], [0], [0], [1], [0, 0, 1, 1], [], []>} : vector<2x4xf32>, vector<4x160xf32>, vector<2x160xf32> -> vector<2x160xf32>
    %cst_90 = arith.constant dense<0.000000e+00> : vector<2xf32>
    %247 = vector.multi_reduction <add>, %246, %cst_90 [1] : vector<2x160xf32> to vector<2xf32>
    %248 = vector.shape_cast %247 : vector<2xf32> to vector<2x1xf32>
    %cst_91 = arith.constant 1.600000e+02 : f32
    %249 = vector.broadcast %cst_91 : f32 to vector<2x1xf32>
    %250 = arith.divf %248, %249 : vector<2x1xf32>
    %251 = vector.broadcast %250 : vector<2x1xf32> to vector<2x160xf32>
    %252 = arith.subf %246, %251 : vector<2x160xf32>
    %253 = arith.mulf %252, %252 : vector<2x160xf32>
    %cst_92 = arith.constant dense<0.000000e+00> : vector<2xf32>
    %254 = vector.multi_reduction <add>, %253, %cst_92 [1] : vector<2x160xf32> to vector<2xf32>
    %255 = vector.shape_cast %254 : vector<2xf32> to vector<2x1xf32>
    %cst_93 = arith.constant 1.600000e+02 : f32
    %256 = vector.broadcast %cst_93 : f32 to vector<2x1xf32>
    %257 = arith.divf %255, %256 : vector<2x1xf32>
    %258 = vector.broadcast %250 : vector<2x1xf32> to vector<2x160xf32>
    %259 = arith.subf %246, %258 : vector<2x160xf32>
    %cst_94 = arith.constant 9.99999974E-6 : f32
    %260 = vector.broadcast %cst_94 : f32 to vector<2x1xf32>
    %261 = arith.addf %257, %260 : vector<2x1xf32>
    %262 = math.rsqrt %261 : vector<2x1xf32>
    %263 = vector.broadcast %262 : vector<2x1xf32> to vector<2x160xf32>
    %264 = arith.mulf %259, %263 : vector<2x160xf32>
    %265 = vector.broadcast %129 : vector<1x160xf32> to vector<2x160xf32>
    %266 = arith.mulf %264, %265 : vector<2x160xf32>
    %267 = vector.broadcast %130 : vector<1x160xf32> to vector<2x160xf32>
    %268 = arith.addf %266, %267 : vector<2x160xf32>
    %269 = tpu.concatenate %199, %268 in 0 : vector<2x160xf32>, vector<2x160xf32> -> vector<4x160xf32>
    %270 = arith.mulf %33, %269 : vector<4x160xf32>
    %cst_95 = arith.constant dense<0.000000e+00> : vector<4xf32>
    %271 = vector.multi_reduction <add>, %270, %cst_95 [1] : vector<4x160xf32> to vector<4xf32>
    %272 = vector.shape_cast %271 : vector<4xf32> to vector<4x1xf32>
    %273 = arith.mulf %33, %33 : vector<4x160xf32>
    %cst_96 = arith.constant dense<0.000000e+00> : vector<4xf32>
    %274 = vector.multi_reduction <add>, %273, %cst_96 [1] : vector<4x160xf32> to vector<4xf32>
    %275 = vector.shape_cast %274 : vector<4xf32> to vector<4x1xf32>
    %276 = math.sqrt %275 : vector<4x1xf32>
    %277 = arith.mulf %269, %269 : vector<4x160xf32>
    %cst_97 = arith.constant dense<0.000000e+00> : vector<4xf32>
    %278 = vector.multi_reduction <add>, %277, %cst_97 [1] : vector<4x160xf32> to vector<4xf32>
    %279 = vector.shape_cast %278 : vector<4xf32> to vector<4x1xf32>
    %280 = math.sqrt %279 : vector<4x1xf32>
    %281 = arith.mulf %276, %280 : vector<4x1xf32>
    %cst_98 = arith.constant 9.99999993E-9 : f32
    %282 = vector.broadcast %cst_98 : f32 to vector<4x1xf32>
    %283 = arith.maximumf %281, %282 : vector<4x1xf32>
    %284 = arith.divf %272, %283 : vector<4x1xf32>
    %c0_99 = arith.constant 0 : index
    %c0_100 = arith.constant 0 : index
    %285 = vector.load %arg21[%c0_99, %c0_100] : memref<4x1xf32, #tpu.memory_space<vmem>>, vector<4x1xf32>
    tpu.vector_store %arg21[%c0_99, %c0_100], %284 {strides = array<i32>} : memref<4x1xf32, #tpu.memory_space<vmem>>, vector<4x1xf32>,
    return
  }
}

</mosaic_0001>

<llo_original>
// kernel: dan_forward.1
$region0: #{dan_forward.1}
  #allocation0 [shape = 'u32[]', space=smem, size = 0x4, offset = 0x4, fixed_abs, tag = 'smem constant byte address 0x4 - core index']
  #allocation1 [shape = 'u32[144,128]{1,0:T(1,128)}', space=vmem, size = 0x12000, scoped, tag = 'internal scratch']
  %s0 = inlined_call_operand.vmem [shape: f32[24,112], index: 0, kind: input, shape index: {}]
  %s1 = inlined_call_operand.vmem [shape: f32[48,112], index: 1, kind: input, shape index: {}]
  %s2 = inlined_call_operand.vmem [shape: f32[112,160], index: 2, kind: input, shape index: {}]
  %s3 = inlined_call_operand.vmem [shape: f32[1,160], index: 3, kind: input, shape index: {}]
  %s4 = inlined_call_operand.vmem [shape: f32[1,160], index: 4, kind: input, shape index: {}]
  %s5 = inlined_call_operand.vmem [shape: f32[1,160], index: 5, kind: input, shape index: {}]
  %s6 = inlined_call_operand.vmem [shape: f32[112,160], index: 6, kind: input, shape index: {}]
  %s7 = inlined_call_operand.vmem [shape: f32[1,160], index: 7, kind: input, shape index: {}]
  %s8 = inlined_call_operand.vmem [shape: f32[1,160], index: 8, kind: input, shape index: {}]
  %s9 = inlined_call_operand.vmem [shape: f32[1,160], index: 9, kind: input, shape index: {}]
  %s10 = inlined_call_operand.vmem [shape: f32[1,160], index: 10, kind: input, shape index: {}]
  %s11 = inlined_call_operand.vmem [shape: f32[1,160], index: 11, kind: input, shape index: {}]
  %s12 = inlined_call_operand.vmem [shape: f32[160,100], index: 12, kind: input, shape index: {}]
  %s13 = inlined_call_operand.vmem [shape: f32[160,100], index: 13, kind: input, shape index: {}]
  %s14 = inlined_call_operand.vmem [shape: f32[1,100], index: 14, kind: input, shape index: {}]
  %s15 = inlined_call_operand.vmem [shape: f32[1,100], index: 15, kind: input, shape index: {}]
  %s16 = inlined_call_operand.vmem [shape: f32[160,160], index: 16, kind: input, shape index: {}]
  %s17 = inlined_call_operand.vmem [shape: f32[160,160], index: 17, kind: input, shape index: {}]
  %s18 = inlined_call_operand.vmem [shape: f32[1,160], index: 18, kind: input, shape index: {}]
  %s19 = inlined_call_operand.vmem [shape: f32[1,160], index: 19, kind: input, shape index: {}]
  %s20 = inlined_call_operand.vmem [shape: f32[1,160], index: 20, kind: input, shape index: {}]
  %s21 = inlined_call_operand.vmem [shape: f32[4,1], index: 21, kind: output, shape index: {}]
  %s22 = sld [smem:[#allocation0]]
  $region94: #{dan_forward.1} parent=0
    _
  %s24 = ssub.s32 1, %s22
  %s25 = scalar_select 0, %s24, %s22
  // Predicated region
  $region2: #{dan_forward.1} parent=0 // pred_check
    _
  $region3: #{dan_forward.1} parent=0 // pred_check_branch
    %27 = sbr.rel (0) target = $region5
  $region4: #{dan_forward.1} parent=0 // pred_region
    _
  $region5: #{dan_forward.1} parent=0 // pred_fallthru
    _
  // Predicated region
  $region6: #{dan_forward.1} parent=0 // pred_check
    _
  $region7: #{dan_forward.1} parent=0 // pred_check_branch
    %29 = sbr.rel (0) target = $region9
  $region8: #{dan_forward.1} parent=0 // pred_region
    _
  $region9: #{dan_forward.1} parent=0 // pred_fallthru
    _
  // Predicated region
  $region10: #{dan_forward.1} parent=0 // pred_check
    _
  $region11: #{dan_forward.1} parent=0 // pred_check_branch
    %31 = sbr.rel (0) target = $region13
  $region12: #{dan_forward.1} parent=0 // pred_region
    _
  $region13: #{dan_forward.1} parent=0 // pred_fallthru
    _
  // Predicated region
  $region14: #{dan_forward.1} parent=0 // pred_check
    _
  $region15: #{dan_forward.1} parent=0 // pred_check_branch
    %33 = sbr.rel (0) target = $region17
  $region16: #{dan_forward.1} parent=0 // pred_region
    _
  $region17: #{dan_forward.1} parent=0 // pred_fallthru
    _
  // Predicated region
  $region18: #{dan_forward.1} parent=0 // pred_check
    _
  $region19: #{dan_forward.1} parent=0 // pred_check_branch
    %35 = sbr.rel (0) target = $region21
  $region20: #{dan_forward.1} parent=0 // pred_region
    _
  $region21: #{dan_forward.1} parent=0 // pred_fallthru
    _
  // Predicated region
  $region22: #{dan_forward.1} parent=0 // pred_check
    _
  $region23: #{dan_forward.1} parent=0 // pred_check_branch
    %37 = sbr.rel (0) target = $region25
  $region24: #{dan_forward.1} parent=0 // pred_region
    _
  $region25: #{dan_forward.1} parent=0 // pred_fallthru
    _
  // Predicated region
  $region26: #{dan_forward.1} parent=0 // pred_check
    _
  $region27: #{dan_forward.1} parent=0 // pred_check_branch
    %39 = sbr.rel (0) target = $region29
  $region28: #{dan_forward.1} parent=0 // pred_region
    _
  $region29: #{dan_forward.1} parent=0 // pred_fallthru
    _
  // Predicated region
  $region30: #{dan_forward.1} parent=0 // pred_check
    _
  $region31: #{dan_forward.1} parent=0 // pred_check_branch
    %41 = sbr.rel (0) target = $region33
  $region32: #{dan_forward.1} parent=0 // pred_region
    _
  $region33: #{dan_forward.1} parent=0 // pred_fallthru
    _
  // Predicated region
  $region34: #{dan_forward.1} parent=0 // pred_check
    _
  $region35: #{dan_forward.1} parent=0 // pred_check_branch
    %43 = sbr.rel (0) target = $region37
  $region36: #{dan_forward.1} parent=0 // pred_region
    _
  $region37: #{dan_forward.1} parent=0 // pred_fallthru
    _
  // Predicated region
  $region38: #{dan_forward.1} parent=0 // pred_check
    _
  $region39: #{dan_forward.1} parent=0 // pred_check_branch
    %45 = sbr.rel (0) target = $region41
  $region40: #{dan_forward.1} parent=0 // pred_region
    _
  $region41: #{dan_forward.1} parent=0 // pred_fallthru
    _
  // Predicated region
  $region42: #{dan_forward.1} parent=0 // pred_check
    _
  $region43: #{dan_forward.1} parent=0 // pred_check_branch
    %47 = sbr.rel (0) target = $region45
  $region44: #{dan_forward.1} parent=0 // pred_region
    _
  $region45: #{dan_forward.1} parent=0 // pred_fallthru
    _
  // Predicated region
  $region46: #{dan_forward.1} parent=0 // pred_check
    _
  $region47: #{dan_forward.1} parent=0 // pred_check_branch
    %49 = sbr.rel (0) target = $region49
  $region48: #{dan_forward.1} parent=0 // pred_region
    _
  $region49: #{dan_forward.1} parent=0 // pred_fallthru
    _
  // Predicated region
  $region50: #{dan_forward.1} parent=0 // pred_check
    _
  $region51: #{dan_forward.1} parent=0 // pred_check_branch
    %51 = sbr.rel (0) target = $region53
  $region52: #{dan_forward.1} parent=0 // pred_region
    _
  $region53: #{dan_forward.1} parent=0 // pred_fallthru
    _
  // Predicated region
  $region54: #{dan_forward.1} parent=0 // pred_check
    _
  $region55: #{dan_forward.1} parent=0 // pred_check_branch
    %53 = sbr.rel (0) target = $region57
  $region56: #{dan_forward.1} parent=0 // pred_region
    _
  $region57: #{dan_forward.1} parent=0 // pred_fallthru
    _
  // Predicated region
  $region58: #{dan_forward.1} parent=0 // pred_check
    _
  $region59: #{dan_forward.1} parent=0 // pred_check_branch
    %55 = sbr.rel (0) target = $region61
  $region60: #{dan_forward.1} parent=0 // pred_region
    _
  $region61: #{dan_forward.1} parent=0 // pred_fallthru
    _
  // Predicated region
  $region62: #{dan_forward.1} parent=0 // pred_check
    _
  $region63: #{dan_forward.1} parent=0 // pred_check_branch
    %57 = sbr.rel (0) target = $region65
  $region64: #{dan_forward.1} parent=0 // pred_region
    _
  $region65: #{dan_forward.1} parent=0 // pred_fallthru
    _
  // Predicated region
  $region66: #{dan_forward.1} parent=0 // pred_check
    _
  $region67: #{dan_forward.1} parent=0 // pred_check_branch
    %59 = sbr.rel (0) target = $region69
  $region68: #{dan_forward.1} parent=0 // pred_region
    _
  $region69: #{dan_forward.1} parent=0 // pred_fallthru
    _
  // Predicated region
  $region70: #{dan_forward.1} parent=0 // pred_check
    _
  $region71: #{dan_forward.1} parent=0 // pred_check_branch
    %61 = sbr.rel (0) target = $region73
  $region72: #{dan_forward.1} parent=0 // pred_region
    _
  $region73: #{dan_forward.1} parent=0 // pred_fallthru
    _
  // Predicated region
  $region74: #{dan_forward.1} parent=0 // pred_check
    _
  $region75: #{dan_forward.1} parent=0 // pred_check_branch
    %63 = sbr.rel (0) target = $region77
  $region76: #{dan_forward.1} parent=0 // pred_region
    _
  $region77: #{dan_forward.1} parent=0 // pred_fallthru
    _
  // Predicated region
  $region78: #{dan_forward.1} parent=0 // pred_check
    _
  $region79: #{dan_forward.1} parent=0 // pred_check_branch
    %65 = sbr.rel (0) target = $region81
  $region80: #{dan_forward.1} parent=0 // pred_region
    _
  $region81: #{dan_forward.1} parent=0 // pred_fallthru
    _
  // Predicated region
  $region82: #{dan_forward.1} parent=0 // pred_check
    _
  $region83: #{dan_forward.1} parent=0 // pred_check_branch
    %67 = sbr.rel (0) target = $region85
  $region84: #{dan_forward.1} parent=0 // pred_region
    _
  $region85: #{dan_forward.1} parent=0 // pred_fallthru
    _
  %v68 = vld [vmem:[%s0] sm:$0xff]
  %v69 = vld [vmem:[%s0 + $0x8] sm:$0xff]
  %v70 = vld [vmem:[%s0 + $0x10] sm:$0xff]
  %v71 = vld [vmem:[%s2] sm:$0xff]
  %v72 = vld [vmem:[%s2 + $0x8] sm:$0xff]
  %v73 = vld [vmem:[%s2 + $0x10] sm:$0xff]
  %v74 = vld [vmem:[%s2 + $0x18] sm:$0xff]
  %v75 = vld [vmem:[%s2 + $0x20] sm:$0xff]
  %v76 = vld [vmem:[%s2 + $0x28] sm:$0xff]
  %v77 = vld [vmem:[%s2 + $0x30] sm:$0xff]
  %v78 = vld [vmem:[%s2 + $0x38] sm:$0xff]
  %v79 = vld [vmem:[%s2 + $0x40] sm:$0xff]
  %v80 = vld [vmem:[%s2 + $0x48] sm:$0xff]
  %v81 = vld [vmem:[%s2 + $0x50] sm:$0xff]
  %v82 = vld [vmem:[%s2 + $0x58] sm:$0xff]
  %v83 = vld [vmem:[%s2 + $0x60] sm:$0xff]
  %v84 = vld [vmem:[%s2 + $0x68] sm:$0xff]
  %v85 = vld [vmem:[%s2 + $0x70] sm:$0xff]
  %v86 = vld [vmem:[%s2 + $0x78] sm:$0xff]
  %v87 = vld [vmem:[%s2 + $0x80] sm:$0xff]
  %v88 = vld [vmem:[%s2 + $0x88] sm:$0xff]
  %v89 = vld [vmem:[%s2 + $0x90] sm:$0xff]
  %v90 = vld [vmem:[%s2 + $0x98] sm:$0xff]
  %v91 = vld [vmem:[%s2 + $0xa0] sm:$0xff]
  %v92 = vld [vmem:[%s2 + $0xa8] sm:$0xff]
  %v93 = vld [vmem:[%s2 + $0xb0] sm:$0xff]
  %v94 = vld [vmem:[%s2 + $0xb8] sm:$0xff]
  %v95 = vld [vmem:[%s2 + $0xc0] sm:$0xff]
  %v96 = vld [vmem:[%s2 + $0xc8] sm:$0xff]
  %v97 = vld [vmem:[%s2 + $0xd0] sm:$0xff]
  %v98 = vld [vmem:[%s2 + $0xd8] sm:$0xff]
  %v99 = vld [vmem:[%s3] sm:$0x3]
  %v101 = vlaneseq
  %v102 = vshrl.u32 %v101, 7
  %v103 = vsub.s32 0, %v102
  %v104 = vrot.slane %v99, %v103
  %v105 = vlaneseq
  %v106 = vshrl.u32 %v105, 7
  %v107 = vsub.s32 1, %v106
  %v108 = vrot.slane %v99, %v107
  %vm111 = vcmask 916480
  %v113 = vsel %vm111, %v68, 0
  %v116 = vsel %vm111, %v69, 0
  %v119 = vsel %vm111, %v70, 0
  %121 = vmatprep.subr.mxu0 %v72
  %122 = vmatpush1.msra.mxu0 %v71
  %123 = vmatprep.subr.mxu0 %v74
  %124 = vmatpush1.msra.mxu0 %v73
  %125 = vmatprep.subr.mxu0 %v76
  %126 = vmatpush1.msra.mxu0 %v75
  %127 = vmatprep.subr.mxu0 %v78
  %128 = vmatpush1.msra.mxu0 %v77
  %129 = vmatprep.subr.mxu0 %v80
  %130 = vmatpush1.msra.mxu0 %v79
  %131 = vmatprep.subr.mxu0 %v82
  %132 = vmatpush1.msra.mxu0 %v81
  %133 = vmatprep.subr.mxu0 %v84
  %134 = vmatpush1.msra.mxu0 %v83
  %135 = vmatprep.subr.mxu0 %v86
  %136 = vmatpush1.msra.mxu0 %v85
  %137 = vmatprep.subr.mxu0 %v88
  %138 = vmatpush1.msra.mxu0 %v87
  %139 = vmatprep.subr.mxu0 %v90
  %140 = vmatpush1.msra.mxu0 %v89
  %141 = vmatprep.subr.mxu0 %v92
  %142 = vmatpush1.msra.mxu0 %v91
  %143 = vmatprep.subr.mxu0 %v94
  %144 = vmatpush1.msra.mxu0 %v93
  %145 = vmatprep.subr.mxu0 %v96
  %146 = vmatpush1.msra.mxu0 %v95
  %147 = vmatprep.subr.mxu0 %v98
  %148 = vmatpush1.msra.mxu0 %v97
  %149 = vmatprep.subr.mxu0 0.0
  %150 = vmatpush1.msra.mxu0 0.0
  %151 = vmatprep.subr.mxu0 0.0
  %152 = vmatpush1.msra.mxu0 0.0
  %153 = vmatprep.subr.mxu0 0.0
  %154 = vmatpush1.msra.mxu0 0.0
  %155 = vmatprep.subr.mxu0 0.0
  %156 = vmatpush1.msra.mxu0 0.0
  %157 = vmatprep.subr.mxu0 0.0
  %158 = vmatpush1.msra.mxu0 0.0
  %159 = vmatprep.subr.mxu0 0.0
  %160 = vmatpush1.msra.mxu0 0.0
  %161 = vmatprep.subr.mxu0 0.0
  %162 = vmatpush1.msra.mxu0 0.0
  %163 = vmatprep.subr.mxu0 0.0
  %164 = vmatpush1.msra.mxu0 0.0
  %165 = vmatprep.subr.mxu0 0.0
  %166 = vmatpush1.msra.mxu0 0.0
  %167 = vmatprep.subr.mxu0 0.0
  %168 = vmatpush1.msra.mxu0 0.0
  %169 = vmatprep.subr.mxu0 0.0
  %170 = vmatpush1.msra.mxu0 0.0
  %171 = vmatprep.subr.mxu0 0.0
  %172 = vmatpush1.msra.mxu0 0.0
  %173 = vmatprep.subr.mxu0 0.0
  %174 = vmatpush1.msra.mxu0 0.0
  %175 = vmatprep.subr.mxu0 0.0
  %176 = vmatpush1.msra.mxu0 0.0
  %177 = vmatprep.subr.mxu0 0.0
  %178 = vmatpush1.msra.mxu0 0.0
  %179 = vmatprep.subr.mxu0 0.0
  %180 = vmatpush1.msra.mxu0 0.0
  %181 = vmatprep.subr.mxu0 0.0
  %182 = vmatpush1.msra.mxu0 0.0
  %183 = vmatprep.subr.mxu0 0.0
  %184 = vmatpush1.msra.mxu0 0.0
  %185 = vmatprep.mubr.f32.mxu0 0.0
  %186 = vmatmul.mubr.f32.gmra.mrb[0].mxu0 %v113
  %v187 = vpop.f32.mrb[0].mxu0
  %v188 = vadd.f32 %v104, %v187
  %v189 = vpop.f32.mrb[0].mxu0
  %v190 = vadd.f32 %v108, %v189
  %191 = vmatprep.mubr.f32.mxu0 0.0
  %192 = vmatmul.mubr.f32.gmra.mrb[0].mxu0 %v116
  %v193 = vpop.f32.mrb[0].mxu0
  %v194 = vadd.f32 %v104, %v193
  %v195 = vpop.f32.mrb[0].mxu0
  %v196 = vadd.f32 %v108, %v195
  %197 = vmatprep.mubr.f32.mxu0 0.0
  %198 = vmatmul.mubr.f32.gmra.mrb[0].mxu0 %v119
  %v199 = vpop.f32.mrb[0].mxu0
  %v200 = vadd.f32 %v104, %v199
  %v201 = vpop.f32.mrb[0].mxu0
  %v202 = vadd.f32 %v108, %v201
  %203 = vdwg.mxu0
  %v204 = vmax.f32 %v188, 0.0
  %v205 = vmax.f32 %v190, 0.0
  %v206 = vmax.f32 %v194, 0.0
  %v207 = vmax.f32 %v196, 0.0
  %v208 = vmax.f32 %v200, 0.0
  %v209 = vmax.f32 %v202, 0.0
  %v216 = vcombine.low %v204, %v205
  %v217 = vcombine.high %v204, %v205
  %v219 = vunpack.c.l.s4 1983009808
  %v220 = vunpack.c.0.s8 %v219
  %v221 = vlaneseq
  %v222 = vshrl.u32 %v221, 7
  %v223 = vsub.s32 %v220, %v222
  %v224 = vrot.slane %v216, %v223
  %v226 = vunpack.c.l.s4 1983009808
  %v227 = vunpack.c.0.s8 %v226
  %v228 = vlaneseq
  %v229 = vshrl.u32 %v228, 7
  %v230 = vsub.s32 %v227, %v229
  %v231 = vrot.slane %v217, %v230
  %v232 = vcombine.high %v224, %v224
  %v233 = vcombine.high %v231, %v231
  %v234 = vcombine.low %v206, %v207
  %v235 = vcombine.high %v206, %v207
  %v237 = vunpack.c.l.s4 1983009808
  %v238 = vunpack.c.0.s8 %v237
  %v239 = vlaneseq
  %v240 = vshrl.u32 %v239, 7
  %v241 = vsub.s32 %v238, %v240
  %v242 = vrot.slane %v234, %v241
  %v244 = vunpack.c.l.s4 1983009808
  %v245 = vunpack.c.0.s8 %v244
  %v246 = vlaneseq
  %v247 = vshrl.u32 %v246, 7
  %v248 = vsub.s32 %v245, %v247
  %v249 = vrot.slane %v235, %v248
  %v250 = vcombine.high %v242, %v242
  %v251 = vcombine.high %v249, %v249
  %v252 = vcombine.low %v208, %v209
  %v253 = vcombine.high %v208, %v209
  %v255 = vunpack.c.l.s4 1983009808
  %v256 = vunpack.c.0.s8 %v255
  %v257 = vlaneseq
  %v258 = vshrl.u32 %v257, 7
  %v259 = vsub.s32 %v256, %v258
  %v260 = vrot.slane %v252, %v259
  %v262 = vunpack.c.l.s4 1983009808
  %v263 = vunpack.c.0.s8 %v262
  %v264 = vlaneseq
  %v265 = vshrl.u32 %v264, 7
  %v266 = vsub.s32 %v263, %v265
  %v267 = vrot.slane %v253, %v266
  %v268 = vcombine.high %v260, %v260
  %v269 = vcombine.high %v267, %v267
  %v270 = vcombine.low %v224, %v232
  %v272 = vunpack.c.l.s4 1983009808
  %v273 = vunpack.c.0.s8 %v272
  %v274 = vlaneseq
  %v275 = vshrl.u32 %v274, 7
  %v276 = vsub.s32 %v273, %v275
  %v277 = vrot.slane %v270, %v276
  %v279 = vunpack.c.l.s4 1983009808
  %v280 = vunpack.c.0.s8 %v279
  %v281 = vlaneseq
  %v282 = vshrl.u32 %v281, 7
  %v283 = vsub.s32 %v280, %v282
  %v284 = vrot.slane %v231, %v283
  %v285 = vcombine.low %v277, %v284
  %v286 = vcombine.high %v277, %v284
  %v287 = vcombine.low %v233, %v242
  %v289 = vunpack.c.l.s4 1983009808
  %v290 = vunpack.c.0.s8 %v289
  %v291 = vlaneseq
  %v292 = vshrl.u32 %v291, 7
  %v293 = vsub.s32 %v290, %v292
  %v294 = vrot.slane %v287, %v293
  %v296 = vunpack.c.l.s4 1983009808
  %v297 = vunpack.c.0.s8 %v296
  %v298 = vlaneseq
  %v299 = vshrl.u32 %v298, 7
  %v300 = vsub.s32 %v297, %v299
  %v301 = vrot.slane %v250, %v300
  %v302 = vcombine.low %v294, %v301
  %v303 = vcombine.high %v294, %v301
  %v304 = vcombine.low %v249, %v251
  %v306 = vunpack.c.l.s4 1983009808
  %v307 = vunpack.c.0.s8 %v306
  %v308 = vlaneseq
  %v309 = vshrl.u32 %v308, 7
  %v310 = vsub.s32 %v307, %v309
  %v311 = vrot.slane %v304, %v310
  %v313 = vunpack.c.l.s4 1983009808
  %v314 = vunpack.c.0.s8 %v313
  %v315 = vlaneseq
  %v316 = vshrl.u32 %v315, 7
  %v317 = vsub.s32 %v314, %v316
  %v318 = vrot.slane %v260, %v317
  %v319 = vcombine.low %v311, %v318
  %v320 = vcombine.high %v311, %v318
  %v321 = vcombine.low %v268, %v267
  %v323 = vunpack.c.l.s4 1983009808
  %v324 = vunpack.c.0.s8 %v323
  %v325 = vlaneseq
  %v326 = vshrl.u32 %v325, 7
  %v327 = vsub.s32 %v324, %v326
  %v328 = vrot.slane %v321, %v327
  %v330 = vunpack.c.l.s4 1983009808
  %v331 = vunpack.c.0.s8 %v330
  %v332 = vlaneseq
  %v333 = vshrl.u32 %v332, 7
  %v334 = vsub.s32 %v331, %v333
  %v335 = vrot.slane %v269, %v334
  %v336 = vcombine.low %v328, %v335
  %v337 = vcombine.high %v328, %v335
  %vm346 = vcmask 1045504
  %v347 = vsel %vm346, %v285, -inf
  %v348 = vrot.slane %v347, 4
  %v349 = vmax.f32 %v347, %v348
  %v350 = vrot.slane %v349, 2
  %v351 = vmax.f32 %v349, %v350
  %v352 = vrot.slane %v351, 1
  %v353 = vmax.f32 %v351, %v352
  %vm354 = vcmask 259072
  %v355 = vsel %vm354, %v286, -inf
  %v356 = vrot.slane %v355, 4
  %v357 = vmax.f32 %v355, %v356
  %v358 = vrot.slane %v357, 2
  %v359 = vmax.f32 %v357, %v358
  %v360 = vrot.slane %v359, 1
  %v361 = vmax.f32 %v359, %v360
  %v362 = vsel %vm346, %v302, -inf
  %v363 = vrot.slane %v362, 4
  %v364 = vmax.f32 %v362, %v363
  %v365 = vrot.slane %v364, 2
  %v366 = vmax.f32 %v364, %v365
  %v367 = vrot.slane %v366, 1
  %v368 = vmax.f32 %v366, %v367
  %v369 = vsel %vm354, %v303, -inf
  %v370 = vrot.slane %v369, 4
  %v371 = vmax.f32 %v369, %v370
  %v372 = vrot.slane %v371, 2
  %v373 = vmax.f32 %v371, %v372
  %v374 = vrot.slane %v373, 1
  %v375 = vmax.f32 %v373, %v374
  %v376 = vsel %vm346, %v319, -inf
  %v377 = vrot.slane %v376, 4
  %v378 = vmax.f32 %v376, %v377
  %v379 = vrot.slane %v378, 2
  %v380 = vmax.f32 %v378, %v379
  %v381 = vrot.slane %v380, 1
  %v382 = vmax.f32 %v380, %v381
  %v383 = vsel %vm354, %v320, -inf
  %v384 = vrot.slane %v383, 4
  %v385 = vmax.f32 %v383, %v384
  %v386 = vrot.slane %v385, 2
  %v387 = vmax.f32 %v385, %v386
  %v388 = vrot.slane %v387, 1
  %v389 = vmax.f32 %v387, %v388
  %v390 = vsel %vm346, %v336, -inf
  %v391 = vrot.slane %v390, 4
  %v392 = vmax.f32 %v390, %v391
  %v393 = vrot.slane %v392, 2
  %v394 = vmax.f32 %v392, %v393
  %v395 = vrot.slane %v394, 1
  %v396 = vmax.f32 %v394, %v395
  %v397 = vsel %vm354, %v337, -inf
  %v398 = vrot.slane %v397, 4
  %v399 = vmax.f32 %v397, %v398
  %v400 = vrot.slane %v399, 2
  %v401 = vmax.f32 %v399, %v400
  %v402 = vrot.slane %v401, 1
  %v403 = vmax.f32 %v401, %v402
  %v404 = vld [vmem:[%s4] sm:$0x3]
  %v405 = vld [vmem:[%s5] sm:$0x3]
  %vm414 = vcmask 1041409
  %v415 = vsel %vm414, %v368, %v353
  %vm416 = vcmask 1042434
  %v417 = vsel %vm416, %v382, %v415
  %vm418 = vcmask 1043459
  %v419 = vsel %vm418, %v396, %v417
  %v420 = vsel %vm414, %v375, %v361
  %v421 = vsel %vm416, %v389, %v420
  %v422 = vsel %vm418, %v403, %v421
  %vm425 = vcmask 1043456
  %v426 = vsel %vm425, %v419, 0.0
  %vm427 = vcmask 257024
  %v428 = vsel %vm427, %v422, 0.0
  %v429 = vadd.f32 %v426, %v428
  %430 = vadd.xlane.f32.xlu0 %v429
  %v431 = vpop.xlane.xlu0 %430
  %v432 = vrcp.pop 160.0
  %v433 = vmul.f32 %v431, %v432
  %v435 = vrot.slane %v433, 1
  %v436 = vrot.slane %v433, 2
  %v437 = vrot.slane %v433, 3
  %v442 = vsub.f32 %v353, %v433
  %v443 = vsub.f32 %v361, %v433
  %v444 = vsub.f32 %v368, %v435
  %v445 = vsub.f32 %v375, %v435
  %v446 = vsub.f32 %v382, %v436
  %v447 = vsub.f32 %v389, %v436
  %v448 = vsub.f32 %v396, %v437
  %v449 = vsub.f32 %v403, %v437
  %v450 = vmul.f32 %v442, %v442
  %v451 = vmul.f32 %v443, %v443
  %v452 = vmul.f32 %v444, %v444
  %v453 = vmul.f32 %v445, %v445
  %v454 = vmul.f32 %v446, %v446
  %v455 = vmul.f32 %v447, %v447
  %v456 = vmul.f32 %v448, %v448
  %v457 = vmul.f32 %v449, %v449
  %v466 = vrot.slane %v452, 7
  %v467 = vsel %vm414, %v466, %v450
  %v468 = vrot.slane %v454, 6
  %v469 = vsel %vm416, %v468, %v467
  %v470 = vrot.slane %v456, 5
  %v471 = vsel %vm418, %v470, %v469
  %v472 = vrot.slane %v453, 7
  %v473 = vsel %vm414, %v472, %v451
  %v474 = vrot.slane %v455, 6
  %v475 = vsel %vm416, %v474, %v473
  %v476 = vrot.slane %v457, 5
  %v477 = vsel %vm418, %v476, %v475
  %v480 = vsel %vm425, %v471, 0.0
  %v481 = vsel %vm427, %v477, 0.0
  %v482 = vadd.f32 %v480, %v481
  %483 = vadd.xlane.f32.xlu0 %v482
  %v484 = vpop.xlane.xlu0 %483
  %v485 = vmul.f32 %v484, %v432
  %v486 = vadd.f32 %v485, 1e-05
  %v487 = vrsqrt.pop %v486
  %v489 = vrot.slane %v487, 1
  %v490 = vrot.slane %v487, 2
  %v491 = vrot.slane %v487, 3
  %v496 = vmul.f32 %v442, %v487
  %v497 = vmul.f32 %v443, %v487
  %v498 = vmul.f32 %v444, %v489
  %v499 = vmul.f32 %v445, %v489
  %v500 = vmul.f32 %v446, %v490
  %v501 = vmul.f32 %v447, %v490
  %v502 = vmul.f32 %v448, %v491
  %v503 = vmul.f32 %v449, %v491
  %v505 = vlaneseq
  %v506 = vshrl.u32 %v505, 7
  %v507 = vsub.s32 0, %v506
  %v508 = vrot.slane %v404, %v507
  %v509 = vlaneseq
  %v510 = vshrl.u32 %v509, 7
  %v511 = vsub.s32 1, %v510
  %v512 = vrot.slane %v404, %v511
  %v515 = vmul.f32 %v496, %v508
  %v516 = vmul.f32 %v497, %v512
  %v517 = vmul.f32 %v498, %v508
  %v518 = vmul.f32 %v499, %v512
  %v519 = vmul.f32 %v500, %v508
  %v520 = vmul.f32 %v501, %v512
  %v521 = vmul.f32 %v502, %v508
  %v522 = vmul.f32 %v503, %v512
  %v524 = vlaneseq
  %v525 = vshrl.u32 %v524, 7
  %v526 = vsub.s32 0, %v525
  %v527 = vrot.slane %v405, %v526
  %v528 = vlaneseq
  %v529 = vshrl.u32 %v528, 7
  %v530 = vsub.s32 1, %v529
  %v531 = vrot.slane %v405, %v530
  %v534 = vadd.f32 %v515, %v527
  %v535 = vadd.f32 %v516, %v531
  %v536 = vadd.f32 %v517, %v527
  %v537 = vadd.f32 %v518, %v531
  %v538 = vadd.f32 %v519, %v527
  %v539 = vadd.f32 %v520, %v531
  %v540 = vadd.f32 %v521, %v527
  %v541 = vadd.f32 %v522, %v531
  %v542 = vld [vmem:[%s1] sm:$0xff]
  %v543 = vld [vmem:[%s1 + $0x8] sm:$0xff]
  %v544 = vld [vmem:[%s1 + $0x10] sm:$0xff]
  %v545 = vld [vmem:[%s1 + $0x18] sm:$0xff]
  %v546 = vld [vmem:[%s1 + $0x20] sm:$0xff]
  %v547 = vld [vmem:[%s1 + $0x28] sm:$0xff]
  %v548 = vld [vmem:[%s6] sm:$0xff]
  %v549 = vld [vmem:[%s6 + $0x8] sm:$0xff]
  %v550 = vld [vmem:[%s6 + $0x10] sm:$0xff]
  %v551 = vld [vmem:[%s6 + $0x18] sm:$0xff]
  %v552 = vld [vmem:[%s6 + $0x20] sm:$0xff]
  %v553 = vld [vmem:[%s6 + $0x28] sm:$0xff]
  %v554 = vld [vmem:[%s6 + $0x30] sm:$0xff]
  %v555 = vld [vmem:[%s6 + $0x38] sm:$0xff]
  %v556 = vld [vmem:[%s6 + $0x40] sm:$0xff]
  %v557 = vld [vmem:[%s6 + $0x48] sm:$0xff]
  %v558 = vld [vmem:[%s6 + $0x50] sm:$0xff]
  %v559 = vld [vmem:[%s6 + $0x58] sm:$0xff]
  %v560 = vld [vmem:[%s6 + $0x60] sm:$0xff]
  %v561 = vld [vmem:[%s6 + $0x68] sm:$0xff]
  %v562 = vld [vmem:[%s6 + $0x70] sm:$0xff]
  %v563 = vld [vmem:[%s6 + $0x78] sm:$0xff]
  %v564 = vld [vmem:[%s6 + $0x80] sm:$0xff]
  %v565 = vld [vmem:[%s6 + $0x88] sm:$0xff]
  %v566 = vld [vmem:[%s6 + $0x90] sm:$0xff]
  %v567 = vld [vmem:[%s6 + $0x98] sm:$0xff]
  %v568 = vld [vmem:[%s6 + $0xa0] sm:$0xff]
  %v569 = vld [vmem:[%s6 + $0xa8] sm:$0xff]
  %v570 = vld [vmem:[%s6 + $0xb0] sm:$0xff]
  %v571 = vld [vmem:[%s6 + $0xb8] sm:$0xff]
  %v572 = vld [vmem:[%s6 + $0xc0] sm:$0xff]
  %v573 = vld [vmem:[%s6 + $0xc8] sm:$0xff]
  %v574 = vld [vmem:[%s6 + $0xd0] sm:$0xff]
  %v575 = vld [vmem:[%s6 + $0xd8] sm:$0xff]
  %v576 = vld [vmem:[%s7] sm:$0x3]
  %v578 = vlaneseq
  %v579 = vshrl.u32 %v578, 7
  %v580 = vsub.s32 0, %v579
  %v581 = vrot.slane %v576, %v580
  %v582 = vlaneseq
  %v583 = vshrl.u32 %v582, 7
  %v584 = vsub.s32 1, %v583
  %v585 = vrot.slane %v576, %v584
  %v589 = vsel %vm111, %v542, 0
  %v592 = vsel %vm111, %v543, 0
  %v595 = vsel %vm111, %v544, 0
  %v598 = vsel %vm111, %v545, 0
  %v601 = vsel %vm111, %v546, 0
  %v604 = vsel %vm111, %v547, 0
  %606 = vmatprep.subr.mxu0 %v549
  %607 = vmatpush1.msra.mxu0 %v548
  %608 = vmatprep.subr.mxu0 %v551
  %609 = vmatpush1.msra.mxu0 %v550
  %610 = vmatprep.subr.mxu0 %v553
  %611 = vmatpush1.msra.mxu0 %v552
  %612 = vmatprep.subr.mxu0 %v555
  %613 = vmatpush1.msra.mxu0 %v554
  %614 = vmatprep.subr.mxu0 %v557
  %615 = vmatpush1.msra.mxu0 %v556
  %616 = vmatprep.subr.mxu0 %v559
  %617 = vmatpush1.msra.mxu0 %v558
  %618 = vmatprep.subr.mxu0 %v561
  %619 = vmatpush1.msra.mxu0 %v560
  %620 = vmatprep.subr.mxu0 %v563
  %621 = vmatpush1.msra.mxu0 %v562
  %622 = vmatprep.subr.mxu0 %v565
  %623 = vmatpush1.msra.mxu0 %v564
  %624 = vmatprep.subr.mxu0 %v567
  %625 = vmatpush1.msra.mxu0 %v566
  %626 = vmatprep.subr.mxu0 %v569
  %627 = vmatpush1.msra.mxu0 %v568
  %628 = vmatprep.subr.mxu0 %v571
  %629 = vmatpush1.msra.mxu0 %v570
  %630 = vmatprep.subr.mxu0 %v573
  %631 = vmatpush1.msra.mxu0 %v572
  %632 = vmatprep.subr.mxu0 %v575
  %633 = vmatpush1.msra.mxu0 %v574
  %634 = vmatprep.subr.mxu0 0.0
  %635 = vmatpush1.msra.mxu0 0.0
  %636 = vmatprep.subr.mxu0 0.0
  %637 = vmatpush1.msra.mxu0 0.0
  %638 = vmatprep.subr.mxu0 0.0
  %639 = vmatpush1.msra.mxu0 0.0
  %640 = vmatprep.subr.mxu0 0.0
  %641 = vmatpush1.msra.mxu0 0.0
  %642 = vmatprep.subr.mxu0 0.0
  %643 = vmatpush1.msra.mxu0 0.0
  %644 = vmatprep.subr.mxu0 0.0
  %645 = vmatpush1.msra.mxu0 0.0
  %646 = vmatprep.subr.mxu0 0.0
  %647 = vmatpush1.msra.mxu0 0.0
  %648 = vmatprep.subr.mxu0 0.0
  %649 = vmatpush1.msra.mxu0 0.0
  %650 = vmatprep.subr.mxu0 0.0
  %651 = vmatpush1.msra.mxu0 0.0
  %652 = vmatprep.subr.mxu0 0.0
  %653 = vmatpush1.msra.mxu0 0.0
  %654 = vmatprep.subr.mxu0 0.0
  %655 = vmatpush1.msra.mxu0 0.0
  %656 = vmatprep.subr.mxu0 0.0
  %657 = vmatpush1.msra.mxu0 0.0
  %658 = vmatprep.subr.mxu0 0.0
  %659 = vmatpush1.msra.mxu0 0.0
  %660 = vmatprep.subr.mxu0 0.0
  %661 = vmatpush1.msra.mxu0 0.0
  %662 = vmatprep.subr.mxu0 0.0
  %663 = vmatpush1.msra.mxu0 0.0
  %664 = vmatprep.subr.mxu0 0.0
  %665 = vmatpush1.msra.mxu0 0.0
  %666 = vmatprep.subr.mxu0 0.0
  %667 = vmatpush1.msra.mxu0 0.0
  %668 = vmatprep.subr.mxu0 0.0
  %669 = vmatpush1.msra.mxu0 0.0
  %670 = vmatprep.mubr.f32.mxu0 0.0
  %671 = vmatmul.mubr.f32.gmra.mrb[0].mxu0 %v589
  %v672 = vpop.f32.mrb[0].mxu0
  %v673 = vadd.f32 %v581, %v672
  %v674 = vpop.f32.mrb[0].mxu0
  %v675 = vadd.f32 %v585, %v674
  %676 = vmatprep.mubr.f32.mxu0 0.0
  %677 = vmatmul.mubr.f32.gmra.mrb[0].mxu0 %v592
  %v678 = vpop.f32.mrb[0].mxu0
  %v679 = vadd.f32 %v581, %v678
  %v680 = vpop.f32.mrb[0].mxu0
  %v681 = vadd.f32 %v585, %v680
  %682 = vmatprep.mubr.f32.mxu0 0.0
  %683 = vmatmul.mubr.f32.gmra.mrb[0].mxu0 %v595
  %v684 = vpop.f32.mrb[0].mxu0
  %v685 = vadd.f32 %v581, %v684
  %v686 = vpop.f32.mrb[0].mxu0
  %v687 = vadd.f32 %v585, %v686
  %688 = vmatprep.mubr.f32.mxu0 0.0
  %689 = vmatmul.mubr.f32.gmra.mrb[0].mxu0 %v598
  %v690 = vpop.f32.mrb[0].mxu0
  %v691 = vadd.f32 %v581, %v690
  %v692 = vpop.f32.mrb[0].mxu0
  %v693 = vadd.f32 %v585, %v692
  %694 = vmatprep.mubr.f32.mxu0 0.0
  %695 = vmatmul.mubr.f32.gmra.mrb[0].mxu0 %v601
  %v696 = vpop.f32.mrb[0].mxu0
  %v697 = vadd.f32 %v581, %v696
  %v698 = vpop.f32.mrb[0].mxu0
  %v699 = vadd.f32 %v585, %v698
  %700 = vmatprep.mubr.f32.mxu0 0.0
  %701 = vmatmul.mubr.f32.gmra.mrb[0].mxu0 %v604
  %v702 = vpop.f32.mrb[0].mxu0
  %v703 = vadd.f32 %v581, %v702
  %v704 = vpop.f32.mrb[0].mxu0
  %v705 = vadd.f32 %v585, %v704
  %706 = vdwg.mxu0
  %v707 = vmax.f32 %v673, 0.0
  %v708 = vmax.f32 %v675, 0.0
  %v709 = vmax.f32 %v679, 0.0
  %v710 = vmax.f32 %v681, 0.0
  %v711 = vmax.f32 %v685, 0.0
  %v712 = vmax.f32 %v687, 0.0
  %v713 = vmax.f32 %v691, 0.0
  %v714 = vmax.f32 %v693, 0.0
  %v715 = vmax.f32 %v697, 0.0
  %v716 = vmax.f32 %v699, 0.0
  %v717 = vmax.f32 %v703, 0.0
  %v718 = vmax.f32 %v705, 0.0
  %v731 = vcombine.low %v707, %v708
  %v732 = vcombine.high %v707, %v708
  %v734 = vunpack.c.l.s4 1983009808
  %v735 = vunpack.c.0.s8 %v734
  %v736 = vlaneseq
  %v737 = vshrl.u32 %v736, 7
  %v738 = vsub.s32 %v735, %v737
  %v739 = vrot.slane %v731, %v738
  %v741 = vunpack.c.l.s4 1983009808
  %v742 = vunpack.c.0.s8 %v741
  %v743 = vlaneseq
  %v744 = vshrl.u32 %v743, 7
  %v745 = vsub.s32 %v742, %v744
  %v746 = vrot.slane %v732, %v745
  %v747 = vcombine.high %v739, %v739
  %v748 = vcombine.high %v746, %v746
  %v749 = vcombine.low %v709, %v710
  %v750 = vcombine.high %v709, %v710
  %v752 = vunpack.c.l.s4 1983009808
  %v753 = vunpack.c.0.s8 %v752
  %v754 = vlaneseq
  %v755 = vshrl.u32 %v754, 7
  %v756 = vsub.s32 %v753, %v755
  %v757 = vrot.slane %v749, %v756
  %v759 = vunpack.c.l.s4 1983009808
  %v760 = vunpack.c.0.s8 %v759
  %v761 = vlaneseq
  %v762 = vshrl.u32 %v761, 7
  %v763 = vsub.s32 %v760, %v762
  %v764 = vrot.slane %v750, %v763
  %v765 = vcombine.high %v757, %v757
  %v766 = vcombine.high %v764, %v764
  %v767 = vcombine.low %v711, %v712
  %v768 = vcombine.high %v711, %v712
  %v770 = vunpack.c.l.s4 1983009808
  %v771 = vunpack.c.0.s8 %v770
  %v772 = vlaneseq
  %v773 = vshrl.u32 %v772, 7
  %v774 = vsub.s32 %v771, %v773
  %v775 = vrot.slane %v767, %v774
  %v777 = vunpack.c.l.s4 1983009808
  %v778 = vunpack.c.0.s8 %v777
  %v779 = vlaneseq
  %v780 = vshrl.u32 %v779, 7
  %v781 = vsub.s32 %v778, %v780
  %v782 = vrot.slane %v768, %v781
  %v783 = vcombine.high %v775, %v775
  %v784 = vcombine.high %v782, %v782
  %v785 = vcombine.low %v713, %v714
  %v786 = vcombine.high %v713, %v714
  %v788 = vunpack.c.l.s4 1983009808
  %v789 = vunpack.c.0.s8 %v788
  %v790 = vlaneseq
  %v791 = vshrl.u32 %v790, 7
  %v792 = vsub.s32 %v789, %v791
  %v793 = vrot.slane %v785, %v792
  %v795 = vunpack.c.l.s4 1983009808
  %v796 = vunpack.c.0.s8 %v795
  %v797 = vlaneseq
  %v798 = vshrl.u32 %v797, 7
  %v799 = vsub.s32 %v796, %v798
  %v800 = vrot.slane %v786, %v799
  %v801 = vcombine.high %v793, %v793
  %v802 = vcombine.high %v800, %v800
  %v803 = vcombine.low %v715, %v716
  %v804 = vcombine.high %v715, %v716
  %v806 = vunpack.c.l.s4 1983009808
  %v807 = vunpack.c.0.s8 %v806
  %v808 = vlaneseq
  %v809 = vshrl.u32 %v808, 7
  %v810 = vsub.s32 %v807, %v809
  %v811 = vrot.slane %v803, %v810
  %v813 = vunpack.c.l.s4 1983009808
  %v814 = vunpack.c.0.s8 %v813
  %v815 = vlaneseq
  %v816 = vshrl.u32 %v815, 7
  %v817 = vsub.s32 %v814, %v816
  %v818 = vrot.slane %v804, %v817
  %v819 = vcombine.high %v811, %v811
  %v820 = vcombine.high %v818, %v818
  %v821 = vcombine.low %v717, %v718
  %v822 = vcombine.high %v717, %v718
  %v824 = vunpack.c.l.s4 1983009808
  %v825 = vunpack.c.0.s8 %v824
  %v826 = vlaneseq
  %v827 = vshrl.u32 %v826, 7
  %v828 = vsub.s32 %v825, %v827
  %v829 = vrot.slane %v821, %v828
  %v831 = vunpack.c.l.s4 1983009808
  %v832 = vunpack.c.0.s8 %v831
  %v833 = vlaneseq
  %v834 = vshrl.u32 %v833, 7
  %v835 = vsub.s32 %v832, %v834
  %v836 = vrot.slane %v822, %v835
  %v837 = vcombine.high %v829, %v829
  %v838 = vcombine.high %v836, %v836
  %v839 = vcombine.low %v739, %v747
  %v841 = vunpack.c.l.s4 1983009808
  %v842 = vunpack.c.0.s8 %v841
  %v843 = vlaneseq
  %v844 = vshrl.u32 %v843, 7
  %v845 = vsub.s32 %v842, %v844
  %v846 = vrot.slane %v839, %v845
  %v848 = vunpack.c.l.s4 1983009808
  %v849 = vunpack.c.0.s8 %v848
  %v850 = vlaneseq
  %v851 = vshrl.u32 %v850, 7
  %v852 = vsub.s32 %v849, %v851
  %v853 = vrot.slane %v746, %v852
  %v854 = vcombine.low %v846, %v853
  %v855 = vcombine.high %v846, %v853
  %v856 = vcombine.low %v748, %v757
  %v858 = vunpack.c.l.s4 1983009808
  %v859 = vunpack.c.0.s8 %v858
  %v860 = vlaneseq
  %v861 = vshrl.u32 %v860, 7
  %v862 = vsub.s32 %v859, %v861
  %v863 = vrot.slane %v856, %v862
  %v865 = vunpack.c.l.s4 1983009808
  %v866 = vunpack.c.0.s8 %v865
  %v867 = vlaneseq
  %v868 = vshrl.u32 %v867, 7
  %v869 = vsub.s32 %v866, %v868
  %v870 = vrot.slane %v765, %v869
  %v871 = vcombine.low %v863, %v870
  %v872 = vcombine.high %v863, %v870
  %v873 = vcombine.low %v764, %v766
  %v875 = vunpack.c.l.s4 1983009808
  %v876 = vunpack.c.0.s8 %v875
  %v877 = vlaneseq
  %v878 = vshrl.u32 %v877, 7
  %v879 = vsub.s32 %v876, %v878
  %v880 = vrot.slane %v873, %v879
  %v882 = vunpack.c.l.s4 1983009808
  %v883 = vunpack.c.0.s8 %v882
  %v884 = vlaneseq
  %v885 = vshrl.u32 %v884, 7
  %v886 = vsub.s32 %v883, %v885
  %v887 = vrot.slane %v775, %v886
  %v888 = vcombine.low %v880, %v887
  %v889 = vcombine.high %v880, %v887
  %v890 = vcombine.low %v783, %v782
  %v892 = vunpack.c.l.s4 1983009808
  %v893 = vunpack.c.0.s8 %v892
  %v894 = vlaneseq
  %v895 = vshrl.u32 %v894, 7
  %v896 = vsub.s32 %v893, %v895
  %v897 = vrot.slane %v890, %v896
  %v899 = vunpack.c.l.s4 1983009808
  %v900 = vunpack.c.0.s8 %v899
  %v901 = vlaneseq
  %v902 = vshrl.u32 %v901, 7
  %v903 = vsub.s32 %v900, %v902
  %v904 = vrot.slane %v784, %v903
  %v905 = vcombine.low %v897, %v904
  %v906 = vcombine.high %v897, %v904
  %v907 = vcombine.low %v793, %v801
  %v909 = vunpack.c.l.s4 1983009808
  %v910 = vunpack.c.0.s8 %v909
  %v911 = vlaneseq
  %v912 = vshrl.u32 %v911, 7
  %v913 = vsub.s32 %v910, %v912
  %v914 = vrot.slane %v907, %v913
  %v916 = vunpack.c.l.s4 1983009808
  %v917 = vunpack.c.0.s8 %v916
  %v918 = vlaneseq
  %v919 = vshrl.u32 %v918, 7
  %v920 = vsub.s32 %v917, %v919
  %v921 = vrot.slane %v800, %v920
  %v922 = vcombine.low %v914, %v921
  %v923 = vcombine.high %v914, %v921
  %v924 = vcombine.low %v802, %v811
  %v926 = vunpack.c.l.s4 1983009808
  %v927 = vunpack.c.0.s8 %v926
  %v928 = vlaneseq
  %v929 = vshrl.u32 %v928, 7
  %v930 = vsub.s32 %v927, %v929
  %v931 = vrot.slane %v924, %v930
  %v933 = vunpack.c.l.s4 1983009808
  %v934 = vunpack.c.0.s8 %v933
  %v935 = vlaneseq
  %v936 = vshrl.u32 %v935, 7
  %v937 = vsub.s32 %v934, %v936
  %v938 = vrot.slane %v819, %v937
  %v939 = vcombine.low %v931, %v938
  %v940 = vcombine.high %v931, %v938
  %v941 = vcombine.low %v818, %v820
  %v943 = vunpack.c.l.s4 1983009808
  %v944 = vunpack.c.0.s8 %v943
  %v945 = vlaneseq
  %v946 = vshrl.u32 %v945, 7
  %v947 = vsub.s32 %v944, %v946
  %v948 = vrot.slane %v941, %v947
  %v950 = vunpack.c.l.s4 1983009808
  %v951 = vunpack.c.0.s8 %v950
  %v952 = vlaneseq
  %v953 = vshrl.u32 %v952, 7
  %v954 = vsub.s32 %v951, %v953
  %v955 = vrot.slane %v829, %v954
  %v956 = vcombine.low %v948, %v955
  %v957 = vcombine.high %v948, %v955
  %v958 = vcombine.low %v837, %v836
  %v960 = vunpack.c.l.s4 1983009808
  %v961 = vunpack.c.0.s8 %v960
  %v962 = vlaneseq
  %v963 = vshrl.u32 %v962, 7
  %v964 = vsub.s32 %v961, %v963
  %v965 = vrot.slane %v958, %v964
  %v967 = vunpack.c.l.s4 1983009808
  %v968 = vunpack.c.0.s8 %v967
  %v969 = vlaneseq
  %v970 = vshrl.u32 %v969, 7
  %v971 = vsub.s32 %v968, %v970
  %v972 = vrot.slane %v838, %v971
  %v973 = vcombine.low %v965, %v972
  %v974 = vcombine.high %v965, %v972
  %v991 = vsel %vm346, %v854, -inf
  %v992 = vrot.slane %v991, 4
  %v993 = vmax.f32 %v991, %v992
  %v994 = vrot.slane %v993, 2
  %v995 = vmax.f32 %v993, %v994
  %v996 = vrot.slane %v995, 1
  %v997 = vmax.f32 %v995, %v996
  %v998 = vsel %vm354, %v855, -inf
  %v999 = vrot.slane %v998, 4
  %v1000 = vmax.f32 %v998, %v999
  %v1001 = vrot.slane %v1000, 2
  %v1002 = vmax.f32 %v1000, %v1001
  %v1003 = vrot.slane %v1002, 1
  %v1004 = vmax.f32 %v1002, %v1003
  %v1005 = vsel %vm346, %v871, -inf
  %v1006 = vrot.slane %v1005, 4
  %v1007 = vmax.f32 %v1005, %v1006
  %v1008 = vrot.slane %v1007, 2
  %v1009 = vmax.f32 %v1007, %v1008
  %v1010 = vrot.slane %v1009, 1
  %v1011 = vmax.f32 %v1009, %v1010
  %v1012 = vsel %vm354, %v872, -inf
  %v1013 = vrot.slane %v1012, 4
  %v1014 = vmax.f32 %v1012, %v1013
  %v1015 = vrot.slane %v1014, 2
  %v1016 = vmax.f32 %v1014, %v1015
  %v1017 = vrot.slane %v1016, 1
  %v1018 = vmax.f32 %v1016, %v1017
  %v1019 = vsel %vm346, %v888, -inf
  %v1020 = vrot.slane %v1019, 4
  %v1021 = vmax.f32 %v1019, %v1020
  %v1022 = vrot.slane %v1021, 2
  %v1023 = vmax.f32 %v1021, %v1022
  %v1024 = vrot.slane %v1023, 1
  %v1025 = vmax.f32 %v1023, %v1024
  %v1026 = vsel %vm354, %v889, -inf
  %v1027 = vrot.slane %v1026, 4
  %v1028 = vmax.f32 %v1026, %v1027
  %v1029 = vrot.slane %v1028, 2
  %v1030 = vmax.f32 %v1028, %v1029
  %v1031 = vrot.slane %v1030, 1
  %v1032 = vmax.f32 %v1030, %v1031
  %v1033 = vsel %vm346, %v905, -inf
  %v1034 = vrot.slane %v1033, 4
  %v1035 = vmax.f32 %v1033, %v1034
  %v1036 = vrot.slane %v1035, 2
  %v1037 = vmax.f32 %v1035, %v1036
  %v1038 = vrot.slane %v1037, 1
  %v1039 = vmax.f32 %v1037, %v1038
  %v1040 = vsel %vm354, %v906, -inf
  %v1041 = vrot.slane %v1040, 4
  %v1042 = vmax.f32 %v1040, %v1041
  %v1043 = vrot.slane %v1042, 2
  %v1044 = vmax.f32 %v1042, %v1043
  %v1045 = vrot.slane %v1044, 1
  %v1046 = vmax.f32 %v1044, %v1045
  %v1047 = vsel %vm346, %v922, -inf
  %v1048 = vrot.slane %v1047, 4
  %v1049 = vmax.f32 %v1047, %v1048
  %v1050 = vrot.slane %v1049, 2
  %v1051 = vmax.f32 %v1049, %v1050
  %v1052 = vrot.slane %v1051, 1
  %v1053 = vmax.f32 %v1051, %v1052
  %v1054 = vsel %vm354, %v923, -inf
  %v1055 = vrot.slane %v1054, 4
  %v1056 = vmax.f32 %v1054, %v1055
  %v1057 = vrot.slane %v1056, 2
  %v1058 = vmax.f32 %v1056, %v1057
  %v1059 = vrot.slane %v1058, 1
  %v1060 = vmax.f32 %v1058, %v1059
  %v1061 = vsel %vm346, %v939, -inf
  %v1062 = vrot.slane %v1061, 4
  %v1063 = vmax.f32 %v1061, %v1062
  %v1064 = vrot.slane %v1063, 2
  %v1065 = vmax.f32 %v1063, %v1064
  %v1066 = vrot.slane %v1065, 1
  %v1067 = vmax.f32 %v1065, %v1066
  %v1068 = vsel %vm354, %v940, -inf
  %v1069 = vrot.slane %v1068, 4
  %v1070 = vmax.f32 %v1068, %v1069
  %v1071 = vrot.slane %v1070, 2
  %v1072 = vmax.f32 %v1070, %v1071
  %v1073 = vrot.slane %v1072, 1
  %v1074 = vmax.f32 %v1072, %v1073
  %v1075 = vsel %vm346, %v956, -inf
  %v1076 = vrot.slane %v1075, 4
  %v1077 = vmax.f32 %v1075, %v1076
  %v1078 = vrot.slane %v1077, 2
  %v1079 = vmax.f32 %v1077, %v1078
  %v1080 = vrot.slane %v1079, 1
  %v1081 = vmax.f32 %v1079, %v1080
  %v1082 = vsel %vm354, %v957, -inf
  %v1083 = vrot.slane %v1082, 4
  %v1084 = vmax.f32 %v1082, %v1083
  %v1085 = vrot.slane %v1084, 2
  %v1086 = vmax.f32 %v1084, %v1085
  %v1087 = vrot.slane %v1086, 1
  %v1088 = vmax.f32 %v1086, %v1087
  %v1089 = vsel %vm346, %v973, -inf
  %v1090 = vrot.slane %v1089, 4
  %v1091 = vmax.f32 %v1089, %v1090
  %v1092 = vrot.slane %v1091, 2
  %v1093 = vmax.f32 %v1091, %v1092
  %v1094 = vrot.slane %v1093, 1
  %v1095 = vmax.f32 %v1093, %v1094
  %v1096 = vsel %vm354, %v974, -inf
  %v1097 = vrot.slane %v1096, 4
  %v1098 = vmax.f32 %v1096, %v1097
  %v1099 = vrot.slane %v1098, 2
  %v1100 = vmax.f32 %v1098, %v1099
  %v1101 = vrot.slane %v1100, 1
  %v1102 = vmax.f32 %v1100, %v1101
  %v1103 = vld [vmem:[%s8] sm:$0x3]
  %v1104 = vld [vmem:[%s9] sm:$0x3]
  %v1121 = vsel %vm414, %v1011, %v997
  %v1122 = vsel %vm416, %v1025, %v1121
  %v1123 = vsel %vm418, %v1039, %v1122
  %vm1124 = vcmask 1044484
  %v1125 = vsel %vm1124, %v1053, %v1123
  %vm1126 = vcmask 1045509
  %v1127 = vsel %vm1126, %v1067, %v1125
  %vm1128 = vcmask 1046534
  %v1129 = vsel %vm1128, %v1081, %v1127
  %vm1130 = vcmask 1047559
  %v1131 = vsel %vm1130, %v1095, %v1129
  %v1132 = vsel %vm414, %v1018, %v1004
  %v1133 = vsel %vm416, %v1032, %v1132
  %v1134 = vsel %vm418, %v1046, %v1133
  %v1135 = vsel %vm1124, %v1060, %v1134
  %v1136 = vsel %vm1126, %v1074, %v1135
  %v1137 = vsel %vm1128, %v1088, %v1136
  %v1138 = vsel %vm1130, %v1102, %v1137
  %vm1141 = vcmask 261120
  %v1142 = vsel %vm1141, %v1138, 0.0
  %v1143 = vadd.f32 %v1131, %v1142
  %1144 = vadd.xlane.f32.xlu0 %v1143
  %v1145 = vpop.xlane.xlu0 %1144
  %v1146 = vmul.f32 %v1145, %v432
  %v1148 = vrot.slane %v1146, 1
  %v1149 = vrot.slane %v1146, 2
  %v1150 = vrot.slane %v1146, 3
  %v1151 = vrot.slane %v1146, 4
  %v1152 = vrot.slane %v1146, 5
  %v1153 = vrot.slane %v1146, 6
  %v1154 = vrot.slane %v1146, 7
  %v1163 = vsub.f32 %v997, %v1146
  %v1164 = vsub.f32 %v1004, %v1146
  %v1165 = vsub.f32 %v1011, %v1148
  %v1166 = vsub.f32 %v1018, %v1148
  %v1167 = vsub.f32 %v1025, %v1149
  %v1168 = vsub.f32 %v1032, %v1149
  %v1169 = vsub.f32 %v1039, %v1150
  %v1170 = vsub.f32 %v1046, %v1150
  %v1171 = vsub.f32 %v1053, %v1151
  %v1172 = vsub.f32 %v1060, %v1151
  %v1173 = vsub.f32 %v1067, %v1152
  %v1174 = vsub.f32 %v1074, %v1152
  %v1175 = vsub.f32 %v1081, %v1153
  %v1176 = vsub.f32 %v1088, %v1153
  %v1177 = vsub.f32 %v1095, %v1154
  %v1178 = vsub.f32 %v1102, %v1154
  %v1179 = vmul.f32 %v1163, %v1163
  %v1180 = vmul.f32 %v1164, %v1164
  %v1181 = vmul.f32 %v1165, %v1165
  %v1182 = vmul.f32 %v1166, %v1166
  %v1183 = vmul.f32 %v1167, %v1167
  %v1184 = vmul.f32 %v1168, %v1168
  %v1185 = vmul.f32 %v1169, %v1169
  %v1186 = vmul.f32 %v1170, %v1170
  %v1187 = vmul.f32 %v1171, %v1171
  %v1188 = vmul.f32 %v1172, %v1172
  %v1189 = vmul.f32 %v1173, %v1173
  %v1190 = vmul.f32 %v1174, %v1174
  %v1191 = vmul.f32 %v1175, %v1175
  %v1192 = vmul.f32 %v1176, %v1176
  %v1193 = vmul.f32 %v1177, %v1177
  %v1194 = vmul.f32 %v1178, %v1178
  %v1211 = vrot.slane %v1181, 7
  %v1212 = vsel %vm414, %v1211, %v1179
  %v1213 = vrot.slane %v1183, 6
  %v1214 = vsel %vm416, %v1213, %v1212
  %v1215 = vrot.slane %v1185, 5
  %v1216 = vsel %vm418, %v1215, %v1214
  %v1217 = vrot.slane %v1187, 4
  %v1218 = vsel %vm1124, %v1217, %v1216
  %v1219 = vrot.slane %v1189, 3
  %v1220 = vsel %vm1126, %v1219, %v1218
  %v1221 = vrot.slane %v1191, 2
  %v1222 = vsel %vm1128, %v1221, %v1220
  %v1223 = vrot.slane %v1193, 1
  %v1224 = vsel %vm1130, %v1223, %v1222
  %v1225 = vrot.slane %v1182, 7
  %v1226 = vsel %vm414, %v1225, %v1180
  %v1227 = vrot.slane %v1184, 6
  %v1228 = vsel %vm416, %v1227, %v1226
  %v1229 = vrot.slane %v1186, 5
  %v1230 = vsel %vm418, %v1229, %v1228
  %v1231 = vrot.slane %v1188, 4
  %v1232 = vsel %vm1124, %v1231, %v1230
  %v1233 = vrot.slane %v1190, 3
  %v1234 = vsel %vm1126, %v1233, %v1232
  %v1235 = vrot.slane %v1192, 2
  %v1236 = vsel %vm1128, %v1235, %v1234
  %v1237 = vrot.slane %v1194, 1
  %v1238 = vsel %vm1130, %v1237, %v1236
  %v1241 = vsel %vm1141, %v1238, 0.0
  %v1242 = vadd.f32 %v1224, %v1241
  %1243 = vadd.xlane.f32.xlu0 %v1242
  %v1244 = vpop.xlane.xlu0 %1243
  %v1245 = vmul.f32 %v1244, %v432
  %v1246 = vadd.f32 %v1245, 1e-05
  %v1247 = vrsqrt.pop %v1246
  %v1249 = vrot.slane %v1247, 1
  %v1250 = vrot.slane %v1247, 2
  %v1251 = vrot.slane %v1247, 3
  %v1252 = vrot.slane %v1247, 4
  %v1253 = vrot.slane %v1247, 5
  %v1254 = vrot.slane %v1247, 6
  %v1255 = vrot.slane %v1247, 7
  %v1264 = vmul.f32 %v1163, %v1247
  %v1265 = vmul.f32 %v1164, %v1247
  %v1266 = vmul.f32 %v1165, %v1249
  %v1267 = vmul.f32 %v1166, %v1249
  %v1268 = vmul.f32 %v1167, %v1250
  %v1269 = vmul.f32 %v1168, %v1250
  %v1270 = vmul.f32 %v1169, %v1251
  %v1271 = vmul.f32 %v1170, %v1251
  %v1272 = vmul.f32 %v1171, %v1252
  %v1273 = vmul.f32 %v1172, %v1252
  %v1274 = vmul.f32 %v1173, %v1253
  %v1275 = vmul.f32 %v1174, %v1253
  %v1276 = vmul.f32 %v1175, %v1254
  %v1277 = vmul.f32 %v1176, %v1254
  %v1278 = vmul.f32 %v1177, %v1255
  %v1279 = vmul.f32 %v1178, %v1255
  %v1281 = vlaneseq
  %v1282 = vshrl.u32 %v1281, 7
  %v1283 = vsub.s32 0, %v1282
  %v1284 = vrot.slane %v1103, %v1283
  %v1285 = vlaneseq
  %v1286 = vshrl.u32 %v1285, 7
  %v1287 = vsub.s32 1, %v1286
  %v1288 = vrot.slane %v1103, %v1287
  %v1291 = vmul.f32 %v1264, %v1284
  %v1292 = vmul.f32 %v1265, %v1288
  %v1293 = vmul.f32 %v1266, %v1284
  %v1294 = vmul.f32 %v1267, %v1288
  %v1295 = vmul.f32 %v1268, %v1284
  %v1296 = vmul.f32 %v1269, %v1288
  %v1297 = vmul.f32 %v1270, %v1284
  %v1298 = vmul.f32 %v1271, %v1288
  %v1299 = vmul.f32 %v1272, %v1284
  %v1300 = vmul.f32 %v1273, %v1288
  %v1301 = vmul.f32 %v1274, %v1284
  %v1302 = vmul.f32 %v1275, %v1288
  %v1303 = vmul.f32 %v1276, %v1284
  %v1304 = vmul.f32 %v1277, %v1288
  %v1305 = vmul.f32 %v1278, %v1284
  %v1306 = vmul.f32 %v1279, %v1288
  %v1308 = vlaneseq
  %v1309 = vshrl.u32 %v1308, 7
  %v1310 = vsub.s32 0, %v1309
  %v1311 = vrot.slane %v1104, %v1310
  %v1312 = vlaneseq
  %v1313 = vshrl.u32 %v1312, 7
  %v1314 = vsub.s32 1, %v1313
  %v1315 = vrot.slane %v1104, %v1314
  %v1318 = vadd.f32 %v1291, %v1311
  %v1319 = vadd.f32 %v1292, %v1315
  %v1320 = vadd.f32 %v1293, %v1311
  %v1321 = vadd.f32 %v1294, %v1315
  %v1322 = vadd.f32 %v1295, %v1311
  %v1323 = vadd.f32 %v1296, %v1315
  %v1324 = vadd.f32 %v1297, %v1311
  %v1325 = vadd.f32 %v1298, %v1315
  %v1326 = vadd.f32 %v1299, %v1311
  %v1327 = vadd.f32 %v1300, %v1315
  %v1328 = vadd.f32 %v1301, %v1311
  %v1329 = vadd.f32 %v1302, %v1315
  %v1330 = vadd.f32 %v1303, %v1311
  %v1331 = vadd.f32 %v1304, %v1315
  %v1332 = vadd.f32 %v1305, %v1311
  %v1333 = vadd.f32 %v1306, %v1315
  %v1334 = vld [vmem:[%s10] sm:$0x3]
  %v1335 = vld [vmem:[%s11] sm:$0x3]
  %v1352 = vrot.slane %v1320, 7
  %v1353 = vsel %vm414, %v1352, %v1318
  %v1354 = vrot.slane %v1322, 6
  %v1355 = vsel %vm416, %v1354, %v1353
  %v1356 = vrot.slane %v1324, 5
  %v1357 = vsel %vm418, %v1356, %v1355
  %v1358 = vrot.slane %v1326, 4
  %v1359 = vsel %vm1124, %v1358, %v1357
  %v1360 = vrot.slane %v1328, 3
  %v1361 = vsel %vm1126, %v1360, %v1359
  %v1362 = vrot.slane %v1330, 2
  %v1363 = vsel %vm1128, %v1362, %v1361
  %v1364 = vrot.slane %v1332, 1
  %v1365 = vsel %vm1130, %v1364, %v1363
  %v1366 = vrot.slane %v1321, 7
  %v1367 = vsel %vm414, %v1366, %v1319
  %v1368 = vrot.slane %v1323, 6
  %v1369 = vsel %vm416, %v1368, %v1367
  %v1370 = vrot.slane %v1325, 5
  %v1371 = vsel %vm418, %v1370, %v1369
  %v1372 = vrot.slane %v1327, 4
  %v1373 = vsel %vm1124, %v1372, %v1371
  %v1374 = vrot.slane %v1329, 3
  %v1375 = vsel %vm1126, %v1374, %v1373
  %v1376 = vrot.slane %v1331, 2
  %v1377 = vsel %vm1128, %v1376, %v1375
  %v1378 = vrot.slane %v1333, 1
  %v1379 = vsel %vm1130, %v1378, %v1377
  %v1382 = vsel %vm1141, %v1379, 0.0
  %v1383 = vadd.f32 %v1365, %v1382
  %1384 = vadd.xlane.f32.xlu0 %v1383
  %v1385 = vpop.xlane.xlu0 %1384
  %v1386 = vmul.f32 %v1385, %v432
  %v1388 = vrot.slane %v1386, 1
  %v1389 = vrot.slane %v1386, 2
  %v1390 = vrot.slane %v1386, 3
  %v1391 = vrot.slane %v1386, 4
  %v1392 = vrot.slane %v1386, 5
  %v1393 = vrot.slane %v1386, 6
  %v1394 = vrot.slane %v1386, 7
  %v1403 = vsub.f32 %v1318, %v1386
  %v1404 = vsub.f32 %v1319, %v1386
  %v1405 = vsub.f32 %v1320, %v1388
  %v1406 = vsub.f32 %v1321, %v1388
  %v1407 = vsub.f32 %v1322, %v1389
  %v1408 = vsub.f32 %v1323, %v1389
  %v1409 = vsub.f32 %v1324, %v1390
  %v1410 = vsub.f32 %v1325, %v1390
  %v1411 = vsub.f32 %v1326, %v1391
  %v1412 = vsub.f32 %v1327, %v1391
  %v1413 = vsub.f32 %v1328, %v1392
  %v1414 = vsub.f32 %v1329, %v1392
  %v1415 = vsub.f32 %v1330, %v1393
  %v1416 = vsub.f32 %v1331, %v1393
  %v1417 = vsub.f32 %v1332, %v1394
  %v1418 = vsub.f32 %v1333, %v1394
  %v1419 = vmul.f32 %v1403, %v1403
  %v1420 = vmul.f32 %v1404, %v1404
  %v1421 = vmul.f32 %v1405, %v1405
  %v1422 = vmul.f32 %v1406, %v1406
  %v1423 = vmul.f32 %v1407, %v1407
  %v1424 = vmul.f32 %v1408, %v1408
  %v1425 = vmul.f32 %v1409, %v1409
  %v1426 = vmul.f32 %v1410, %v1410
  %v1427 = vmul.f32 %v1411, %v1411
  %v1428 = vmul.f32 %v1412, %v1412
  %v1429 = vmul.f32 %v1413, %v1413
  %v1430 = vmul.f32 %v1414, %v1414
  %v1431 = vmul.f32 %v1415, %v1415
  %v1432 = vmul.f32 %v1416, %v1416
  %v1433 = vmul.f32 %v1417, %v1417
  %v1434 = vmul.f32 %v1418, %v1418
  %v1451 = vrot.slane %v1421, 7
  %v1452 = vsel %vm414, %v1451, %v1419
  %v1453 = vrot.slane %v1423, 6
  %v1454 = vsel %vm416, %v1453, %v1452
  %v1455 = vrot.slane %v1425, 5
  %v1456 = vsel %vm418, %v1455, %v1454
  %v1457 = vrot.slane %v1427, 4
  %v1458 = vsel %vm1124, %v1457, %v1456
  %v1459 = vrot.slane %v1429, 3
  %v1460 = vsel %vm1126, %v1459, %v1458
  %v1461 = vrot.slane %v1431, 2
  %v1462 = vsel %vm1128, %v1461, %v1460
  %v1463 = vrot.slane %v1433, 1
  %v1464 = vsel %vm1130, %v1463, %v1462
  %v1465 = vrot.slane %v1422, 7
  %v1466 = vsel %vm414, %v1465, %v1420
  %v1467 = vrot.slane %v1424, 6
  %v1468 = vsel %vm416, %v1467, %v1466
  %v1469 = vrot.slane %v1426, 5
  %v1470 = vsel %vm418, %v1469, %v1468
  %v1471 = vrot.slane %v1428, 4
  %v1472 = vsel %vm1124, %v1471, %v1470
  %v1473 = vrot.slane %v1430, 3
  %v1474 = vsel %vm1126, %v1473, %v1472
  %v1475 = vrot.slane %v1432, 2
  %v1476 = vsel %vm1128, %v1475, %v1474
  %v1477 = vrot.slane %v1434, 1
  %v1478 = vsel %vm1130, %v1477, %v1476
  %v1481 = vsel %vm1141, %v1478, 0.0
  %v1482 = vadd.f32 %v1464, %v1481
  %1483 = vadd.xlane.f32.xlu0 %v1482
  %v1484 = vpop.xlane.xlu0 %1483
  %v1485 = vmul.f32 %v1484, %v432
  %v1486 = vadd.f32 %v1485, 1e-05
  %v1487 = vrsqrt.pop %v1486
  %v1489 = vrot.slane %v1487, 1
  %v1490 = vrot.slane %v1487, 2
  %v1491 = vrot.slane %v1487, 3
  %v1492 = vrot.slane %v1487, 4
  %v1493 = vrot.slane %v1487, 5
  %v1494 = vrot.slane %v1487, 6
  %v1495 = vrot.slane %v1487, 7
  %v1504 = vmul.f32 %v1403, %v1487
  %v1505 = vmul.f32 %v1404, %v1487
  %v1506 = vmul.f32 %v1405, %v1489
  %v1507 = vmul.f32 %v1406, %v1489
  %v1508 = vmul.f32 %v1407, %v1490
  %v1509 = vmul.f32 %v1408, %v1490
  %v1510 = vmul.f32 %v1409, %v1491
  %v1511 = vmul.f32 %v1410, %v1491
  %v1512 = vmul.f32 %v1411, %v1492
  %v1513 = vmul.f32 %v1412, %v1492
  %v1514 = vmul.f32 %v1413, %v1493
  %v1515 = vmul.f32 %v1414, %v1493
  %v1516 = vmul.f32 %v1415, %v1494
  %v1517 = vmul.f32 %v1416, %v1494
  %v1518 = vmul.f32 %v1417, %v1495
  %v1519 = vmul.f32 %v1418, %v1495
  %v1521 = vlaneseq
  %v1522 = vshrl.u32 %v1521, 7
  %v1523 = vsub.s32 0, %v1522
  %v1524 = vrot.slane %v1334, %v1523
  %v1525 = vlaneseq
  %v1526 = vshrl.u32 %v1525, 7
  %v1527 = vsub.s32 1, %v1526
  %v1528 = vrot.slane %v1334, %v1527
  %v1531 = vmul.f32 %v1504, %v1524
  %v1532 = vmul.f32 %v1505, %v1528
  %v1533 = vmul.f32 %v1506, %v1524
  %v1534 = vmul.f32 %v1507, %v1528
  %v1535 = vmul.f32 %v1508, %v1524
  %v1536 = vmul.f32 %v1509, %v1528
  %v1537 = vmul.f32 %v1510, %v1524
  %v1538 = vmul.f32 %v1511, %v1528
  %v1539 = vmul.f32 %v1512, %v1524
  %v1540 = vmul.f32 %v1513, %v1528
  %v1541 = vmul.f32 %v1514, %v1524
  %v1542 = vmul.f32 %v1515, %v1528
  %v1543 = vmul.f32 %v1516, %v1524
  %v1544 = vmul.f32 %v1517, %v1528
  %v1545 = vmul.f32 %v1518, %v1524
  %v1546 = vmul.f32 %v1519, %v1528
  %v1548 = vlaneseq
  %v1549 = vshrl.u32 %v1548, 7
  %v1550 = vsub.s32 0, %v1549
  %v1551 = vrot.slane %v1335, %v1550
  %v1552 = vlaneseq
  %v1553 = vshrl.u32 %v1552, 7
  %v1554 = vsub.s32 1, %v1553
  %v1555 = vrot.slane %v1335, %v1554
  %v1558 = vadd.f32 %v1531, %v1551
  %v1559 = vadd.f32 %v1532, %v1555
  %v1560 = vadd.f32 %v1533, %v1551
  %v1561 = vadd.f32 %v1534, %v1555
  %v1562 = vadd.f32 %v1535, %v1551
  %v1563 = vadd.f32 %v1536, %v1555
  %v1564 = vadd.f32 %v1537, %v1551
  %v1565 = vadd.f32 %v1538, %v1555
  %v1566 = vadd.f32 %v1539, %v1551
  %v1567 = vadd.f32 %v1540, %v1555
  %v1568 = vadd.f32 %v1541, %v1551
  %v1569 = vadd.f32 %v1542, %v1555
  %v1570 = vadd.f32 %v1543, %v1551
  %v1571 = vadd.f32 %v1544, %v1555
  %v1572 = vadd.f32 %v1545, %v1551
  %v1573 = vadd.f32 %v1546, %v1555
  %v1574 = vld [vmem:[%s12] sm:$0xff]
  %v1575 = vld [vmem:[%s12 + $0x8] sm:$0xff]
  %v1576 = vld [vmem:[%s12 + $0x10] sm:$0xff]
  %v1577 = vld [vmem:[%s12 + $0x18] sm:$0xff]
  %v1578 = vld [vmem:[%s12 + $0x20] sm:$0xff]
  %v1579 = vld [vmem:[%s12 + $0x28] sm:$0xff]
  %v1580 = vld [vmem:[%s12 + $0x30] sm:$0xff]
  %v1581 = vld [vmem:[%s12 + $0x38] sm:$0xff]
  %v1582 = vld [vmem:[%s12 + $0x40] sm:$0xff]
  %v1583 = vld [vmem:[%s12 + $0x48] sm:$0xff]
  %v1584 = vld [vmem:[%s12 + $0x50] sm:$0xff]
  %v1585 = vld [vmem:[%s12 + $0x58] sm:$0xff]
  %v1586 = vld [vmem:[%s12 + $0x60] sm:$0xff]
  %v1587 = vld [vmem:[%s12 + $0x68] sm:$0xff]
  %v1588 = vld [vmem:[%s12 + $0x70] sm:$0xff]
  %v1589 = vld [vmem:[%s12 + $0x78] sm:$0xff]
  %v1590 = vld [vmem:[%s12 + $0x80] sm:$0xff]
  %v1591 = vld [vmem:[%s12 + $0x88] sm:$0xff]
  %v1592 = vld [vmem:[%s12 + $0x90] sm:$0xff]
  %v1593 = vld [vmem:[%s12 + $0x98] sm:$0xff]
  %v1602 = vrot.slane %v536, 7
  %v1603 = vsel %vm414, %v1602, %v534
  %v1604 = vrot.slane %v538, 6
  %v1605 = vsel %vm416, %v1604, %v1603
  %v1606 = vrot.slane %v540, 5
  %v1607 = vsel %vm418, %v1606, %v1605
  %v1608 = vrot.slane %v537, 7
  %v1609 = vsel %vm414, %v1608, %v535
  %v1610 = vrot.slane %v539, 6
  %v1611 = vsel %vm416, %v1610, %v1609
  %v1612 = vrot.slane %v541, 5
  %v1613 = vsel %vm418, %v1612, %v1611
  %v1615 = vsel %vm1141, %v1613, 0
  %1617 = vmatprep.subr.mxu0 0.0
  %1618 = vmatpush1.msra.mxu0 %v1574
  %1619 = vmatprep.subr.mxu0 0.0
  %1620 = vmatpush1.msra.mxu0 %v1575
  %1621 = vmatprep.subr.mxu0 0.0
  %1622 = vmatpush1.msra.mxu0 %v1576
  %1623 = vmatprep.subr.mxu0 0.0
  %1624 = vmatpush1.msra.mxu0 %v1577
  %1625 = vmatprep.subr.mxu0 0.0
  %1626 = vmatpush1.msra.mxu0 %v1578
  %1627 = vmatprep.subr.mxu0 0.0
  %1628 = vmatpush1.msra.mxu0 %v1579
  %1629 = vmatprep.subr.mxu0 0.0
  %1630 = vmatpush1.msra.mxu0 %v1580
  %1631 = vmatprep.subr.mxu0 0.0
  %1632 = vmatpush1.msra.mxu0 %v1581
  %1633 = vmatprep.subr.mxu0 0.0
  %1634 = vmatpush1.msra.mxu0 %v1582
  %1635 = vmatprep.subr.mxu0 0.0
  %1636 = vmatpush1.msra.mxu0 %v1583
  %1637 = vmatprep.subr.mxu0 0.0
  %1638 = vmatpush1.msra.mxu0 %v1584
  %1639 = vmatprep.subr.mxu0 0.0
  %1640 = vmatpush1.msra.mxu0 %v1585
  %1641 = vmatprep.subr.mxu0 0.0
  %1642 = vmatpush1.msra.mxu0 %v1586
  %1643 = vmatprep.subr.mxu0 0.0
  %1644 = vmatpush1.msra.mxu0 %v1587
  %1645 = vmatprep.subr.mxu0 0.0
  %1646 = vmatpush1.msra.mxu0 %v1588
  %1647 = vmatprep.subr.mxu0 0.0
  %1648 = vmatpush1.msra.mxu0 %v1589
  %1649 = vmatprep.subr.mxu0 0.0
  %1650 = vmatpush1.msra.mxu0 %v1590
  %1651 = vmatprep.subr.mxu0 0.0
  %1652 = vmatpush1.msra.mxu0 %v1591
  %1653 = vmatprep.subr.mxu0 0.0
  %1654 = vmatpush1.msra.mxu0 %v1592
  %1655 = vmatprep.subr.mxu0 0.0
  %1656 = vmatpush1.msra.mxu0 %v1593
  %1657 = vmatprep.subr.mxu0 0.0
  %1658 = vmatpush1.msra.mxu0 0.0
  %1659 = vmatprep.subr.mxu0 0.0
  %1660 = vmatpush1.msra.mxu0 0.0
  %1661 = vmatprep.subr.mxu0 0.0
  %1662 = vmatpush1.msra.mxu0 0.0
  %1663 = vmatprep.subr.mxu0 0.0
  %1664 = vmatpush1.msra.mxu0 0.0
  %1665 = vmatprep.subr.mxu0 0.0
  %1666 = vmatpush1.msra.mxu0 0.0
  %1667 = vmatprep.subr.mxu0 0.0
  %1668 = vmatpush1.msra.mxu0 0.0
  %1669 = vmatprep.subr.mxu0 0.0
  %1670 = vmatpush1.msra.mxu0 0.0
  %1671 = vmatprep.subr.mxu0 0.0
  %1672 = vmatpush1.msra.mxu0 0.0
  %1673 = vmatprep.subr.mxu0 0.0
  %1674 = vmatpush1.msra.mxu0 0.0
  %1675 = vmatprep.subr.mxu0 0.0
  %1676 = vmatpush1.msra.mxu0 0.0
  %1677 = vmatprep.subr.mxu0 0.0
  %1678 = vmatpush1.msra.mxu0 0.0
  %1679 = vmatprep.subr.mxu0 0.0
  %1680 = vmatpush1.msra.mxu0 0.0
  %1681 = vmatprep.mubr.f32.mxu0 %v1615
  %1682 = vmatmul.mubr.f32.gmra.mrb[0].mxu0 %v1607
  %v1683 = vpop.f32.mrb[0].mxu0
  %v1684 = vadd.f32 0.0, %v1683
  %v1685 = vpop.f32.mrb[0].mxu0
  %1686 = vdwg.mxu0
  %v1689 = vunpack.c.l.s4 1983009808
  %v1690 = vunpack.c.0.s8 %v1689
  %v1691 = vlaneseq
  %v1692 = vshrl.u32 %v1691, 7
  %v1693 = vsub.s32 %v1690, %v1692
  %v1694 = vrot.slane %v1684, %v1693
  %v1695 = vcombine.high %v1694, %v1694
  %v1696 = vld [vmem:[%s13] sm:$0xff]
  %v1697 = vld [vmem:[%s13 + $0x8] sm:$0xff]
  %v1698 = vld [vmem:[%s13 + $0x10] sm:$0xff]
  %v1699 = vld [vmem:[%s13 + $0x18] sm:$0xff]
  %v1700 = vld [vmem:[%s13 + $0x20] sm:$0xff]
  %v1701 = vld [vmem:[%s13 + $0x28] sm:$0xff]
  %v1702 = vld [vmem:[%s13 + $0x30] sm:$0xff]
  %v1703 = vld [vmem:[%s13 + $0x38] sm:$0xff]
  %v1704 = vld [vmem:[%s13 + $0x40] sm:$0xff]
  %v1705 = vld [vmem:[%s13 + $0x48] sm:$0xff]
  %v1706 = vld [vmem:[%s13 + $0x50] sm:$0xff]
  %v1707 = vld [vmem:[%s13 + $0x58] sm:$0xff]
  %v1708 = vld [vmem:[%s13 + $0x60] sm:$0xff]
  %v1709 = vld [vmem:[%s13 + $0x68] sm:$0xff]
  %v1710 = vld [vmem:[%s13 + $0x70] sm:$0xff]
  %v1711 = vld [vmem:[%s13 + $0x78] sm:$0xff]
  %v1712 = vld [vmem:[%s13 + $0x80] sm:$0xff]
  %v1713 = vld [vmem:[%s13 + $0x88] sm:$0xff]
  %v1714 = vld [vmem:[%s13 + $0x90] sm:$0xff]
  %v1715 = vld [vmem:[%s13 + $0x98] sm:$0xff]
  %v1732 = vrot.slane %v1560, 7
  %v1733 = vsel %vm414, %v1732, %v1558
  %v1734 = vrot.slane %v1562, 6
  %v1735 = vsel %vm416, %v1734, %v1733
  %v1736 = vrot.slane %v1564, 5
  %v1737 = vsel %vm418, %v1736, %v1735
  %v1738 = vrot.slane %v1566, 4
  %v1739 = vsel %vm1124, %v1738, %v1737
  %v1740 = vrot.slane %v1568, 3
  %v1741 = vsel %vm1126, %v1740, %v1739
  %v1742 = vrot.slane %v1570, 2
  %v1743 = vsel %vm1128, %v1742, %v1741
  %v1744 = vrot.slane %v1572, 1
  %v1745 = vsel %vm1130, %v1744, %v1743
  %v1746 = vrot.slane %v1561, 7
  %v1747 = vsel %vm414, %v1746, %v1559
  %v1748 = vrot.slane %v1563, 6
  %v1749 = vsel %vm416, %v1748, %v1747
  %v1750 = vrot.slane %v1565, 5
  %v1751 = vsel %vm418, %v1750, %v1749
  %v1752 = vrot.slane %v1567, 4
  %v1753 = vsel %vm1124, %v1752, %v1751
  %v1754 = vrot.slane %v1569, 3
  %v1755 = vsel %vm1126, %v1754, %v1753
  %v1756 = vrot.slane %v1571, 2
  %v1757 = vsel %vm1128, %v1756, %v1755
  %v1758 = vrot.slane %v1573, 1
  %v1759 = vsel %vm1130, %v1758, %v1757
  %v1761 = vsel %vm1141, %v1759, 0
  %1763 = vmatprep.subr.mxu0 0.0
  %1764 = vmatpush1.msra.mxu0 %v1696
  %1765 = vmatprep.subr.mxu0 0.0
  %1766 = vmatpush1.msra.mxu0 %v1697
  %1767 = vmatprep.subr.mxu0 0.0
  %1768 = vmatpush1.msra.mxu0 %v1698
  %1769 = vmatprep.subr.mxu0 0.0
  %1770 = vmatpush1.msra.mxu0 %v1699
  %1771 = vmatprep.subr.mxu0 0.0
  %1772 = vmatpush1.msra.mxu0 %v1700
  %1773 = vmatprep.subr.mxu0 0.0
  %1774 = vmatpush1.msra.mxu0 %v1701
  %1775 = vmatprep.subr.mxu0 0.0
  %1776 = vmatpush1.msra.mxu0 %v1702
  %1777 = vmatprep.subr.mxu0 0.0
  %1778 = vmatpush1.msra.mxu0 %v1703
  %1779 = vmatprep.subr.mxu0 0.0
  %1780 = vmatpush1.msra.mxu0 %v1704
  %1781 = vmatprep.subr.mxu0 0.0
  %1782 = vmatpush1.msra.mxu0 %v1705
  %1783 = vmatprep.subr.mxu0 0.0
  %1784 = vmatpush1.msra.mxu0 %v1706
  %1785 = vmatprep.subr.mxu0 0.0
  %1786 = vmatpush1.msra.mxu0 %v1707
  %1787 = vmatprep.subr.mxu0 0.0
  %1788 = vmatpush1.msra.mxu0 %v1708
  %1789 = vmatprep.subr.mxu0 0.0
  %1790 = vmatpush1.msra.mxu0 %v1709
  %1791 = vmatprep.subr.mxu0 0.0
  %1792 = vmatpush1.msra.mxu0 %v1710
  %1793 = vmatprep.subr.mxu0 0.0
  %1794 = vmatpush1.msra.mxu0 %v1711
  %1795 = vmatprep.subr.mxu0 0.0
  %1796 = vmatpush1.msra.mxu0 %v1712
  %1797 = vmatprep.subr.mxu0 0.0
  %1798 = vmatpush1.msra.mxu0 %v1713
  %1799 = vmatprep.subr.mxu0 0.0
  %1800 = vmatpush1.msra.mxu0 %v1714
  %1801 = vmatprep.subr.mxu0 0.0
  %1802 = vmatpush1.msra.mxu0 %v1715
  %1803 = vmatprep.subr.mxu0 0.0
  %1804 = vmatpush1.msra.mxu0 0.0
  %1805 = vmatprep.subr.mxu0 0.0
  %1806 = vmatpush1.msra.mxu0 0.0
  %1807 = vmatprep.subr.mxu0 0.0
  %1808 = vmatpush1.msra.mxu0 0.0
  %1809 = vmatprep.subr.mxu0 0.0
  %1810 = vmatpush1.msra.mxu0 0.0
  %1811 = vmatprep.subr.mxu0 0.0
  %1812 = vmatpush1.msra.mxu0 0.0
  %1813 = vmatprep.subr.mxu0 0.0
  %1814 = vmatpush1.msra.mxu0 0.0
  %1815 = vmatprep.subr.mxu0 0.0
  %1816 = vmatpush1.msra.mxu0 0.0
  %1817 = vmatprep.subr.mxu0 0.0
  %1818 = vmatpush1.msra.mxu0 0.0
  %1819 = vmatprep.subr.mxu0 0.0
  %1820 = vmatpush1.msra.mxu0 0.0
  %1821 = vmatprep.subr.mxu0 0.0
  %1822 = vmatpush1.msra.mxu0 0.0
  %1823 = vmatprep.subr.mxu0 0.0
  %1824 = vmatpush1.msra.mxu0 0.0
  %1825 = vmatprep.subr.mxu0 0.0
  %1826 = vmatpush1.msra.mxu0 0.0
  %1827 = vmatprep.mubr.f32.mxu0 %v1761
  %1828 = vmatmul.mubr.f32.gmra.mrb[0].mxu0 %v1745
  %v1829 = vpop.f32.mrb[0].mxu0
  %v1830 = vadd.f32 0.0, %v1829
  %v1831 = vpop.f32.mrb[0].mxu0
  %1832 = vdwg.mxu0
  %v1834 = vcombine.high %v1830, %v1830
  %v1836 = vld [vmem:[%s14] sm:$0x1]
  %v1837 = vld [vmem:[%s15] sm:$0x1]
  %v1838 = vld [vmem:[%s16] sm:$0xff]
  %v1839 = vld [vmem:[%s16 + $0x8] sm:$0xff]
  %v1840 = vld [vmem:[%s16 + $0x10] sm:$0xff]
  %v1841 = vld [vmem:[%s16 + $0x18] sm:$0xff]
  %v1842 = vld [vmem:[%s16 + $0x20] sm:$0xff]
  %v1843 = vld [vmem:[%s16 + $0x28] sm:$0xff]
  %v1844 = vld [vmem:[%s16 + $0x30] sm:$0xff]
  %v1845 = vld [vmem:[%s16 + $0x38] sm:$0xff]
  %v1846 = vld [vmem:[%s16 + $0x40] sm:$0xff]
  %v1847 = vld [vmem:[%s16 + $0x48] sm:$0xff]
  %v1848 = vld [vmem:[%s16 + $0x50] sm:$0xff]
  %v1849 = vld [vmem:[%s16 + $0x58] sm:$0xff]
  %v1850 = vld [vmem:[%s16 + $0x60] sm:$0xff]
  %v1851 = vld [vmem:[%s16 + $0x68] sm:$0xff]
  %v1852 = vld [vmem:[%s16 + $0x70] sm:$0xff]
  %v1853 = vld [vmem:[%s16 + $0x78] sm:$0xff]
  %v1854 = vld [vmem:[%s16 + $0x80] sm:$0xff]
  %v1855 = vld [vmem:[%s16 + $0x88] sm:$0xff]
  %v1856 = vld [vmem:[%s16 + $0x90] sm:$0xff]
  %v1857 = vld [vmem:[%s16 + $0x98] sm:$0xff]
  %v1858 = vld [vmem:[%s16 + $0xa0] sm:$0xff]
  %v1859 = vld [vmem:[%s16 + $0xa8] sm:$0xff]
  %v1860 = vld [vmem:[%s16 + $0xb0] sm:$0xff]
  %v1861 = vld [vmem:[%s16 + $0xb8] sm:$0xff]
  %v1862 = vld [vmem:[%s16 + $0xc0] sm:$0xff]
  %v1863 = vld [vmem:[%s16 + $0xc8] sm:$0xff]
  %v1864 = vld [vmem:[%s16 + $0xd0] sm:$0xff]
  %v1865 = vld [vmem:[%s16 + $0xd8] sm:$0xff]
  %v1866 = vld [vmem:[%s16 + $0xe0] sm:$0xff]
  %v1867 = vld [vmem:[%s16 + $0xe8] sm:$0xff]
  %v1868 = vld [vmem:[%s16 + $0xf0] sm:$0xff]
  %v1869 = vld [vmem:[%s16 + $0xf8] sm:$0xff]
  %v1870 = vld [vmem:[%s16 + $0x100] sm:$0xff]
  %v1871 = vld [vmem:[%s16 + $0x108] sm:$0xff]
  %v1872 = vld [vmem:[%s16 + $0x110] sm:$0xff]
  %v1873 = vld [vmem:[%s16 + $0x118] sm:$0xff]
  %v1874 = vld [vmem:[%s16 + $0x120] sm:$0xff]
  %v1875 = vld [vmem:[%s16 + $0x128] sm:$0xff]
  %v1876 = vld [vmem:[%s16 + $0x130] sm:$0xff]
  %v1877 = vld [vmem:[%s16 + $0x138] sm:$0xff]
  %v1878 = vld [vmem:[%s18] sm:$0x3]
  %v1880 = vlaneseq
  %v1881 = vshrl.u32 %v1880, 7
  %v1882 = vsub.s32 0, %v1881
  %v1883 = vrot.slane %v1878, %v1882
  %v1884 = vlaneseq
  %v1885 = vshrl.u32 %v1884, 7
  %v1886 = vsub.s32 1, %v1885
  %v1887 = vrot.slane %v1878, %v1886
  %1890 = vmatprep.subr.mxu0 %v1839
  %1891 = vmatpush1.msra.mxu0 %v1838
  %1892 = vmatprep.subr.mxu0 %v1841
  %1893 = vmatpush1.msra.mxu0 %v1840
  %1894 = vmatprep.subr.mxu0 %v1843
  %1895 = vmatpush1.msra.mxu0 %v1842
  %1896 = vmatprep.subr.mxu0 %v1845
  %1897 = vmatpush1.msra.mxu0 %v1844
  %1898 = vmatprep.subr.mxu0 %v1847
  %1899 = vmatpush1.msra.mxu0 %v1846
  %1900 = vmatprep.subr.mxu0 %v1849
  %1901 = vmatpush1.msra.mxu0 %v1848
  %1902 = vmatprep.subr.mxu0 %v1851
  %1903 = vmatpush1.msra.mxu0 %v1850
  %1904 = vmatprep.subr.mxu0 %v1853
  %1905 = vmatpush1.msra.mxu0 %v1852
  %1906 = vmatprep.subr.mxu0 %v1855
  %1907 = vmatpush1.msra.mxu0 %v1854
  %1908 = vmatprep.subr.mxu0 %v1857
  %1909 = vmatpush1.msra.mxu0 %v1856
  %1910 = vmatprep.subr.mxu0 %v1859
  %1911 = vmatpush1.msra.mxu0 %v1858
  %1912 = vmatprep.subr.mxu0 %v1861
  %1913 = vmatpush1.msra.mxu0 %v1860
  %1914 = vmatprep.subr.mxu0 %v1863
  %1915 = vmatpush1.msra.mxu0 %v1862
  %1916 = vmatprep.subr.mxu0 %v1865
  %1917 = vmatpush1.msra.mxu0 %v1864
  %1918 = vmatprep.subr.mxu0 %v1867
  %1919 = vmatpush1.msra.mxu0 %v1866
  %1920 = vmatprep.subr.mxu0 %v1869
  %1921 = vmatpush1.msra.mxu0 %v1868
  %1922 = vmatprep.subr.mxu0 %v1871
  %1923 = vmatpush1.msra.mxu0 %v1870
  %1924 = vmatprep.subr.mxu0 %v1873
  %1925 = vmatpush1.msra.mxu0 %v1872
  %1926 = vmatprep.subr.mxu0 %v1875
  %1927 = vmatpush1.msra.mxu0 %v1874
  %1928 = vmatprep.subr.mxu0 %v1877
  %1929 = vmatpush1.msra.mxu0 %v1876
  %1930 = vmatprep.subr.mxu0 0.0
  %1931 = vmatpush1.msra.mxu0 0.0
  %1932 = vmatprep.subr.mxu0 0.0
  %1933 = vmatpush1.msra.mxu0 0.0
  %1934 = vmatprep.subr.mxu0 0.0
  %1935 = vmatpush1.msra.mxu0 0.0
  %1936 = vmatprep.subr.mxu0 0.0
  %1937 = vmatpush1.msra.mxu0 0.0
  %1938 = vmatprep.subr.mxu0 0.0
  %1939 = vmatpush1.msra.mxu0 0.0
  %1940 = vmatprep.subr.mxu0 0.0
  %1941 = vmatpush1.msra.mxu0 0.0
  %1942 = vmatprep.subr.mxu0 0.0
  %1943 = vmatpush1.msra.mxu0 0.0
  %1944 = vmatprep.subr.mxu0 0.0
  %1945 = vmatpush1.msra.mxu0 0.0
  %1946 = vmatprep.subr.mxu0 0.0
  %1947 = vmatpush1.msra.mxu0 0.0
  %1948 = vmatprep.subr.mxu0 0.0
  %1949 = vmatpush1.msra.mxu0 0.0
  %1950 = vmatprep.subr.mxu0 0.0
  %1951 = vmatpush1.msra.mxu0 0.0
  %1952 = vmatprep.subr.mxu0 0.0
  %1953 = vmatpush1.msra.mxu0 0.0
  %1954 = vmatprep.mubr.f32.mxu0 %v1761
  %1955 = vmatmul.mubr.f32.gmra.mrb[0].mxu0 %v1745
  %v1956 = vpop.f32.mrb[0].mxu0
  %v1957 = vadd.f32 %v1883, %v1956
  %v1958 = vpop.f32.mrb[0].mxu0
  %v1959 = vadd.f32 %v1887, %v1958
  %1960 = vdwg.mxu0
  %v1963 = vcombine.low %v1957, %v1959
  %v1964 = vcombine.high %v1957, %v1959
  %v1967 = vld [vmem:[%s17] sm:$0xff]
  %v1968 = vld [vmem:[%s17 + $0x8] sm:$0xff]
  %v1969 = vld [vmem:[%s17 + $0x10] sm:$0xff]
  %v1970 = vld [vmem:[%s17 + $0x18] sm:$0xff]
  %v1971 = vld [vmem:[%s17 + $0x20] sm:$0xff]
  %v1972 = vld [vmem:[%s17 + $0x28] sm:$0xff]
  %v1973 = vld [vmem:[%s17 + $0x30] sm:$0xff]
  %v1974 = vld [vmem:[%s17 + $0x38] sm:$0xff]
  %v1975 = vld [vmem:[%s17 + $0x40] sm:$0xff]
  %v1976 = vld [vmem:[%s17 + $0x48] sm:$0xff]
  %v1977 = vld [vmem:[%s17 + $0x50] sm:$0xff]
  %v1978 = vld [vmem:[%s17 + $0x58] sm:$0xff]
  %v1979 = vld [vmem:[%s17 + $0x60] sm:$0xff]
  %v1980 = vld [vmem:[%s17 + $0x68] sm:$0xff]
  %v1981 = vld [vmem:[%s17 + $0x70] sm:$0xff]
  %v1982 = vld [vmem:[%s17 + $0x78] sm:$0xff]
  %v1983 = vld [vmem:[%s17 + $0x80] sm:$0xff]
  %v1984 = vld [vmem:[%s17 + $0x88] sm:$0xff]
  %v1985 = vld [vmem:[%s17 + $0x90] sm:$0xff]
  %v1986 = vld [vmem:[%s17 + $0x98] sm:$0xff]
  %v1987 = vld [vmem:[%s17 + $0xa0] sm:$0xff]
  %v1988 = vld [vmem:[%s17 + $0xa8] sm:$0xff]
  %v1989 = vld [vmem:[%s17 + $0xb0] sm:$0xff]
  %v1990 = vld [vmem:[%s17 + $0xb8] sm:$0xff]
  %v1991 = vld [vmem:[%s17 + $0xc0] sm:$0xff]
  %v1992 = vld [vmem:[%s17 + $0xc8] sm:$0xff]
  %v1993 = vld [vmem:[%s17 + $0xd0] sm:$0xff]
  %v1994 = vld [vmem:[%s17 + $0xd8] sm:$0xff]
  %v1995 = vld [vmem:[%s17 + $0xe0] sm:$0xff]
  %v1996 = vld [vmem:[%s17 + $0xe8] sm:$0xff]
  %v1997 = vld [vmem:[%s17 + $0xf0] sm:$0xff]
  %v1998 = vld [vmem:[%s17 + $0xf8] sm:$0xff]
  %v1999 = vld [vmem:[%s17 + $0x100] sm:$0xff]
  %v2000 = vld [vmem:[%s17 + $0x108] sm:$0xff]
  %v2001 = vld [vmem:[%s17 + $0x110] sm:$0xff]
  %v2002 = vld [vmem:[%s17 + $0x118] sm:$0xff]
  %v2003 = vld [vmem:[%s17 + $0x120] sm:$0xff]
  %v2004 = vld [vmem:[%s17 + $0x128] sm:$0xff]
  %v2005 = vld [vmem:[%s17 + $0x130] sm:$0xff]
  %v2006 = vld [vmem:[%s17 + $0x138] sm:$0xff]
  %v2008 = vsel %vm1141, 0.0, 0
  %2010 = vmatprep.subr.mxu0 %v1968
  %2011 = vmatpush1.msra.mxu0 %v1967
  %2012 = vmatprep.subr.mxu0 %v1970
  %2013 = vmatpush1.msra.mxu0 %v1969
  %2014 = vmatprep.subr.mxu0 %v1972
  %2015 = vmatpush1.msra.mxu0 %v1971
  %2016 = vmatprep.subr.mxu0 %v1974
  %2017 = vmatpush1.msra.mxu0 %v1973
  %2018 = vmatprep.subr.mxu0 %v1976
  %2019 = vmatpush1.msra.mxu0 %v1975
  %2020 = vmatprep.subr.mxu0 %v1978
  %2021 = vmatpush1.msra.mxu0 %v1977
  %2022 = vmatprep.subr.mxu0 %v1980
  %2023 = vmatpush1.msra.mxu0 %v1979
  %2024 = vmatprep.subr.mxu0 %v1982
  %2025 = vmatpush1.msra.mxu0 %v1981
  %2026 = vmatprep.subr.mxu0 %v1984
  %2027 = vmatpush1.msra.mxu0 %v1983
  %2028 = vmatprep.subr.mxu0 %v1986
  %2029 = vmatpush1.msra.mxu0 %v1985
  %2030 = vmatprep.subr.mxu0 %v1988
  %2031 = vmatpush1.msra.mxu0 %v1987
  %2032 = vmatprep.subr.mxu0 %v1990
  %2033 = vmatpush1.msra.mxu0 %v1989
  %2034 = vmatprep.subr.mxu0 %v1992
  %2035 = vmatpush1.msra.mxu0 %v1991
  %2036 = vmatprep.subr.mxu0 %v1994
  %2037 = vmatpush1.msra.mxu0 %v1993
  %2038 = vmatprep.subr.mxu0 %v1996
  %2039 = vmatpush1.msra.mxu0 %v1995
  %2040 = vmatprep.subr.mxu0 %v1998
  %2041 = vmatpush1.msra.mxu0 %v1997
  %2042 = vmatprep.subr.mxu0 %v2000
  %2043 = vmatpush1.msra.mxu0 %v1999
  %2044 = vmatprep.subr.mxu0 %v2002
  %2045 = vmatpush1.msra.mxu0 %v2001
  %2046 = vmatprep.subr.mxu0 %v2004
  %2047 = vmatpush1.msra.mxu0 %v2003
  %2048 = vmatprep.subr.mxu0 %v2006
  %2049 = vmatpush1.msra.mxu0 %v2005
  %2050 = vmatprep.subr.mxu0 0.0
  %2051 = vmatpush1.msra.mxu0 0.0
  %2052 = vmatprep.subr.mxu0 0.0
  %2053 = vmatpush1.msra.mxu0 0.0
  %2054 = vmatprep.subr.mxu0 0.0
  %2055 = vmatpush1.msra.mxu0 0.0
  %2056 = vmatprep.subr.mxu0 0.0
  %2057 = vmatpush1.msra.mxu0 0.0
  %2058 = vmatprep.subr.mxu0 0.0
  %2059 = vmatpush1.msra.mxu0 0.0
  %2060 = vmatprep.subr.mxu0 0.0
  %2061 = vmatpush1.msra.mxu0 0.0
  %2062 = vmatprep.subr.mxu0 0.0
  %2063 = vmatpush1.msra.mxu0 0.0
  %2064 = vmatprep.subr.mxu0 0.0
  %2065 = vmatpush1.msra.mxu0 0.0
  %2066 = vmatprep.subr.mxu0 0.0
  %2067 = vmatpush1.msra.mxu0 0.0
  %2068 = vmatprep.subr.mxu0 0.0
  %2069 = vmatpush1.msra.mxu0 0.0
  %2070 = vmatprep.subr.mxu0 0.0
  %2071 = vmatpush1.msra.mxu0 0.0
  %2072 = vmatprep.subr.mxu0 0.0
  %2073 = vmatpush1.msra.mxu0 0.0
  %2074 = vmatprep.mubr.f32.mxu0 %v2008
  %2075 = vmatmul.mubr.f32.gmra.mrb[0].mxu0 0.0
  %v2076 = vpop.f32.mrb[0].mxu0
  %v2077 = vadd.f32 0.0, %v2076
  %v2078 = vpop.f32.mrb[0].mxu0
  %v2079 = vadd.f32 0.0, %v2078
  %2080 = vdwg.mxu0
  %v2083 = vcombine.low %v2077, %v2079
  %v2084 = vrot.slane %v2083, 1
  %v2087 = vadd.f32 %v1963, %v2083
  %v2088 = vadd.f32 %v1964, %v2084
  %v2089 = vtanh.pop %v2087
  %v2090 = vtanh.pop %v2088
  %v2093 = vlaneseq
  %v2094 = vshrl.u32 %v2093, 7
  %v2095 = vsub.s32 0, %v2094
  %v2096 = vrot.slane %v2089, %v2095
  %v2097 = vlaneseq
  %v2098 = vshrl.u32 %v2097, 7
  %v2099 = vsub.s32 4, %v2098
  %v2100 = vrot.slane %v2089, %v2099
  %v2101 = vlaneseq
  %v2102 = vshrl.u32 %v2101, 7
  %v2103 = vsub.s32 0, %v2102
  %v2104 = vrot.slane %v2090, %v2103
  %v2105 = vlaneseq
  %v2106 = vshrl.u32 %v2105, 7
  %v2107 = vsub.s32 4, %v2106
  %v2108 = vrot.slane %v2090, %v2107
  %v2109 = vsel %vm414, %v2104, %v2096
  %v2110 = vsel %vm414, %v2108, %v2100
  %v2112 = vsel %vm1141, %v2110, 0
  %2114 = vmatprep.subr.mxu0 %v1968
  %2115 = vmatpush1.msra.mxu0 %v1967
  %2116 = vmatprep.subr.mxu0 %v1970
  %2117 = vmatpush1.msra.mxu0 %v1969
  %2118 = vmatprep.subr.mxu0 %v1972
  %2119 = vmatpush1.msra.mxu0 %v1971
  %2120 = vmatprep.subr.mxu0 %v1974
  %2121 = vmatpush1.msra.mxu0 %v1973
  %2122 = vmatprep.subr.mxu0 %v1976
  %2123 = vmatpush1.msra.mxu0 %v1975
  %2124 = vmatprep.subr.mxu0 %v1978
  %2125 = vmatpush1.msra.mxu0 %v1977
  %2126 = vmatprep.subr.mxu0 %v1980
  %2127 = vmatpush1.msra.mxu0 %v1979
  %2128 = vmatprep.subr.mxu0 %v1982
  %2129 = vmatpush1.msra.mxu0 %v1981
  %2130 = vmatprep.subr.mxu0 %v1984
  %2131 = vmatpush1.msra.mxu0 %v1983
  %2132 = vmatprep.subr.mxu0 %v1986
  %2133 = vmatpush1.msra.mxu0 %v1985
  %2134 = vmatprep.subr.mxu0 %v1988
  %2135 = vmatpush1.msra.mxu0 %v1987
  %2136 = vmatprep.subr.mxu0 %v1990
  %2137 = vmatpush1.msra.mxu0 %v1989
  %2138 = vmatprep.subr.mxu0 %v1992
  %2139 = vmatpush1.msra.mxu0 %v1991
  %2140 = vmatprep.subr.mxu0 %v1994
  %2141 = vmatpush1.msra.mxu0 %v1993
  %2142 = vmatprep.subr.mxu0 %v1996
  %2143 = vmatpush1.msra.mxu0 %v1995
  %2144 = vmatprep.subr.mxu0 %v1998
  %2145 = vmatpush1.msra.mxu0 %v1997
  %2146 = vmatprep.subr.mxu0 %v2000
  %2147 = vmatpush1.msra.mxu0 %v1999
  %2148 = vmatprep.subr.mxu0 %v2002
  %2149 = vmatpush1.msra.mxu0 %v2001
  %2150 = vmatprep.subr.mxu0 %v2004
  %2151 = vmatpush1.msra.mxu0 %v2003
  %2152 = vmatprep.subr.mxu0 %v2006
  %2153 = vmatpush1.msra.mxu0 %v2005
  %2154 = vmatprep.subr.mxu0 0.0
  %2155 = vmatpush1.msra.mxu0 0.0
  %2156 = vmatprep.subr.mxu0 0.0
  %2157 = vmatpush1.msra.mxu0 0.0
  %2158 = vmatprep.subr.mxu0 0.0
  %2159 = vmatpush1.msra.mxu0 0.0
  %2160 = vmatprep.subr.mxu0 0.0
  %2161 = vmatpush1.msra.mxu0 0.0
  %2162 = vmatprep.subr.mxu0 0.0
  %2163 = vmatpush1.msra.mxu0 0.0
  %2164 = vmatprep.subr.mxu0 0.0
  %2165 = vmatpush1.msra.mxu0 0.0
  %2166 = vmatprep.subr.mxu0 0.0
  %2167 = vmatpush1.msra.mxu0 0.0
  %2168 = vmatprep.subr.mxu0 0.0
  %2169 = vmatpush1.msra.mxu0 0.0
  %2170 = vmatprep.subr.mxu0 0.0
  %2171 = vmatpush1.msra.mxu0 0.0
  %2172 = vmatprep.subr.mxu0 0.0
  %2173 = vmatpush1.msra.mxu0 0.0
  %2174 = vmatprep.subr.mxu0 0.0
  %2175 = vmatpush1.msra.mxu0 0.0
  %2176 = vmatprep.subr.mxu0 0.0
  %2177 = vmatpush1.msra.mxu0 0.0
  %2178 = vmatprep.mubr.f32.mxu0 %v2112
  %2179 = vmatmul.mubr.f32.gmra.mrb[0].mxu0 %v2109
  %v2180 = vpop.f32.mrb[0].mxu0
  %v2181 = vadd.f32 0.0, %v2180
  %v2182 = vpop.f32.mrb[0].mxu0
  %v2183 = vadd.f32 0.0, %v2182
  %2184 = vdwg.mxu0
  %v2187 = vcombine.low %v2181, %v2183
  %v2188 = vrot.slane %v2187, 7
  %v2191 = vadd.f32 %v1963, %v2188
  %v2192 = vadd.f32 %v1964, %v2187
  %v2193 = vtanh.pop %v2191
  %v2194 = vtanh.pop %v2192
  %v2197 = vlaneseq
  %v2198 = vshrl.u32 %v2197, 7
  %v2199 = vsub.s32 1, %v2198
  %v2200 = vrot.slane %v2193, %v2199
  %v2201 = vlaneseq
  %v2202 = vshrl.u32 %v2201, 7
  %v2203 = vsub.s32 5, %v2202
  %v2204 = vrot.slane %v2193, %v2203
  %v2205 = vlaneseq
  %v2206 = vshrl.u32 %v2205, 7
  %v2207 = vsub.s32 1, %v2206
  %v2208 = vrot.slane %v2194, %v2207
  %v2209 = vlaneseq
  %v2210 = vshrl.u32 %v2209, 7
  %v2211 = vsub.s32 5, %v2210
  %v2212 = vrot.slane %v2194, %v2211
  %v2213 = vsel %vm414, %v2208, %v2200
  %v2214 = vsel %vm414, %v2212, %v2204
  %v2216 = vsel %vm1141, %v2214, 0
  %2218 = vmatprep.subr.mxu0 %v1968
  %2219 = vmatpush1.msra.mxu0 %v1967
  %2220 = vmatprep.subr.mxu0 %v1970
  %2221 = vmatpush1.msra.mxu0 %v1969
  %2222 = vmatprep.subr.mxu0 %v1972
  %2223 = vmatpush1.msra.mxu0 %v1971
  %2224 = vmatprep.subr.mxu0 %v1974
  %2225 = vmatpush1.msra.mxu0 %v1973
  %2226 = vmatprep.subr.mxu0 %v1976
  %2227 = vmatpush1.msra.mxu0 %v1975
  %2228 = vmatprep.subr.mxu0 %v1978
  %2229 = vmatpush1.msra.mxu0 %v1977
  %2230 = vmatprep.subr.mxu0 %v1980
  %2231 = vmatpush1.msra.mxu0 %v1979
  %2232 = vmatprep.subr.mxu0 %v1982
  %2233 = vmatpush1.msra.mxu0 %v1981
  %2234 = vmatprep.subr.mxu0 %v1984
  %2235 = vmatpush1.msra.mxu0 %v1983
  %2236 = vmatprep.subr.mxu0 %v1986
  %2237 = vmatpush1.msra.mxu0 %v1985
  %2238 = vmatprep.subr.mxu0 %v1988
  %2239 = vmatpush1.msra.mxu0 %v1987
  %2240 = vmatprep.subr.mxu0 %v1990
  %2241 = vmatpush1.msra.mxu0 %v1989
  %2242 = vmatprep.subr.mxu0 %v1992
  %2243 = vmatpush1.msra.mxu0 %v1991
  %2244 = vmatprep.subr.mxu0 %v1994
  %2245 = vmatpush1.msra.mxu0 %v1993
  %2246 = vmatprep.subr.mxu0 %v1996
  %2247 = vmatpush1.msra.mxu0 %v1995
  %2248 = vmatprep.subr.mxu0 %v1998
  %2249 = vmatpush1.msra.mxu0 %v1997
  %2250 = vmatprep.subr.mxu0 %v2000
  %2251 = vmatpush1.msra.mxu0 %v1999
  %2252 = vmatprep.subr.mxu0 %v2002
  %2253 = vmatpush1.msra.mxu0 %v2001
  %2254 = vmatprep.subr.mxu0 %v2004
  %2255 = vmatpush1.msra.mxu0 %v2003
  %2256 = vmatprep.subr.mxu0 %v2006
  %2257 = vmatpush1.msra.mxu0 %v2005
  %2258 = vmatprep.subr.mxu0 0.0
  %2259 = vmatpush1.msra.mxu0 0.0
  %2260 = vmatprep.subr.mxu0 0.0
  %2261 = vmatpush1.msra.mxu0 0.0
  %2262 = vmatprep.subr.mxu0 0.0
  %2263 = vmatpush1.msra.mxu0 0.0
  %2264 = vmatprep.subr.mxu0 0.0
  %2265 = vmatpush1.msra.mxu0 0.0
  %2266 = vmatprep.subr.mxu0 0.0
  %2267 = vmatpush1.msra.mxu0 0.0
  %2268 = vmatprep.subr.mxu0 0.0
  %2269 = vmatpush1.msra.mxu0 0.0
  %2270 = vmatprep.subr.mxu0 0.0
  %2271 = vmatpush1.msra.mxu0 0.0
  %2272 = vmatprep.subr.mxu0 0.0
  %2273 = vmatpush1.msra.mxu0 0.0
  %2274 = vmatprep.subr.mxu0 0.0
  %2275 = vmatpush1.msra.mxu0 0.0
  %2276 = vmatprep.subr.mxu0 0.0
  %2277 = vmatpush1.msra.mxu0 0.0
  %2278 = vmatprep.subr.mxu0 0.0
  %2279 = vmatpush1.msra.mxu0 0.0
  %2280 = vmatprep.subr.mxu0 0.0
  %2281 = vmatpush1.msra.mxu0 0.0
  %2282 = vmatprep.mubr.f32.mxu0 %v2216
  %2283 = vmatmul.mubr.f32.gmra.mrb[0].mxu0 %v2213
  %v2284 = vpop.f32.mrb[0].mxu0
  %v2285 = vadd.f32 0.0, %v2284
  %v2286 = vpop.f32.mrb[0].mxu0
  %v2287 = vadd.f32 0.0, %v2286
  %2288 = vdwg.mxu0
  %v2291 = vcombine.low %v2285, %v2287
  %v2292 = vrot.slane %v2291, 6
  %v2293 = vrot.slane %v2291, 7
  %v2296 = vadd.f32 %v1963, %v2292
  %v2297 = vadd.f32 %v1964, %v2293
  %v2298 = vtanh.pop %v2296
  %v2299 = vtanh.pop %v2297
  %v2302 = vlaneseq
  %v2303 = vshrl.u32 %v2302, 7
  %v2304 = vsub.s32 2, %v2303
  %v2305 = vrot.slane %v2298, %v2304
  %v2306 = vlaneseq
  %v2307 = vshrl.u32 %v2306, 7
  %v2308 = vsub.s32 6, %v2307
  %v2309 = vrot.slane %v2298, %v2308
  %v2310 = vlaneseq
  %v2311 = vshrl.u32 %v2310, 7
  %v2312 = vsub.s32 2, %v2311
  %v2313 = vrot.slane %v2299, %v2312
  %v2314 = vlaneseq
  %v2315 = vshrl.u32 %v2314, 7
  %v2316 = vsub.s32 6, %v2315
  %v2317 = vrot.slane %v2299, %v2316
  %v2318 = vsel %vm414, %v2313, %v2305
  %v2319 = vsel %vm414, %v2317, %v2309
  %v2321 = vsel %vm1141, %v2319, 0
  %2323 = vmatprep.subr.mxu0 %v1968
  %2324 = vmatpush1.msra.mxu0 %v1967
  %2325 = vmatprep.subr.mxu0 %v1970
  %2326 = vmatpush1.msra.mxu0 %v1969
  %2327 = vmatprep.subr.mxu0 %v1972
  %2328 = vmatpush1.msra.mxu0 %v1971
  %2329 = vmatprep.subr.mxu0 %v1974
  %2330 = vmatpush1.msra.mxu0 %v1973
  %2331 = vmatprep.subr.mxu0 %v1976
  %2332 = vmatpush1.msra.mxu0 %v1975
  %2333 = vmatprep.subr.mxu0 %v1978
  %2334 = vmatpush1.msra.mxu0 %v1977
  %2335 = vmatprep.subr.mxu0 %v1980
  %2336 = vmatpush1.msra.mxu0 %v1979
  %2337 = vmatprep.subr.mxu0 %v1982
  %2338 = vmatpush1.msra.mxu0 %v1981
  %2339 = vmatprep.subr.mxu0 %v1984
  %2340 = vmatpush1.msra.mxu0 %v1983
  %2341 = vmatprep.subr.mxu0 %v1986
  %2342 = vmatpush1.msra.mxu0 %v1985
  %2343 = vmatprep.subr.mxu0 %v1988
  %2344 = vmatpush1.msra.mxu0 %v1987
  %2345 = vmatprep.subr.mxu0 %v1990
  %2346 = vmatpush1.msra.mxu0 %v1989
  %2347 = vmatprep.subr.mxu0 %v1992
  %2348 = vmatpush1.msra.mxu0 %v1991
  %2349 = vmatprep.subr.mxu0 %v1994
  %2350 = vmatpush1.msra.mxu0 %v1993
  %2351 = vmatprep.subr.mxu0 %v1996
  %2352 = vmatpush1.msra.mxu0 %v1995
  %2353 = vmatprep.subr.mxu0 %v1998
  %2354 = vmatpush1.msra.mxu0 %v1997
  %2355 = vmatprep.subr.mxu0 %v2000
  %2356 = vmatpush1.msra.mxu0 %v1999
  %2357 = vmatprep.subr.mxu0 %v2002
  %2358 = vmatpush1.msra.mxu0 %v2001
  %2359 = vmatprep.subr.mxu0 %v2004
  %2360 = vmatpush1.msra.mxu0 %v2003
  %2361 = vmatprep.subr.mxu0 %v2006
  %2362 = vmatpush1.msra.mxu0 %v2005
  %2363 = vmatprep.subr.mxu0 0.0
  %2364 = vmatpush1.msra.mxu0 0.0
  %2365 = vmatprep.subr.mxu0 0.0
  %2366 = vmatpush1.msra.mxu0 0.0
  %2367 = vmatprep.subr.mxu0 0.0
  %2368 = vmatpush1.msra.mxu0 0.0
  %2369 = vmatprep.subr.mxu0 0.0
  %2370 = vmatpush1.msra.mxu0 0.0
  %2371 = vmatprep.subr.mxu0 0.0
  %2372 = vmatpush1.msra.mxu0 0.0
  %2373 = vmatprep.subr.mxu0 0.0
  %2374 = vmatpush1.msra.mxu0 0.0
  %2375 = vmatprep.subr.mxu0 0.0
  %2376 = vmatpush1.msra.mxu0 0.0
  %2377 = vmatprep.subr.mxu0 0.0
  %2378 = vmatpush1.msra.mxu0 0.0
  %2379 = vmatprep.subr.mxu0 0.0
  %2380 = vmatpush1.msra.mxu0 0.0
  %2381 = vmatprep.subr.mxu0 0.0
  %2382 = vmatpush1.msra.mxu0 0.0
  %2383 = vmatprep.subr.mxu0 0.0
  %2384 = vmatpush1.msra.mxu0 0.0
  %2385 = vmatprep.subr.mxu0 0.0
  %2386 = vmatpush1.msra.mxu0 0.0
  %2387 = vmatprep.mubr.f32.mxu0 %v2321
  %2388 = vmatmul.mubr.f32.gmra.mrb[0].mxu0 %v2318
  %v2389 = vpop.f32.mrb[0].mxu0
  %v2390 = vadd.f32 0.0, %v2389
  %v2391 = vpop.f32.mrb[0].mxu0
  %v2392 = vadd.f32 0.0, %v2391
  %2393 = vdwg.mxu0
  %v2396 = vcombine.low %v2390, %v2392
  %v2397 = vrot.slane %v2396, 5
  %v2398 = vrot.slane %v2396, 6
  %v2401 = vadd.f32 %v1963, %v2397
  %v2402 = vadd.f32 %v1964, %v2398
  %v2403 = vtanh.pop %v2401
  %v2404 = vtanh.pop %v2402
  %v2405 = vld [vmem:[%s19] sm:$0x3]
  %v2406 = vld [vmem:[%s20] sm:$0x3]
  %v2408 = vunpack.c.l.s4 1966171168
  %v2409 = vunpack.c.0.s8 %v2408
  %v2410 = vlaneseq
  %v2411 = vshrl.u32 %v2410, 7
  %v2412 = vsub.s32 %v2409, %v2411
  %v2413 = vrot.slane %v1694, %v2412
  %v2414 = vcombine.high %v2413, %v2413
  %v2415 = vlaneseq
  %v2416 = vshrl.u32 %v2415, 7
  %v2417 = vsub.s32 0, %v2416
  %v2418 = vrot.slane %v2413, %v2417
  %v2419 = vlaneseq
  %v2420 = vshrl.u32 %v2419, 7
  %v2421 = vsub.s32 0, %v2420
  %v2422 = vrot.slane %v2414, %v2421
  %v2425 = vadd.f32 %v2418, %v1830
  %v2426 = vadd.f32 %v2422, %v1830
  %v2428 = vlaneseq
  %v2429 = vshrl.u32 %v2428, 7
  %v2430 = vsub.s32 0, %v2429
  %v2431 = vrot.slane %v1836, %v2430
  %v2433 = vadd.f32 %v2425, %v2431
  %v2434 = vadd.f32 %v2426, %v2431
  %v2435 = vtanh.pop %v2433
  %v2436 = vtanh.pop %v2434
  %v2438 = vlaneseq
  %v2439 = vshrl.u32 %v2438, 7
  %v2440 = vsub.s32 0, %v2439
  %v2441 = vrot.slane %v1837, %v2440
  %v2443 = vmul.f32 %v2435, %v2441
  %v2444 = vmul.f32 %v2436, %v2441
  %vm2445 = vcmask 814080
  %v2446 = vsel %vm2445, %v2443, 0.0
  %2447 = vadd.xlane.f32.xlu0 %v2446
  %v2448 = vpop.xlane.xlu0 %2447
  %v2449 = vsel %vm2445, %v2444, 0.0
  %2450 = vadd.xlane.f32.xlu0 %v2449
  %v2451 = vpop.xlane.xlu0 %2450
  %v2454 = vlaneseq
  %v2455 = vand.u32 %v2454, 127
  %v2456 = vlaneseq
  %v2457 = vshrl.u32 %v2456, 7
  %v2458 = vsub.s32 %v2455, %v2457
  %v2459 = vrot.slane %v2448, %v2458
  %v2460 = vlaneseq
  %v2461 = vshrl.u32 %v2460, 7
  %v2462 = vsub.s32 %v2455, %v2461
  %v2463 = vrot.slane %v2451, %v2462
  %v2464 = vsel %vm414, %v2463, %v2459
  %vm2466 = vcmask 25600
  %v2467 = vsel %vm2466, %v2464, -inf
  %2468 = vmax.xlane.f32.xlu0 %v2467
  %v2469 = vpop.xlane.xlu0 %2468
  %v2471 = vlaneseq
  %v2472 = vshrl.u32 %v2471, 7
  %v2473 = vsub.s32 0, %v2472
  %v2474 = vrot.slane %v2469, %v2473
  %v2475 = vlaneseq
  %v2476 = vshrl.u32 %v2475, 7
  %v2477 = vsub.s32 1, %v2476
  %v2478 = vrot.slane %v2469, %v2477
  %v2481 = vsub.f32 %v2448, %v2474
  %v2482 = vsub.f32 %v2451, %v2478
  %v2483 = vmul.f32 %v2481, 1.442695
  %v2484 = vpow.pop %v2483
  %v2485 = vmul.f32 %v2482, 1.442695
  %v2486 = vpow.pop %v2485
  %2489 = vset.pattern.permute.xlu0 0
  %2490 = vperm.xlu0 %2489, %v2484
  %v2491 = vpop.permute.xlu0 %2490
  %2492 = vset.pattern.permute.xlu0 0
  %2493 = vperm.xlu0 %2492, %v2486
  %v2494 = vpop.permute.xlu0 %2493
  %v2495 = vlaneseq
  %v2496 = vshrl.u32 %v2495, 7
  %v2497 = vsub.s32 %v2455, %v2496
  %v2498 = vrot.slane %v2491, %v2497
  %v2499 = vlaneseq
  %v2500 = vshrl.u32 %v2499, 7
  %v2501 = vsub.s32 %v2455, %v2500
  %v2502 = vrot.slane %v2494, %v2501
  %v2503 = vsel %vm414, %v2502, %v2498
  %v2505 = vsel %vm2466, %v2503, 0.0
  %2506 = vadd.xlane.f32.xlu0 %v2505
  %v2507 = vpop.xlane.xlu0 %2506
  %v2508 = vrcp.pop %v2507
  %v2510 = vlaneseq
  %v2511 = vshrl.u32 %v2510, 7
  %v2512 = vsub.s32 0, %v2511
  %v2513 = vrot.slane %v2508, %v2512
  %v2514 = vlaneseq
  %v2515 = vshrl.u32 %v2514, 7
  %v2516 = vsub.s32 1, %v2515
  %v2517 = vrot.slane %v2508, %v2516
  %v2520 = vmul.f32 %v2484, %v2513
  %v2521 = vmul.f32 %v2486, %v2517
  %2524 = vset.pattern.permute.xlu0 0
  %2525 = vperm.xlu0 %2524, %v2520
  %v2526 = vpop.permute.xlu0 %2525
  %2527 = vset.pattern.permute.xlu0 0
  %2528 = vperm.xlu0 %2527, %v2521
  %v2529 = vpop.permute.xlu0 %2528
  %v2530 = vlaneseq
  %v2531 = vshrl.u32 %v2530, 7
  %v2532 = vsub.s32 %v2455, %v2531
  %v2533 = vrot.slane %v2526, %v2532
  %v2534 = vlaneseq
  %v2535 = vshrl.u32 %v2534, 7
  %v2536 = vsub.s32 %v2455, %v2535
  %v2537 = vrot.slane %v2529, %v2536
  %v2538 = vsel %vm414, %v2537, %v2533
  %vm2539 = vcmask 31744
  %v2540 = vsel %vm2539, %v2538, 0
  %v2542 = vsel %vm425, %v1737, 0
  %v2544 = vsel %vm425, %v1751, 0
  %2546 = vmatprep.subr.mxu0 %v2544
  %2547 = vmatpush1.msra.mxu0 %v2542
  %2548 = vmatprep.subr.mxu0 0.0
  %2549 = vmatpush1.msra.mxu0 0.0
  %2550 = vmatprep.subr.mxu0 0.0
  %2551 = vmatpush1.msra.mxu0 0.0
  %2552 = vmatprep.subr.mxu0 0.0
  %2553 = vmatpush1.msra.mxu0 0.0
  %2554 = vmatprep.subr.mxu0 0.0
  %2555 = vmatpush1.msra.mxu0 0.0
  %2556 = vmatprep.subr.mxu0 0.0
  %2557 = vmatpush1.msra.mxu0 0.0
  %2558 = vmatprep.subr.mxu0 0.0
  %2559 = vmatpush1.msra.mxu0 0.0
  %2560 = vmatprep.subr.mxu0 0.0
  %2561 = vmatpush1.msra.mxu0 0.0
  %2562 = vmatprep.subr.mxu0 0.0
  %2563 = vmatpush1.msra.mxu0 0.0
  %2564 = vmatprep.subr.mxu0 0.0
  %2565 = vmatpush1.msra.mxu0 0.0
  %2566 = vmatprep.subr.mxu0 0.0
  %2567 = vmatpush1.msra.mxu0 0.0
  %2568 = vmatprep.subr.mxu0 0.0
  %2569 = vmatpush1.msra.mxu0 0.0
  %2570 = vmatprep.subr.mxu0 0.0
  %2571 = vmatpush1.msra.mxu0 0.0
  %2572 = vmatprep.subr.mxu0 0.0
  %2573 = vmatpush1.msra.mxu0 0.0
  %2574 = vmatprep.subr.mxu0 0.0
  %2575 = vmatpush1.msra.mxu0 0.0
  %2576 = vmatprep.subr.mxu0 0.0
  %2577 = vmatpush1.msra.mxu0 0.0
  %2578 = vmatprep.subr.mxu0 0.0
  %2579 = vmatpush1.msra.mxu0 0.0
  %2580 = vmatprep.subr.mxu0 0.0
  %2581 = vmatpush1.msra.mxu0 0.0
  %2582 = vmatprep.subr.mxu0 0.0
  %2583 = vmatpush1.msra.mxu0 0.0
  %2584 = vmatprep.subr.mxu0 0.0
  %2585 = vmatpush1.msra.mxu0 0.0
  %2586 = vmatprep.subr.mxu0 0.0
  %2587 = vmatpush1.msra.mxu0 0.0
  %2588 = vmatprep.subr.mxu0 0.0
  %2589 = vmatpush1.msra.mxu0 0.0
  %2590 = vmatprep.subr.mxu0 0.0
  %2591 = vmatpush1.msra.mxu0 0.0
  %2592 = vmatprep.subr.mxu0 0.0
  %2593 = vmatpush1.msra.mxu0 0.0
  %2594 = vmatprep.subr.mxu0 0.0
  %2595 = vmatpush1.msra.mxu0 0.0
  %2596 = vmatprep.subr.mxu0 0.0
  %2597 = vmatpush1.msra.mxu0 0.0
  %2598 = vmatprep.subr.mxu0 0.0
  %2599 = vmatpush1.msra.mxu0 0.0
  %2600 = vmatprep.subr.mxu0 0.0
  %2601 = vmatpush1.msra.mxu0 0.0
  %2602 = vmatprep.subr.mxu0 0.0
  %2603 = vmatpush1.msra.mxu0 0.0
  %2604 = vmatprep.subr.mxu0 0.0
  %2605 = vmatpush1.msra.mxu0 0.0
  %2606 = vmatprep.subr.mxu0 0.0
  %2607 = vmatpush1.msra.mxu0 0.0
  %2608 = vmatprep.subr.mxu0 0.0
  %2609 = vmatpush1.msra.mxu0 0.0
  %2610 = vmatprep.mubr.f32.mxu0 0.0
  %2611 = vmatmul.mubr.f32.gmra.mrb[0].mxu0 %v2540
  %v2612 = vpop.f32.mrb[0].mxu0
  %v2613 = vadd.f32 0.0, %v2612
  %v2614 = vpop.f32.mrb[0].mxu0
  %v2615 = vadd.f32 0.0, %v2614
  %2616 = vdwg.mxu0
  %v2624 = vlaneseq
  %v2625 = vshrl.u32 %v2624, 7
  %v2626 = vsub.s32 3, %v2625
  %v2627 = vrot.slane %v2403, %v2626
  %v2628 = vlaneseq
  %v2629 = vshrl.u32 %v2628, 7
  %v2630 = vsub.s32 7, %v2629
  %v2631 = vrot.slane %v2403, %v2630
  %vm2634 = vcmask 1040384
  %v2635 = vsel %vm2634, %v2096, %v2200
  %v2636 = vsel %vm2634, %v2100, %v2204
  %vm2637 = vcmask 1041408
  %v2638 = vsel %vm2637, %v2635, %v2305
  %v2639 = vsel %vm2637, %v2636, %v2309
  %vm2640 = vcmask 1042432
  %v2641 = vsel %vm2640, %v2638, %v2627
  %v2642 = vsel %vm2640, %v2639, %v2631
  %v2644 = vsel %vm1141, %v2615, 0
  %v2647 = vsel %vm1141, %v2642, 0
  %2649 = vmatprep.subr.mxu0 %v2647
  %2650 = vmatpush1.xpose.msra.mxu0 %v2641
  %2651 = vmatprep.subr.mxu0 0.0
  %2652 = vmatpush1.xpose.msra.mxu0 0.0
  %2653 = vmatprep.subr.mxu0 0.0
  %2654 = vmatpush1.xpose.msra.mxu0 0.0
  %2655 = vmatprep.subr.mxu0 0.0
  %2656 = vmatpush1.xpose.msra.mxu0 0.0
  %2657 = vmatprep.subr.mxu0 0.0
  %2658 = vmatpush1.xpose.msra.mxu0 0.0
  %2659 = vmatprep.subr.mxu0 0.0
  %2660 = vmatpush1.xpose.msra.mxu0 0.0
  %2661 = vmatprep.subr.mxu0 0.0
  %2662 = vmatpush1.xpose.msra.mxu0 0.0
  %2663 = vmatprep.subr.mxu0 0.0
  %2664 = vmatpush1.xpose.msra.mxu0 0.0
  %2665 = vmatprep.subr.mxu0 0.0
  %2666 = vmatpush1.xpose.msra.mxu0 0.0
  %2667 = vmatprep.subr.mxu0 0.0
  %2668 = vmatpush1.xpose.msra.mxu0 0.0
  %2669 = vmatprep.subr.mxu0 0.0
  %2670 = vmatpush1.xpose.msra.mxu0 0.0
  %2671 = vmatprep.subr.mxu0 0.0
  %2672 = vmatpush1.xpose.msra.mxu0 0.0
  %2673 = vmatprep.subr.mxu0 0.0
  %2674 = vmatpush1.xpose.msra.mxu0 0.0
  %2675 = vmatprep.subr.mxu0 0.0
  %2676 = vmatpush1.xpose.msra.mxu0 0.0
  %2677 = vmatprep.subr.mxu0 0.0
  %2678 = vmatpush1.xpose.msra.mxu0 0.0
  %2679 = vmatprep.subr.mxu0 0.0
  %2680 = vmatpush1.xpose.msra.mxu0 0.0
  %2681 = vmatprep.subr.mxu0 0.0
  %2682 = vmatpush1.xpose.msra.mxu0 0.0
  %2683 = vmatprep.subr.mxu0 0.0
  %2684 = vmatpush1.xpose.msra.mxu0 0.0
  %2685 = vmatprep.subr.mxu0 0.0
  %2686 = vmatpush1.xpose.msra.mxu0 0.0
  %2687 = vmatprep.subr.mxu0 0.0
  %2688 = vmatpush1.xpose.msra.mxu0 0.0
  %2689 = vmatprep.subr.mxu0 0.0
  %2690 = vmatpush1.xpose.msra.mxu0 0.0
  %2691 = vmatprep.subr.mxu0 0.0
  %2692 = vmatpush1.xpose.msra.mxu0 0.0
  %2693 = vmatprep.subr.mxu0 0.0
  %2694 = vmatpush1.xpose.msra.mxu0 0.0
  %2695 = vmatprep.subr.mxu0 0.0
  %2696 = vmatpush1.xpose.msra.mxu0 0.0
  %2697 = vmatprep.subr.mxu0 0.0
  %2698 = vmatpush1.xpose.msra.mxu0 0.0
  %2699 = vmatprep.subr.mxu0 0.0
  %2700 = vmatpush1.xpose.msra.mxu0 0.0
  %2701 = vmatprep.subr.mxu0 0.0
  %2702 = vmatpush1.xpose.msra.mxu0 0.0
  %2703 = vmatprep.subr.mxu0 0.0
  %2704 = vmatpush1.xpose.msra.mxu0 0.0
  %2705 = vmatprep.subr.mxu0 0.0
  %2706 = vmatpush1.xpose.msra.mxu0 0.0
  %2707 = vmatprep.subr.mxu0 0.0
  %2708 = vmatpush1.xpose.msra.mxu0 0.0
  %2709 = vmatprep.subr.mxu0 0.0
  %2710 = vmatpush1.xpose.msra.mxu0 0.0
  %2711 = vmatprep.subr.mxu0 0.0
  %2712 = vmatpush1.xpose.msra.mxu0 0.0
  %2713 = vmatprep.mubr.f32.mxu0 %v2644
  %2714 = vmatmul.mubr.f32.gmra.mrb[0].mxu0 %v2613
  %v2715 = vpop.f32.mrb[0].mxu0
  %v2716 = vadd.f32 0.0, %v2715
  %v2717 = vpop.f32.mrb[0].mxu0
  %2718 = vdwg.mxu0
  %v2719 = vsel %vm2466, %v2716, -inf
  %2720 = vmax.xlane.f32.xlu0 %v2719
  %v2721 = vpop.xlane.xlu0 %2720
  %v2722 = vsub.f32 %v2716, %v2721
  %v2723 = vmul.f32 %v2722, 1.442695
  %v2724 = vpow.pop %v2723
  %v2725 = vsel %vm2466, %v2724, 0.0
  %2726 = vadd.xlane.f32.xlu0 %v2725
  %v2727 = vpop.xlane.xlu0 %2726
  %v2728 = vrcp.pop %v2727
  %v2729 = vmul.f32 %v2724, %v2728
  %v2731 = vsel %vm2539, %v2729, 0
  %v2734 = vsel %vm425, %v2641, 0
  %v2736 = vsel %vm425, %v2642, 0
  %2738 = vmatprep.subr.mxu0 %v2736
  %2739 = vmatpush1.msra.mxu0 %v2734
  %2740 = vmatprep.subr.mxu0 0.0
  %2741 = vmatpush1.msra.mxu0 0.0
  %2742 = vmatprep.subr.mxu0 0.0
  %2743 = vmatpush1.msra.mxu0 0.0
  %2744 = vmatprep.subr.mxu0 0.0
  %2745 = vmatpush1.msra.mxu0 0.0
  %2746 = vmatprep.subr.mxu0 0.0
  %2747 = vmatpush1.msra.mxu0 0.0
  %2748 = vmatprep.subr.mxu0 0.0
  %2749 = vmatpush1.msra.mxu0 0.0
  %2750 = vmatprep.subr.mxu0 0.0
  %2751 = vmatpush1.msra.mxu0 0.0
  %2752 = vmatprep.subr.mxu0 0.0
  %2753 = vmatpush1.msra.mxu0 0.0
  %2754 = vmatprep.subr.mxu0 0.0
  %2755 = vmatpush1.msra.mxu0 0.0
  %2756 = vmatprep.subr.mxu0 0.0
  %2757 = vmatpush1.msra.mxu0 0.0
  %2758 = vmatprep.subr.mxu0 0.0
  %2759 = vmatpush1.msra.mxu0 0.0
  %2760 = vmatprep.subr.mxu0 0.0
  %2761 = vmatpush1.msra.mxu0 0.0
  %2762 = vmatprep.subr.mxu0 0.0
  %2763 = vmatpush1.msra.mxu0 0.0
  %2764 = vmatprep.subr.mxu0 0.0
  %2765 = vmatpush1.msra.mxu0 0.0
  %2766 = vmatprep.subr.mxu0 0.0
  %2767 = vmatpush1.msra.mxu0 0.0
  %2768 = vmatprep.subr.mxu0 0.0
  %2769 = vmatpush1.msra.mxu0 0.0
  %2770 = vmatprep.subr.mxu0 0.0
  %2771 = vmatpush1.msra.mxu0 0.0
  %2772 = vmatprep.subr.mxu0 0.0
  %2773 = vmatpush1.msra.mxu0 0.0
  %2774 = vmatprep.subr.mxu0 0.0
  %2775 = vmatpush1.msra.mxu0 0.0
  %2776 = vmatprep.subr.mxu0 0.0
  %2777 = vmatpush1.msra.mxu0 0.0
  %2778 = vmatprep.subr.mxu0 0.0
  %2779 = vmatpush1.msra.mxu0 0.0
  %2780 = vmatprep.subr.mxu0 0.0
  %2781 = vmatpush1.msra.mxu0 0.0
  %2782 = vmatprep.subr.mxu0 0.0
  %2783 = vmatpush1.msra.mxu0 0.0
  %2784 = vmatprep.subr.mxu0 0.0
  %2785 = vmatpush1.msra.mxu0 0.0
  %2786 = vmatprep.subr.mxu0 0.0
  %2787 = vmatpush1.msra.mxu0 0.0
  %2788 = vmatprep.subr.mxu0 0.0
  %2789 = vmatpush1.msra.mxu0 0.0
  %2790 = vmatprep.subr.mxu0 0.0
  %2791 = vmatpush1.msra.mxu0 0.0
  %2792 = vmatprep.subr.mxu0 0.0
  %2793 = vmatpush1.msra.mxu0 0.0
  %2794 = vmatprep.subr.mxu0 0.0
  %2795 = vmatpush1.msra.mxu0 0.0
  %2796 = vmatprep.subr.mxu0 0.0
  %2797 = vmatpush1.msra.mxu0 0.0
  %2798 = vmatprep.subr.mxu0 0.0
  %2799 = vmatpush1.msra.mxu0 0.0
  %2800 = vmatprep.subr.mxu0 0.0
  %2801 = vmatpush1.msra.mxu0 0.0
  %2802 = vmatprep.mubr.f32.mxu0 0.0
  %2803 = vmatmul.mubr.f32.gmra.mrb[0].mxu0 %v2731
  %v2804 = vpop.f32.mrb[0].mxu0
  %v2805 = vadd.f32 0.0, %v2804
  %v2806 = vpop.f32.mrb[0].mxu0
  %v2807 = vadd.f32 0.0, %v2806
  %2808 = vdwg.mxu0
  %v2809 = vsel %vm2637, %v2805, 0.0
  %vm2810 = vcmask 254976
  %v2811 = vsel %vm2810, %v2807, 0.0
  %v2812 = vadd.f32 %v2809, %v2811
  %2813 = vadd.xlane.f32.xlu0 %v2812
  %v2814 = vpop.xlane.xlu0 %2813
  %v2815 = vmul.f32 %v2814, %v432
  %v2816 = vsub.f32 %v2805, %v2815
  %v2817 = vsub.f32 %v2807, %v2815
  %v2818 = vmul.f32 %v2816, %v2816
  %v2819 = vmul.f32 %v2817, %v2817
  %v2820 = vsel %vm2637, %v2818, 0.0
  %v2821 = vsel %vm2810, %v2819, 0.0
  %v2822 = vadd.f32 %v2820, %v2821
  %2823 = vadd.xlane.f32.xlu0 %v2822
  %v2824 = vpop.xlane.xlu0 %2823
  %v2825 = vmul.f32 %v2824, %v432
  %v2826 = vadd.f32 %v2825, 1e-05
  %v2827 = vrsqrt.pop %v2826
  %v2828 = vmul.f32 %v2816, %v2827
  %v2829 = vmul.f32 %v2817, %v2827
  %v2831 = vlaneseq
  %v2832 = vshrl.u32 %v2831, 7
  %v2833 = vsub.s32 0, %v2832
  %v2834 = vrot.slane %v2405, %v2833
  %v2835 = vlaneseq
  %v2836 = vshrl.u32 %v2835, 7
  %v2837 = vsub.s32 1, %v2836
  %v2838 = vrot.slane %v2405, %v2837
  %v2841 = vmul.f32 %v2828, %v2834
  %v2842 = vmul.f32 %v2829, %v2838
  %v2844 = vlaneseq
  %v2845 = vshrl.u32 %v2844, 7
  %v2846 = vsub.s32 0, %v2845
  %v2847 = vrot.slane %v2406, %v2846
  %v2848 = vlaneseq
  %v2849 = vshrl.u32 %v2848, 7
  %v2850 = vsub.s32 1, %v2849
  %v2851 = vrot.slane %v2406, %v2850
  %v2854 = vadd.f32 %v2841, %v2847
  %v2855 = vadd.f32 %v2842, %v2851
  %v2857 = vunpack.c.l.s4 1966171168
  %v2858 = vunpack.c.0.s8 %v2857
  %v2859 = vlaneseq
  %v2860 = vshrl.u32 %v2859, 7
  %v2861 = vsub.s32 %v2858, %v2860
  %v2862 = vrot.slane %v1695, %v2861
  %v2863 = vcombine.high %v2862, %v2862
  %v2864 = vlaneseq
  %v2865 = vshrl.u32 %v2864, 7
  %v2866 = vsub.s32 0, %v2865
  %v2867 = vrot.slane %v2862, %v2866
  %v2868 = vlaneseq
  %v2869 = vshrl.u32 %v2868, 7
  %v2870 = vsub.s32 0, %v2869
  %v2871 = vrot.slane %v2863, %v2870
  %v2874 = vadd.f32 %v2867, %v1834
  %v2875 = vadd.f32 %v2871, %v1834
  %v2876 = vadd.f32 %v2874, %v2431
  %v2877 = vadd.f32 %v2875, %v2431
  %v2878 = vtanh.pop %v2876
  %v2879 = vtanh.pop %v2877
  %v2880 = vmul.f32 %v2878, %v2441
  %v2881 = vmul.f32 %v2879, %v2441
  %v2882 = vsel %vm2445, %v2880, 0.0
  %2883 = vadd.xlane.f32.xlu0 %v2882
  %v2884 = vpop.xlane.xlu0 %2883
  %v2885 = vsel %vm2445, %v2881, 0.0
  %2886 = vadd.xlane.f32.xlu0 %v2885
  %v2887 = vpop.xlane.xlu0 %2886
  %v2890 = vlaneseq
  %v2891 = vshrl.u32 %v2890, 7
  %v2892 = vsub.s32 %v2455, %v2891
  %v2893 = vrot.slane %v2884, %v2892
  %v2894 = vlaneseq
  %v2895 = vshrl.u32 %v2894, 7
  %v2896 = vsub.s32 %v2455, %v2895
  %v2897 = vrot.slane %v2887, %v2896
  %v2898 = vsel %vm414, %v2897, %v2893
  %v2900 = vsel %vm2466, %v2898, -inf
  %2901 = vmax.xlane.f32.xlu0 %v2900
  %v2902 = vpop.xlane.xlu0 %2901
  %v2904 = vlaneseq
  %v2905 = vshrl.u32 %v2904, 7
  %v2906 = vsub.s32 0, %v2905
  %v2907 = vrot.slane %v2902, %v2906
  %v2908 = vlaneseq
  %v2909 = vshrl.u32 %v2908, 7
  %v2910 = vsub.s32 1, %v2909
  %v2911 = vrot.slane %v2902, %v2910
  %v2914 = vsub.f32 %v2884, %v2907
  %v2915 = vsub.f32 %v2887, %v2911
  %v2916 = vmul.f32 %v2914, 1.442695
  %v2917 = vpow.pop %v2916
  %v2918 = vmul.f32 %v2915, 1.442695
  %v2919 = vpow.pop %v2918
  %2922 = vset.pattern.permute.xlu0 0
  %2923 = vperm.xlu0 %2922, %v2917
  %v2924 = vpop.permute.xlu0 %2923
  %2925 = vset.pattern.permute.xlu0 0
  %2926 = vperm.xlu0 %2925, %v2919
  %v2927 = vpop.permute.xlu0 %2926
  %v2928 = vlaneseq
  %v2929 = vshrl.u32 %v2928, 7
  %v2930 = vsub.s32 %v2455, %v2929
  %v2931 = vrot.slane %v2924, %v2930
  %v2932 = vlaneseq
  %v2933 = vshrl.u32 %v2932, 7
  %v2934 = vsub.s32 %v2455, %v2933
  %v2935 = vrot.slane %v2927, %v2934
  %v2936 = vsel %vm414, %v2935, %v2931
  %v2938 = vsel %vm2466, %v2936, 0.0
  %2939 = vadd.xlane.f32.xlu0 %v2938
  %v2940 = vpop.xlane.xlu0 %2939
  %v2941 = vrcp.pop %v2940
  %v2943 = vlaneseq
  %v2944 = vshrl.u32 %v2943, 7
  %v2945 = vsub.s32 0, %v2944
  %v2946 = vrot.slane %v2941, %v2945
  %v2947 = vlaneseq
  %v2948 = vshrl.u32 %v2947, 7
  %v2949 = vsub.s32 1, %v2948
  %v2950 = vrot.slane %v2941, %v2949
  %v2953 = vmul.f32 %v2917, %v2946
  %v2954 = vmul.f32 %v2919, %v2950
  %2957 = vset.pattern.permute.xlu0 0
  %2958 = vperm.xlu0 %2957, %v2953
  %v2959 = vpop.permute.xlu0 %2958
  %2960 = vset.pattern.permute.xlu0 0
  %2961 = vperm.xlu0 %2960, %v2954
  %v2962 = vpop.permute.xlu0 %2961
  %v2963 = vlaneseq
  %v2964 = vshrl.u32 %v2963, 7
  %v2965 = vsub.s32 %v2455, %v2964
  %v2966 = vrot.slane %v2959, %v2965
  %v2967 = vlaneseq
  %v2968 = vshrl.u32 %v2967, 7
  %v2969 = vsub.s32 %v2455, %v2968
  %v2970 = vrot.slane %v2962, %v2969
  %v2971 = vsel %vm414, %v2970, %v2966
  %v2972 = vrot.slane %v1568, 7
  %v2973 = vsel %vm414, %v2972, %v1566
  %v2974 = vrot.slane %v1570, 6
  %v2975 = vsel %vm416, %v2974, %v2973
  %v2976 = vrot.slane %v1572, 5
  %v2977 = vsel %vm418, %v2976, %v2975
  %v2978 = vrot.slane %v1569, 7
  %v2979 = vsel %vm414, %v2978, %v1567
  %v2980 = vrot.slane %v1571, 6
  %v2981 = vsel %vm416, %v2980, %v2979
  %v2982 = vrot.slane %v1573, 5
  %v2983 = vsel %vm418, %v2982, %v2981
  %v2984 = vsel %vm2539, %v2971, 0
  %v2986 = vsel %vm425, %v2977, 0
  %v2988 = vsel %vm425, %v2983, 0
  %2990 = vmatprep.subr.mxu0 %v2988
  %2991 = vmatpush1.msra.mxu0 %v2986
  %2992 = vmatprep.subr.mxu0 0.0
  %2993 = vmatpush1.msra.mxu0 0.0
  %2994 = vmatprep.subr.mxu0 0.0
  %2995 = vmatpush1.msra.mxu0 0.0
  %2996 = vmatprep.subr.mxu0 0.0
  %2997 = vmatpush1.msra.mxu0 0.0
  %2998 = vmatprep.subr.mxu0 0.0
  %2999 = vmatpush1.msra.mxu0 0.0
  %3000 = vmatprep.subr.mxu0 0.0
  %3001 = vmatpush1.msra.mxu0 0.0
  %3002 = vmatprep.subr.mxu0 0.0
  %3003 = vmatpush1.msra.mxu0 0.0
  %3004 = vmatprep.subr.mxu0 0.0
  %3005 = vmatpush1.msra.mxu0 0.0
  %3006 = vmatprep.subr.mxu0 0.0
  %3007 = vmatpush1.msra.mxu0 0.0
  %3008 = vmatprep.subr.mxu0 0.0
  %3009 = vmatpush1.msra.mxu0 0.0
  %3010 = vmatprep.subr.mxu0 0.0
  %3011 = vmatpush1.msra.mxu0 0.0
  %3012 = vmatprep.subr.mxu0 0.0
  %3013 = vmatpush1.msra.mxu0 0.0
  %3014 = vmatprep.subr.mxu0 0.0
  %3015 = vmatpush1.msra.mxu0 0.0
  %3016 = vmatprep.subr.mxu0 0.0
  %3017 = vmatpush1.msra.mxu0 0.0
  %3018 = vmatprep.subr.mxu0 0.0
  %3019 = vmatpush1.msra.mxu0 0.0
  %3020 = vmatprep.subr.mxu0 0.0
  %3021 = vmatpush1.msra.mxu0 0.0
  %3022 = vmatprep.subr.mxu0 0.0
  %3023 = vmatpush1.msra.mxu0 0.0
  %3024 = vmatprep.subr.mxu0 0.0
  %3025 = vmatpush1.msra.mxu0 0.0
  %3026 = vmatprep.subr.mxu0 0.0
  %3027 = vmatpush1.msra.mxu0 0.0
  %3028 = vmatprep.subr.mxu0 0.0
  %3029 = vmatpush1.msra.mxu0 0.0
  %3030 = vmatprep.subr.mxu0 0.0
  %3031 = vmatpush1.msra.mxu0 0.0
  %3032 = vmatprep.subr.mxu0 0.0
  %3033 = vmatpush1.msra.mxu0 0.0
  %3034 = vmatprep.subr.mxu0 0.0
  %3035 = vmatpush1.msra.mxu0 0.0
  %3036 = vmatprep.subr.mxu0 0.0
  %3037 = vmatpush1.msra.mxu0 0.0
  %3038 = vmatprep.subr.mxu0 0.0
  %3039 = vmatpush1.msra.mxu0 0.0
  %3040 = vmatprep.subr.mxu0 0.0
  %3041 = vmatpush1.msra.mxu0 0.0
  %3042 = vmatprep.subr.mxu0 0.0
  %3043 = vmatpush1.msra.mxu0 0.0
  %3044 = vmatprep.subr.mxu0 0.0
  %3045 = vmatpush1.msra.mxu0 0.0
  %3046 = vmatprep.subr.mxu0 0.0
  %3047 = vmatpush1.msra.mxu0 0.0
  %3048 = vmatprep.subr.mxu0 0.0
  %3049 = vmatpush1.msra.mxu0 0.0
  %3050 = vmatprep.subr.mxu0 0.0
  %3051 = vmatpush1.msra.mxu0 0.0
  %3052 = vmatprep.subr.mxu0 0.0
  %3053 = vmatpush1.msra.mxu0 0.0
  %3054 = vmatprep.mubr.f32.mxu0 0.0
  %3055 = vmatmul.mubr.f32.gmra.mrb[0].mxu0 %v2984
  %v3056 = vpop.f32.mrb[0].mxu0
  %v3057 = vadd.f32 0.0, %v3056
  %v3058 = vpop.f32.mrb[0].mxu0
  %v3059 = vadd.f32 0.0, %v3058
  %3060 = vdwg.mxu0
  %v3068 = vlaneseq
  %v3069 = vshrl.u32 %v3068, 7
  %v3070 = vsub.s32 3, %v3069
  %v3071 = vrot.slane %v2404, %v3070
  %v3072 = vlaneseq
  %v3073 = vshrl.u32 %v3072, 7
  %v3074 = vsub.s32 7, %v3073
  %v3075 = vrot.slane %v2404, %v3074
  %v3078 = vsel %vm2634, %v2104, %v2208
  %v3079 = vsel %vm2634, %v2108, %v2212
  %v3080 = vsel %vm2637, %v3078, %v2313
  %v3081 = vsel %vm2637, %v3079, %v2317
  %v3082 = vsel %vm2640, %v3080, %v3071
  %v3083 = vsel %vm2640, %v3081, %v3075
  %v3085 = vsel %vm1141, %v3059, 0
  %v3088 = vsel %vm1141, %v3083, 0
  %3090 = vmatprep.subr.mxu0 %v3088
  %3091 = vmatpush1.xpose.msra.mxu0 %v3082
  %3092 = vmatprep.subr.mxu0 0.0
  %3093 = vmatpush1.xpose.msra.mxu0 0.0
  %3094 = vmatprep.subr.mxu0 0.0
  %3095 = vmatpush1.xpose.msra.mxu0 0.0
  %3096 = vmatprep.subr.mxu0 0.0
  %3097 = vmatpush1.xpose.msra.mxu0 0.0
  %3098 = vmatprep.subr.mxu0 0.0
  %3099 = vmatpush1.xpose.msra.mxu0 0.0
  %3100 = vmatprep.subr.mxu0 0.0
  %3101 = vmatpush1.xpose.msra.mxu0 0.0
  %3102 = vmatprep.subr.mxu0 0.0
  %3103 = vmatpush1.xpose.msra.mxu0 0.0
  %3104 = vmatprep.subr.mxu0 0.0
  %3105 = vmatpush1.xpose.msra.mxu0 0.0
  %3106 = vmatprep.subr.mxu0 0.0
  %3107 = vmatpush1.xpose.msra.mxu0 0.0
  %3108 = vmatprep.subr.mxu0 0.0
  %3109 = vmatpush1.xpose.msra.mxu0 0.0
  %3110 = vmatprep.subr.mxu0 0.0
  %3111 = vmatpush1.xpose.msra.mxu0 0.0
  %3112 = vmatprep.subr.mxu0 0.0
  %3113 = vmatpush1.xpose.msra.mxu0 0.0
  %3114 = vmatprep.subr.mxu0 0.0
  %3115 = vmatpush1.xpose.msra.mxu0 0.0
  %3116 = vmatprep.subr.mxu0 0.0
  %3117 = vmatpush1.xpose.msra.mxu0 0.0
  %3118 = vmatprep.subr.mxu0 0.0
  %3119 = vmatpush1.xpose.msra.mxu0 0.0
  %3120 = vmatprep.subr.mxu0 0.0
  %3121 = vmatpush1.xpose.msra.mxu0 0.0
  %3122 = vmatprep.subr.mxu0 0.0
  %3123 = vmatpush1.xpose.msra.mxu0 0.0
  %3124 = vmatprep.subr.mxu0 0.0
  %3125 = vmatpush1.xpose.msra.mxu0 0.0
  %3126 = vmatprep.subr.mxu0 0.0
  %3127 = vmatpush1.xpose.msra.mxu0 0.0
  %3128 = vmatprep.subr.mxu0 0.0
  %3129 = vmatpush1.xpose.msra.mxu0 0.0
  %3130 = vmatprep.subr.mxu0 0.0
  %3131 = vmatpush1.xpose.msra.mxu0 0.0
  %3132 = vmatprep.subr.mxu0 0.0
  %3133 = vmatpush1.xpose.msra.mxu0 0.0
  %3134 = vmatprep.subr.mxu0 0.0
  %3135 = vmatpush1.xpose.msra.mxu0 0.0
  %3136 = vmatprep.subr.mxu0 0.0
  %3137 = vmatpush1.xpose.msra.mxu0 0.0
  %3138 = vmatprep.subr.mxu0 0.0
  %3139 = vmatpush1.xpose.msra.mxu0 0.0
  %3140 = vmatprep.subr.mxu0 0.0
  %3141 = vmatpush1.xpose.msra.mxu0 0.0
  %3142 = vmatprep.subr.mxu0 0.0
  %3143 = vmatpush1.xpose.msra.mxu0 0.0
  %3144 = vmatprep.subr.mxu0 0.0
  %3145 = vmatpush1.xpose.msra.mxu0 0.0
  %3146 = vmatprep.subr.mxu0 0.0
  %3147 = vmatpush1.xpose.msra.mxu0 0.0
  %3148 = vmatprep.subr.mxu0 0.0
  %3149 = vmatpush1.xpose.msra.mxu0 0.0
  %3150 = vmatprep.subr.mxu0 0.0
  %3151 = vmatpush1.xpose.msra.mxu0 0.0
  %3152 = vmatprep.subr.mxu0 0.0
  %3153 = vmatpush1.xpose.msra.mxu0 0.0
  %3154 = vmatprep.mubr.f32.mxu0 %v3085
  %3155 = vmatmul.mubr.f32.gmra.mrb[0].mxu0 %v3057
  %v3156 = vpop.f32.mrb[0].mxu0
  %v3157 = vadd.f32 0.0, %v3156
  %v3158 = vpop.f32.mrb[0].mxu0
  %3159 = vdwg.mxu0
  %v3160 = vsel %vm2466, %v3157, -inf
  %3161 = vmax.xlane.f32.xlu0 %v3160
  %v3162 = vpop.xlane.xlu0 %3161
  %v3163 = vsub.f32 %v3157, %v3162
  %v3164 = vmul.f32 %v3163, 1.442695
  %v3165 = vpow.pop %v3164
  %v3166 = vsel %vm2466, %v3165, 0.0
  %3167 = vadd.xlane.f32.xlu0 %v3166
  %v3168 = vpop.xlane.xlu0 %3167
  %v3169 = vrcp.pop %v3168
  %v3170 = vmul.f32 %v3165, %v3169
  %v3172 = vsel %vm2539, %v3170, 0
  %v3175 = vsel %vm425, %v3082, 0
  %v3177 = vsel %vm425, %v3083, 0
  %3179 = vmatprep.subr.mxu0 %v3177
  %3180 = vmatpush1.msra.mxu0 %v3175
  %3181 = vmatprep.subr.mxu0 0.0
  %3182 = vmatpush1.msra.mxu0 0.0
  %3183 = vmatprep.subr.mxu0 0.0
  %3184 = vmatpush1.msra.mxu0 0.0
  %3185 = vmatprep.subr.mxu0 0.0
  %3186 = vmatpush1.msra.mxu0 0.0
  %3187 = vmatprep.subr.mxu0 0.0
  %3188 = vmatpush1.msra.mxu0 0.0
  %3189 = vmatprep.subr.mxu0 0.0
  %3190 = vmatpush1.msra.mxu0 0.0
  %3191 = vmatprep.subr.mxu0 0.0
  %3192 = vmatpush1.msra.mxu0 0.0
  %3193 = vmatprep.subr.mxu0 0.0
  %3194 = vmatpush1.msra.mxu0 0.0
  %3195 = vmatprep.subr.mxu0 0.0
  %3196 = vmatpush1.msra.mxu0 0.0
  %3197 = vmatprep.subr.mxu0 0.0
  %3198 = vmatpush1.msra.mxu0 0.0
  %3199 = vmatprep.subr.mxu0 0.0
  %3200 = vmatpush1.msra.mxu0 0.0
  %3201 = vmatprep.subr.mxu0 0.0
  %3202 = vmatpush1.msra.mxu0 0.0
  %3203 = vmatprep.subr.mxu0 0.0
  %3204 = vmatpush1.msra.mxu0 0.0
  %3205 = vmatprep.subr.mxu0 0.0
  %3206 = vmatpush1.msra.mxu0 0.0
  %3207 = vmatprep.subr.mxu0 0.0
  %3208 = vmatpush1.msra.mxu0 0.0
  %3209 = vmatprep.subr.mxu0 0.0
  %3210 = vmatpush1.msra.mxu0 0.0
  %3211 = vmatprep.subr.mxu0 0.0
  %3212 = vmatpush1.msra.mxu0 0.0
  %3213 = vmatprep.subr.mxu0 0.0
  %3214 = vmatpush1.msra.mxu0 0.0
  %3215 = vmatprep.subr.mxu0 0.0
  %3216 = vmatpush1.msra.mxu0 0.0
  %3217 = vmatprep.subr.mxu0 0.0
  %3218 = vmatpush1.msra.mxu0 0.0
  %3219 = vmatprep.subr.mxu0 0.0
  %3220 = vmatpush1.msra.mxu0 0.0
  %3221 = vmatprep.subr.mxu0 0.0
  %3222 = vmatpush1.msra.mxu0 0.0
  %3223 = vmatprep.subr.mxu0 0.0
  %3224 = vmatpush1.msra.mxu0 0.0
  %3225 = vmatprep.subr.mxu0 0.0
  %3226 = vmatpush1.msra.mxu0 0.0
  %3227 = vmatprep.subr.mxu0 0.0
  %3228 = vmatpush1.msra.mxu0 0.0
  %3229 = vmatprep.subr.mxu0 0.0
  %3230 = vmatpush1.msra.mxu0 0.0
  %3231 = vmatprep.subr.mxu0 0.0
  %3232 = vmatpush1.msra.mxu0 0.0
  %3233 = vmatprep.subr.mxu0 0.0
  %3234 = vmatpush1.msra.mxu0 0.0
  %3235 = vmatprep.subr.mxu0 0.0
  %3236 = vmatpush1.msra.mxu0 0.0
  %3237 = vmatprep.subr.mxu0 0.0
  %3238 = vmatpush1.msra.mxu0 0.0
  %3239 = vmatprep.subr.mxu0 0.0
  %3240 = vmatpush1.msra.mxu0 0.0
  %3241 = vmatprep.subr.mxu0 0.0
  %3242 = vmatpush1.msra.mxu0 0.0
  %3243 = vmatprep.mubr.f32.mxu0 0.0
  %3244 = vmatmul.mubr.f32.gmra.mrb[0].mxu0 %v3172
  %v3245 = vpop.f32.mrb[0].mxu0
  %v3246 = vadd.f32 0.0, %v3245
  %v3247 = vpop.f32.mrb[0].mxu0
  %v3248 = vadd.f32 0.0, %v3247
  %3249 = vdwg.mxu0
  %v3250 = vsel %vm2637, %v3246, 0.0
  %v3251 = vsel %vm2810, %v3248, 0.0
  %v3252 = vadd.f32 %v3250, %v3251
  %3253 = vadd.xlane.f32.xlu0 %v3252
  %v3254 = vpop.xlane.xlu0 %3253
  %v3255 = vmul.f32 %v3254, %v432
  %v3256 = vsub.f32 %v3246, %v3255
  %v3257 = vsub.f32 %v3248, %v3255
  %v3258 = vmul.f32 %v3256, %v3256
  %v3259 = vmul.f32 %v3257, %v3257
  %v3260 = vsel %vm2637, %v3258, 0.0
  %v3261 = vsel %vm2810, %v3259, 0.0
  %v3262 = vadd.f32 %v3260, %v3261
  %3263 = vadd.xlane.f32.xlu0 %v3262
  %v3264 = vpop.xlane.xlu0 %3263
  %v3265 = vmul.f32 %v3264, %v432
  %v3266 = vadd.f32 %v3265, 1e-05
  %v3267 = vrsqrt.pop %v3266
  %v3268 = vmul.f32 %v3256, %v3267
  %v3269 = vmul.f32 %v3257, %v3267
  %v3270 = vmul.f32 %v3268, %v2834
  %v3271 = vmul.f32 %v3269, %v2838
  %v3272 = vadd.f32 %v3270, %v2847
  %v3273 = vadd.f32 %v3271, %v2851
  %v3276 = vrot.slane %v3272, 6
  %v3277 = vrot.slane %v3273, 6
  %v3280 = vsel %vm2637, %v2854, %v3276
  %v3281 = vsel %vm2637, %v2855, %v3277
  %v3284 = vrot.slane %v3280, 1
  %v3285 = vrot.slane %v3281, 1
  %v3286 = vrot.slane %v3280, 2
  %v3287 = vrot.slane %v3281, 2
  %v3288 = vrot.slane %v3280, 3
  %v3289 = vrot.slane %v3281, 3
  %v3298 = vmul.f32 %v534, %v3280
  %v3299 = vmul.f32 %v535, %v3281
  %v3300 = vmul.f32 %v536, %v3284
  %v3301 = vmul.f32 %v537, %v3285
  %v3302 = vmul.f32 %v538, %v3286
  %v3303 = vmul.f32 %v539, %v3287
  %v3304 = vmul.f32 %v540, %v3288
  %v3305 = vmul.f32 %v541, %v3289
  %v3314 = vrot.slane %v3300, 7
  %v3315 = vsel %vm414, %v3314, %v3298
  %v3316 = vrot.slane %v3302, 6
  %v3317 = vsel %vm416, %v3316, %v3315
  %v3318 = vrot.slane %v3304, 5
  %v3319 = vsel %vm418, %v3318, %v3317
  %v3320 = vrot.slane %v3301, 7
  %v3321 = vsel %vm414, %v3320, %v3299
  %v3322 = vrot.slane %v3303, 6
  %v3323 = vsel %vm416, %v3322, %v3321
  %v3324 = vrot.slane %v3305, 5
  %v3325 = vsel %vm418, %v3324, %v3323
  %v3328 = vsel %vm425, %v3319, 0.0
  %v3329 = vsel %vm427, %v3325, 0.0
  %v3330 = vadd.f32 %v3328, %v3329
  %3331 = vadd.xlane.f32.xlu0 %v3330
  %v3332 = vpop.xlane.xlu0 %3331
  %v3333 = vmul.f32 %v534, %v534
  %v3334 = vmul.f32 %v535, %v535
  %v3335 = vmul.f32 %v536, %v536
  %v3336 = vmul.f32 %v537, %v537
  %v3337 = vmul.f32 %v538, %v538
  %v3338 = vmul.f32 %v539, %v539
  %v3339 = vmul.f32 %v540, %v540
  %v3340 = vmul.f32 %v541, %v541
  %v3349 = vrot.slane %v3335, 7
  %v3350 = vsel %vm414, %v3349, %v3333
  %v3351 = vrot.slane %v3337, 6
  %v3352 = vsel %vm416, %v3351, %v3350
  %v3353 = vrot.slane %v3339, 5
  %v3354 = vsel %vm418, %v3353, %v3352
  %v3355 = vrot.slane %v3336, 7
  %v3356 = vsel %vm414, %v3355, %v3334
  %v3357 = vrot.slane %v3338, 6
  %v3358 = vsel %vm416, %v3357, %v3356
  %v3359 = vrot.slane %v3340, 5
  %v3360 = vsel %vm418, %v3359, %v3358
  %v3363 = vsel %vm425, %v3354, 0.0
  %v3364 = vsel %vm427, %v3360, 0.0
  %v3365 = vadd.f32 %v3363, %v3364
  %3366 = vadd.xlane.f32.xlu0 %v3365
  %v3367 = vpop.xlane.xlu0 %3366
  %v3368 = vrsqrt.pop %v3367
  %v3369 = vmul.f32 %v3367, %v3368
  %vm3370 = vcmp.eq.f32.partialorder %v3367, inf
  %v3371 = vsel %vm3370, %v3367, %v3369
  %vm3372 = vcmp.eq.f32.partialorder %v3367, 0.0
  %v3373 = vand.u32 %v3367, 2147483648
  %v3374 = vsel %vm3372, %v3373, %v3371
  %v3375 = vmul.f32 %v3280, %v3280
  %v3376 = vmul.f32 %v3281, %v3281
  %v3377 = vsel %vm425, %v3375, 0.0
  %v3378 = vsel %vm427, %v3376, 0.0
  %v3379 = vadd.f32 %v3377, %v3378
  %3380 = vadd.xlane.f32.xlu0 %v3379
  %v3381 = vpop.xlane.xlu0 %3380
  %v3382 = vrsqrt.pop %v3381
  %v3383 = vmul.f32 %v3381, %v3382
  %vm3384 = vcmp.eq.f32.partialorder %v3381, inf
  %v3385 = vsel %vm3384, %v3381, %v3383
  %vm3386 = vcmp.eq.f32.partialorder %v3381, 0.0
  %v3387 = vand.u32 %v3381, 2147483648
  %v3388 = vsel %vm3386, %v3387, %v3385
  %v3389 = vmul.f32 %v3374, %v3388
  %v3390 = vmax.f32 %v3389, 1e-08
  %v3391 = vrcp.pop %v3390
  %v3392 = vmul.f32 %v3332, %v3391
  %vm3393 = vcmask 3072
  %3394 = vst.msk [vmem:[%s21] sm:$0xf] %vm3393, %v3392
  // Predicated region
  $region86: #{dan_forward.1} parent=0 // pred_check
    _
  $region87: #{dan_forward.1} parent=0 // pred_check_branch
    %3396 = sbr.rel (0) target = $region89
  $region88: #{dan_forward.1} parent=0 // pred_region
    _
  $region89: #{dan_forward.1} parent=0 // pred_fallthru
    _
  // Predicated region
  $region90: #{dan_forward.1} parent=0 // pred_check
    _
  $region91: #{dan_forward.1} parent=0 // pred_check_branch
    %3398 = sbr.rel (0) target = $region93
  $region92: #{dan_forward.1} parent=0 // pred_region
    _
  $region93: #{dan_forward.1} parent=0 // pred_fallthru
    _

</llo_original>
